<compile_context>
chip_gen: v7x
topology: tpu7x:2x2x1
jax: 0.10.0
libtpu: 0.0.40
codegen_flags: <defaults>
</compile_context>

<pallas_src>
import jax
import jax.numpy as jnp
from jax.experimental import pallas as pl
from jax.experimental.pallas import tpu as pltpu

# ----------------------------- hyper-parameters ------------------------------
N_NODES      = 76    # x[:, 33:109] must be a square [N, N] support  =>  N = 76
F_IN         = 185
T_SEQ        = 5
LSTM_IN_DIM  = 1
LSTM_OUT_DIM = 16
DCNN_IN_DIM  = 10
DCNN_OUT_DIM = 8
DCNN_LAYERS  = 2     # diffusion hops per support
FNN_IN_DIM   = 8
FNN_HIDDEN1  = 16
FNN_HIDDEN2  = 8

H   = LSTM_OUT_DIM
NP  = 128            # node padding on the lane axis
BW  = 3 * NP         # batched LSTM width: [recent | daily | weekly] blocks
N_DIFF = 2 * DCNN_LAYERS + 1


# ------------------------------ Pallas kernel ---------------------------------
def hgst_kernel(seq_ref, feats_ref, sup_ref, mats_ref, cols_ref, sc_ref, out_ref):
    f32 = jnp.float32

    # ---- unpack packed parameter slabs (static, aligned slices) ----
    cols   = cols_ref[...]                       # [64, 16]
    w_ih   = cols[:, 0:1]                        # [4H, 1]
    b_l    = cols[:, 1:2]                        # [4H, 1]
    w_att  = cols[0:H, 2:3]                      # [H, 1]
    w_lo_r = cols[0:H, 3:4]
    w_lo_d = cols[0:H, 4:5]
    w_lo_w = cols[0:H, 5:6]
    b1     = cols[0:FNN_HIDDEN1, 6:7]            # [16, 1]
    b2     = cols[0:FNN_HIDDEN2, 7:8]            # [8, 1]
    w3     = cols[0:FNN_HIDDEN2, 8:9]            # [8, 1]

    w_hh = mats_ref[0:4 * H, :]                  # [4H, H] = [64, 16]
    w1   = mats_ref[4 * H:4 * H + 16, :]         # [16, 16] (cols 8:16 zero)
    w2   = mats_ref[4 * H + 16:4 * H + 24, :]    # [8, 16]

    # ---- temporal branch: one batched LSTM over [recent|daily|weekly] ----
    # Layout: nodes on lanes, hidden on sublanes.  h, c: [H, 384].
    h = jnp.zeros((H, BW), f32)
    c = jnp.zeros((H, BW), f32)
    hs, scores = [], []
    for t in range(T_SEQ):
        x_t = seq_ref[t:t + 1, :]                # [1, 384]
        gates = (w_ih * x_t
                 + jnp.dot(w_hh, h, preferred_element_type=f32)
                 + b_l)                          # [4H, 384]
        i_g = jax.nn.sigmoid(gates[0 * H:1 * H, :])
        f_g = jax.nn.sigmoid(gates[1 * H:2 * H, :])
        g_g = jnp.tanh(gates[2 * H:3 * H, :])
        o_g = jax.nn.sigmoid(gates[3 * H:4 * H, :])
        c = f_g * c + i_g * g_g
        h = o_g * jnp.tanh(c)
        hs.append(h)
        # attention score as VPU mult + sublane reduce (no 1-wide matmul)
        scores.append(jnp.tanh(jnp.sum(w_att * h, axis=0, keepdims=True)))  # [1,384]

    # softmax over the T=5 scores (per column)
    m = scores[0]
    for s in scores[1:]:
        m = jnp.maximum(m, s)
    exps = [jnp.exp(s - m) for s in scores]
    denom = exps[0]
    for e in exps[1:]:
        denom = denom + e
    ctx = exps[0] * hs[0]                        # un-normalized context [H, 384]
    for e, hh in zip(exps[1:], hs[1:]):
        ctx = ctx + e * hh

    # Linear(3H -> 1) as three sublane reductions; fold the softmax
    # normalization into the (much smaller) [1, 128] results.
    o_temp = (jnp.sum(w_lo_r * ctx[:, 0 * NP:1 * NP], axis=0, keepdims=True)
              / denom[:, 0 * NP:1 * NP]
              + jnp.sum(w_lo_d * ctx[:, 1 * NP:2 * NP], axis=0, keepdims=True)
              / denom[:, 1 * NP:2 * NP]
              + jnp.sum(w_lo_w * ctx[:, 2 * NP:3 * NP], axis=0, keepdims=True)
              / denom[:, 2 * NP:3 * NP]
              + sc_ref[0])                       # [1, 128]

    # ---- external branch (FNN), transposed layout ----
    fxt = feats_ref[16:32, :]                    # [16, 128] (rows 8:16 zero)
    h1 = jax.nn.relu(jnp.dot(w1, fxt, preferred_element_type=f32) + b1)   # [16,128]
    h2 = jax.nn.relu(jnp.dot(w2, h1, preferred_element_type=f32) + b2)    # [8,128]
    o_ext = jnp.sum(w3 * h2, axis=0, keepdims=True) + sc_ref[1]           # [1,128]

    # ---- spatial branch: diffusion GCN, channel 0 only ----
    z0t = feats_ref[0:16, :]                     # [16, 128] (rows 10:16 zero)
    a1t = sup_ref[0]                             # [128, 128] = support_1^T (padded)
    a2t = sup_ref[1]                             # [128, 128] = support_2^T (padded)
    z1a = jnp.dot(z0t, a1t, preferred_element_type=f32)   # (A1 z0)^T
    z2a = jnp.dot(z1a, a1t, preferred_element_type=f32)   # (A1^2 z0)^T
    z1b = jnp.dot(z0t, a2t, preferred_element_type=f32)   # (A2 z0)^T
    z2b = jnp.dot(z1b, a2t, preferred_element_type=f32)   # (A2^2 z0)^T

    o_spat = jnp.zeros((1, NP), f32) + sc_ref[2]
    for i, zt in enumerate((z0t, z1a, z2a, z1b, z2b)):
        wgi = cols[0:16, 9 + i:10 + i]           # [16, 1] (rows 10:16 zero)
        o_spat = o_spat + jnp.sum(wgi * zt, axis=0, keepdims=True)
    o_spat = jax.nn.relu(o_spat)                 # [1, 128]

    # ---- fuse: Linear(3, 1) + ReLU ----
    out = jax.nn.relu(sc_ref[3] * o_temp + sc_ref[4] * o_spat
                      + sc_ref[5] * o_ext + sc_ref[6])                    # [1, 128]
    out_ref[...] = jnp.broadcast_to(out, (8, NP))


# ------------------------- host-side layout plumbing ---------------------------
def _pack_inputs(x, params):
    (w_ih, w_hh, b_lstm, w_att, w_lo, b_lo,
     w1, b1, w2, b2, w3, b3, wg, bg, wf, bf) = params
    f32 = jnp.float32
    n = x.shape[0]

    # batched LSTM sequence: row t holds [x[:,t] | x[:,5+t] | x[:,10+t]] on lanes
    seq = jnp.zeros((8, BW), f32)
    seq = seq.at[0:T_SEQ, 0:n].set(x[:, 0:5].T)
    seq = seq.at[0:T_SEQ, NP:NP + n].set(x[:, 5:10].T)
    seq = seq.at[0:T_SEQ, 2 * NP:2 * NP + n].set(x[:, 10:15].T)

    # transposed z0 (rows 0:10) and FNN features (rows 16:24)
    feats = jnp.zeros((32, NP), f32)
    feats = feats.at[0:DCNN_IN_DIM, 0:n].set(x[:, 15:25].T)
    feats = feats.at[16:16 + FNN_IN_DIM, 0:n].set(x[:, 25:33].T)

    # transposed, zero-padded supports
    sup = jnp.zeros((2, NP, NP), f32)
    sup = sup.at[0, 0:n, 0:n].set(x[:, 33:109].T)
    sup = sup.at[1, 0:n, 0:n].set(x[:, 109:185].T)

    # matrix-parameter slab
    mats = jnp.zeros((88, 16), f32)
    mats = mats.at[0:64, :].set(w_hh.T)                    # [4H, H]
    mats = mats.at[64:80, 0:FNN_IN_DIM].set(w1.T)          # [16, 8]
    mats = mats.at[80:88, :].set(w2.T)                     # [8, 16]

    # column-vector-parameter slab
    cols = jnp.zeros((64, 16), f32)
    cols = cols.at[:, 0].set(w_ih[0, :])
    cols = cols.at[:, 1].set(b_lstm[0, :])
    cols = cols.at[0:H, 2].set(w_att[:, 0])
    cols = cols.at[0:H, 3].set(w_lo[0:H, 0])
    cols = cols.at[0:H, 4].set(w_lo[H:2 * H, 0])
    cols = cols.at[0:H, 5].set(w_lo[2 * H:3 * H, 0])
    cols = cols.at[0:FNN_HIDDEN1, 6].set(b1[0, :])
    cols = cols.at[0:FNN_HIDDEN2, 7].set(b2[0, :])
    cols = cols.at[0:FNN_HIDDEN2, 8].set(w3[:, 0])
    for i in range(N_DIFF):
        # only GCN channel 0 is ever consumed (O_spat[:, 0])
        cols = cols.at[0:DCNN_IN_DIM, 9 + i].set(wg[i * DCNN_IN_DIM:(i + 1) * DCNN_IN_DIM, 0])

    scal = jnp.stack([b_lo[0, 0], b3[0, 0], bg[0, 0],
                      wf[0, 0], wf[1, 0], wf[2, 0], bf[0, 0],
                      jnp.zeros((), f32)]).astype(f32)
    return seq, feats, sup, mats, cols, scal


@jax.jit
def hgst_pallas(x, params):
    seq, feats, sup, mats, cols, scal = _pack_inputs(x, params)
    out = pl.pallas_call(
        hgst_kernel,
        out_shape=jax.ShapeDtypeStruct((8, NP), jnp.float32),
        in_specs=[
            pl.BlockSpec(memory_space=pltpu.MemorySpace.VMEM),   # seq
            pl.BlockSpec(memory_space=pltpu.MemorySpace.VMEM),   # feats
            pl.BlockSpec(memory_space=pltpu.MemorySpace.VMEM),   # supports
            pl.BlockSpec(memory_space=pltpu.MemorySpace.VMEM),   # mats slab
            pl.BlockSpec(memory_space=pltpu.MemorySpace.VMEM),   # cols slab
            pl.BlockSpec(memory_space=pltpu.MemorySpace.SMEM),   # scalars
        ],
        out_specs=pl.BlockSpec(memory_space=pltpu.MemorySpace.VMEM),
    )(seq, feats, sup, mats, cols, scal)
    return out[0, 0:x.shape[0]][:, None]


# --------------------------- pure-JAX reference --------------------------------
def _lstm_att_ref(seq, w_ih, w_hh, b, w_att):
    n = seq.shape[0]
    h = jnp.zeros((n, H), jnp.float32)
    c = jnp.zeros((n, H), jnp.float32)
    hs, scores = [], []
    for t in range(T_SEQ):
        x_t = seq[:, t:t + 1]
        gates = x_t * w_ih + jnp.dot(h, w_hh, preferred_element_type=jnp.float32) + b
        i_g = jax.nn.sigmoid(gates[:, 0 * H:1 * H])
        f_g = jax.nn.sigmoid(gates[:, 1 * H:2 * H])
        g_g = jnp.tanh(gates[:, 2 * H:3 * H])
        o_g = jax.nn.sigmoid(gates[:, 3 * H:4 * H])
        c = f_g * c + i_g * g_g
        h = o_g * jnp.tanh(c)
        hs.append(h)
        scores.append(jnp.tanh(jnp.dot(h, w_att, preferred_element_type=jnp.float32)))
    m = scores[0]
    for s in scores[1:]:
        m = jnp.maximum(m, s)
    exps = [jnp.exp(s - m) for s in scores]
    denom = exps[0]
    for e in exps[1:]:
        denom = denom + e
    ctx = jnp.zeros((n, H), jnp.float32)
    for e, hh in zip(exps, hs):
        ctx = ctx + e * hh
    return ctx / denom


def _hgst_reference(x, w_ih, w_hh, b_lstm, w_att, w_lo, b_lo,
                    w1, b1, w2, b2, w3, b3, wg, bg, wf, bf):
    C = DCNN_IN_DIM
    ctx_r = _lstm_att_ref(x[:, 0:5],   w_ih, w_hh, b_lstm, w_att)
    ctx_d = _lstm_att_ref(x[:, 5:10],  w_ih, w_hh, b_lstm, w_att)
    ctx_w = _lstm_att_ref(x[:, 10:15], w_ih, w_hh, b_lstm, w_att)
    o_temp = (jnp.dot(ctx_r, w_lo[0 * H:1 * H], preferred_element_type=jnp.float32)
              + jnp.dot(ctx_d, w_lo[1 * H:2 * H], preferred_element_type=jnp.float32)
              + jnp.dot(ctx_w, w_lo[2 * H:3 * H], preferred_element_type=jnp.float32)
              + b_lo)

    fx = x[:, 25:33]
    h1 = jax.nn.relu(jnp.dot(fx, w1, preferred_element_type=jnp.float32) + b1)
    h2 = jax.nn.relu(jnp.dot(h1, w2, preferred_element_type=jnp.float32) + b2)
    o_ext = jnp.dot(h2, w3, preferred_element_type=jnp.float32) + b3

    z0 = x[:, 15:25]
    a1 = x[:, 33:109]
    a2 = x[:, 109:185]
    terms = [z0]
    for a in (a1, a2):
        zk = z0
        for _ in range(DCNN_LAYERS):
            zk = jnp.dot(a, zk, preferred_element_type=jnp.float32)
            terms.append(zk)
    o_spat = bg
    for i, t in enumerate(terms):
        o_spat = o_spat + jnp.dot(t, wg[i * C:(i + 1) * C],
                                  preferred_element_type=jnp.float32)
    o_spat = jax.nn.relu(o_spat)
    o_spat_in = o_spat[:, 0:1]

    out = (o_temp * wf[0:1, 0:1] + o_spat_in * wf[1:2, 0:1]
           + o_ext * wf[2:3, 0:1] + bf)
    return jax.nn.relu(out)


# ------------------------------ parameter init --------------------------------
def init_params(key):
    ks = jax.random.split(key, 17)

    def rnd(k, shape, scale=0.1):
        return (scale * jax.random.normal(k, shape)).astype(jnp.float32)

    return (
        rnd(ks[0],  (1, 4 * H)),                       # w_ih  (input dim = 1)
        rnd(ks[1],  (H, 4 * H)),                       # w_hh
        rnd(ks[2],  (1, 4 * H)),                       # b_lstm (combined bias)
        rnd(ks[3],  (H, 1)),                           # w_att
        rnd(ks[4],  (3 * H, 1)),                       # w_lo
        rnd(ks[5],  (1, 1)),                           # b_lo
        rnd(ks[6],  (FNN_IN_DIM, FNN_HIDDEN1)),        # w1
        rnd(ks[7],  (1, FNN_HIDDEN1)),                 # b1
        rnd(ks[8],  (FNN_HIDDEN1, FNN_HIDDEN2)),       # w2
        rnd(ks[9],  (1, FNN_HIDDEN2)),                 # b2
        rnd(ks[10], (FNN_HIDDEN2, 1)),                 # w3
        rnd(ks[11], (1, 1)),                           # b3
        rnd(ks[12], (N_DIFF * DCNN_IN_DIM, DCNN_OUT_DIM)),  # wg
        rnd(ks[13], (1, DCNN_OUT_DIM)),                # bg
        rnd(ks[14], (3, 1)),                           # wf (Linear(3,1) weight)
        rnd(ks[15], (1, 1)),                           # bf (Linear(3,1) bias)
    )


# ----------------------------------- main --------------------------------------
if __name__ == "__main__":
    key = jax.random.PRNGKey(0)
    k_x, k_p = jax.random.split(key)
    x = (0.3 * jax.random.normal(k_x, (N_NODES, F_IN))).astype(jnp.float32)
    params = init_params(k_p)

    out = jax.block_until_ready(hgst_pallas(x, params))

    # pure-JAX reference (node-major math) for a tight sanity check
    ref = jax.block_until_ready(jax.jit(_hgst_reference)(x, *params))

    assert out.shape == (N_NODES, 1), out.shape
    assert bool(jnp.all(jnp.isfinite(out)))
    assert bool(jnp.allclose(out, ref, rtol=1e-3, atol=1e-5)), (
        float(jnp.max(jnp.abs(out - ref))))
    print("KERNEL_OK")
</pallas_src>

<mosaic_0001>
module attributes {stable_mosaic.version = 11 : i64} {
  func.func @hgst_kernel(%arg0: memref<8x384xf32, #tpu.memory_space<vmem>>, %arg1: memref<32x128xf32, #tpu.memory_space<vmem>>, %arg2: memref<2x128x128xf32, #tpu.memory_space<vmem>>, %arg3: memref<88x16xf32, #tpu.memory_space<vmem>>, %arg4: memref<64x16xf32, #tpu.memory_space<vmem>>, %arg5: memref<8xf32, #tpu.memory_space<smem>>, %arg6: memref<8x128xf32, #tpu.memory_space<vmem>>) attributes {dimension_semantics = [], scalar_prefetch = 0 : i64, scratch_operands = 0 : i64, tpu.core_type = #tpu.core_type<tc>} {
    %c0 = arith.constant 0 : index
    %c0_0 = arith.constant 0 : index
    %0 = vector.load %arg4[%c0, %c0_0] : memref<64x16xf32, #tpu.memory_space<vmem>>, vector<64x16xf32>
    %1 = vector.extract_strided_slice %0 {offsets = [0, 0], sizes = [64, 1], strides = [1, 1]} : vector<64x16xf32> to vector<64x1xf32>
    %2 = vector.extract_strided_slice %0 {offsets = [0, 1], sizes = [64, 1], strides = [1, 1]} : vector<64x16xf32> to vector<64x1xf32>
    %3 = vector.extract_strided_slice %0 {offsets = [0, 2], sizes = [16, 1], strides = [1, 1]} : vector<64x16xf32> to vector<16x1xf32>
    %4 = vector.extract_strided_slice %0 {offsets = [0, 3], sizes = [16, 1], strides = [1, 1]} : vector<64x16xf32> to vector<16x1xf32>
    %5 = vector.extract_strided_slice %0 {offsets = [0, 4], sizes = [16, 1], strides = [1, 1]} : vector<64x16xf32> to vector<16x1xf32>
    %6 = vector.extract_strided_slice %0 {offsets = [0, 5], sizes = [16, 1], strides = [1, 1]} : vector<64x16xf32> to vector<16x1xf32>
    %7 = vector.extract_strided_slice %0 {offsets = [0, 6], sizes = [16, 1], strides = [1, 1]} : vector<64x16xf32> to vector<16x1xf32>
    %8 = vector.extract_strided_slice %0 {offsets = [0, 7], sizes = [8, 1], strides = [1, 1]} : vector<64x16xf32> to vector<8x1xf32>
    %9 = vector.extract_strided_slice %0 {offsets = [0, 8], sizes = [8, 1], strides = [1, 1]} : vector<64x16xf32> to vector<8x1xf32>
    %c0_1 = arith.constant 0 : index
    %c0_2 = arith.constant 0 : index
    %10 = vector.load %arg3[%c0_1, %c0_2] : memref<88x16xf32, #tpu.memory_space<vmem>>, vector<64x16xf32>
    %c64 = arith.constant 64 : index
    %c0_3 = arith.constant 0 : index
    %11 = vector.load %arg3[%c64, %c0_3] : memref<88x16xf32, #tpu.memory_space<vmem>>, vector<16x16xf32>
    %c80 = arith.constant 80 : index
    %c0_4 = arith.constant 0 : index
    %12 = vector.load %arg3[%c80, %c0_4] : memref<88x16xf32, #tpu.memory_space<vmem>>, vector<8x16xf32>
    %cst = arith.constant 0.000000e+00 : f32
    %13 = vector.broadcast %cst : f32 to vector<16x384xf32>
    %cst_5 = arith.constant 0.000000e+00 : f32
    %14 = vector.broadcast %cst_5 : f32 to vector<16x384xf32>
    %c0_6 = arith.constant 0 : index
    %c0_7 = arith.constant 0 : index
    %15 = vector.load %arg0[%c0_6, %c0_7] : memref<8x384xf32, #tpu.memory_space<vmem>>, vector<1x384xf32>
    %16 = vector.broadcast %1 : vector<64x1xf32> to vector<64x384xf32>
    %17 = vector.broadcast %15 : vector<1x384xf32> to vector<64x384xf32>
    %18 = arith.mulf %16, %17 : vector<64x384xf32>
    %cst_8 = arith.constant dense<0.000000e+00> : vector<64x384xf32>
    %19 = tpu.matmul %10, %13, %cst_8 {dimension_numbers = #tpu.dot_dimension_numbers<[1], [0], [0], [1], [0, 0, 1, 1], [], []>} : vector<64x16xf32>, vector<16x384xf32>, vector<64x384xf32> -> vector<64x384xf32>
    %20 = arith.addf %18, %19 : vector<64x384xf32>
    %21 = vector.broadcast %2 : vector<64x1xf32> to vector<64x384xf32>
    %22 = arith.addf %20, %21 : vector<64x384xf32>
    %23 = vector.extract_strided_slice %22 {offsets = [0, 0], sizes = [16, 384], strides = [1, 1]} : vector<64x384xf32> to vector<16x384xf32>
    %24 = arith.negf %23 : vector<16x384xf32>
    %25 = math.exp %24 : vector<16x384xf32>
    %cst_9 = arith.constant 1.000000e+00 : f32
    %26 = vector.broadcast %cst_9 : f32 to vector<16x384xf32>
    %27 = arith.addf %26, %25 : vector<16x384xf32>
    %28 = arith.divf %26, %27 : vector<16x384xf32>
    %29 = vector.extract_strided_slice %22 {offsets = [16, 0], sizes = [16, 384], strides = [1, 1]} : vector<64x384xf32> to vector<16x384xf32>
    %30 = arith.negf %29 : vector<16x384xf32>
    %31 = math.exp %30 : vector<16x384xf32>
    %cst_10 = arith.constant 1.000000e+00 : f32
    %32 = vector.broadcast %cst_10 : f32 to vector<16x384xf32>
    %33 = arith.addf %32, %31 : vector<16x384xf32>
    %34 = arith.divf %32, %33 : vector<16x384xf32>
    %35 = vector.extract_strided_slice %22 {offsets = [32, 0], sizes = [16, 384], strides = [1, 1]} : vector<64x384xf32> to vector<16x384xf32>
    %36 = math.tanh %35 : vector<16x384xf32>
    %37 = vector.extract_strided_slice %22 {offsets = [48, 0], sizes = [16, 384], strides = [1, 1]} : vector<64x384xf32> to vector<16x384xf32>
    %38 = arith.negf %37 : vector<16x384xf32>
    %39 = math.exp %38 : vector<16x384xf32>
    %cst_11 = arith.constant 1.000000e+00 : f32
    %40 = vector.broadcast %cst_11 : f32 to vector<16x384xf32>
    %41 = arith.addf %40, %39 : vector<16x384xf32>
    %42 = arith.divf %40, %41 : vector<16x384xf32>
    %43 = arith.mulf %34, %14 : vector<16x384xf32>
    %44 = arith.mulf %28, %36 : vector<16x384xf32>
    %45 = arith.addf %43, %44 : vector<16x384xf32>
    %46 = math.tanh %45 : vector<16x384xf32>
    %47 = arith.mulf %42, %46 : vector<16x384xf32>
    %48 = vector.broadcast %3 : vector<16x1xf32> to vector<16x384xf32>
    %49 = arith.mulf %48, %47 : vector<16x384xf32>
    %cst_12 = arith.constant dense<0.000000e+00> : vector<384xf32>
    %50 = vector.multi_reduction <add>, %49, %cst_12 [0] : vector<16x384xf32> to vector<384xf32>
    %51 = vector.shape_cast %50 : vector<384xf32> to vector<1x384xf32>
    %52 = math.tanh %51 : vector<1x384xf32>
    %c1 = arith.constant 1 : index
    %c0_13 = arith.constant 0 : index
    %53 = vector.load %arg0[%c1, %c0_13] : memref<8x384xf32, #tpu.memory_space<vmem>>, vector<1x384xf32>
    %54 = vector.broadcast %1 : vector<64x1xf32> to vector<64x384xf32>
    %55 = vector.broadcast %53 : vector<1x384xf32> to vector<64x384xf32>
    %56 = arith.mulf %54, %55 : vector<64x384xf32>
    %cst_14 = arith.constant dense<0.000000e+00> : vector<64x384xf32>
    %57 = tpu.matmul %10, %47, %cst_14 {dimension_numbers = #tpu.dot_dimension_numbers<[1], [0], [0], [1], [0, 0, 1, 1], [], []>} : vector<64x16xf32>, vector<16x384xf32>, vector<64x384xf32> -> vector<64x384xf32>
    %58 = arith.addf %56, %57 : vector<64x384xf32>
    %59 = vector.broadcast %2 : vector<64x1xf32> to vector<64x384xf32>
    %60 = arith.addf %58, %59 : vector<64x384xf32>
    %61 = vector.extract_strided_slice %60 {offsets = [0, 0], sizes = [16, 384], strides = [1, 1]} : vector<64x384xf32> to vector<16x384xf32>
    %62 = arith.negf %61 : vector<16x384xf32>
    %63 = math.exp %62 : vector<16x384xf32>
    %cst_15 = arith.constant 1.000000e+00 : f32
    %64 = vector.broadcast %cst_15 : f32 to vector<16x384xf32>
    %65 = arith.addf %64, %63 : vector<16x384xf32>
    %66 = arith.divf %64, %65 : vector<16x384xf32>
    %67 = vector.extract_strided_slice %60 {offsets = [16, 0], sizes = [16, 384], strides = [1, 1]} : vector<64x384xf32> to vector<16x384xf32>
    %68 = arith.negf %67 : vector<16x384xf32>
    %69 = math.exp %68 : vector<16x384xf32>
    %cst_16 = arith.constant 1.000000e+00 : f32
    %70 = vector.broadcast %cst_16 : f32 to vector<16x384xf32>
    %71 = arith.addf %70, %69 : vector<16x384xf32>
    %72 = arith.divf %70, %71 : vector<16x384xf32>
    %73 = vector.extract_strided_slice %60 {offsets = [32, 0], sizes = [16, 384], strides = [1, 1]} : vector<64x384xf32> to vector<16x384xf32>
    %74 = math.tanh %73 : vector<16x384xf32>
    %75 = vector.extract_strided_slice %60 {offsets = [48, 0], sizes = [16, 384], strides = [1, 1]} : vector<64x384xf32> to vector<16x384xf32>
    %76 = arith.negf %75 : vector<16x384xf32>
    %77 = math.exp %76 : vector<16x384xf32>
    %cst_17 = arith.constant 1.000000e+00 : f32
    %78 = vector.broadcast %cst_17 : f32 to vector<16x384xf32>
    %79 = arith.addf %78, %77 : vector<16x384xf32>
    %80 = arith.divf %78, %79 : vector<16x384xf32>
    %81 = arith.mulf %72, %45 : vector<16x384xf32>
    %82 = arith.mulf %66, %74 : vector<16x384xf32>
    %83 = arith.addf %81, %82 : vector<16x384xf32>
    %84 = math.tanh %83 : vector<16x384xf32>
    %85 = arith.mulf %80, %84 : vector<16x384xf32>
    %86 = vector.broadcast %3 : vector<16x1xf32> to vector<16x384xf32>
    %87 = arith.mulf %86, %85 : vector<16x384xf32>
    %cst_18 = arith.constant dense<0.000000e+00> : vector<384xf32>
    %88 = vector.multi_reduction <add>, %87, %cst_18 [0] : vector<16x384xf32> to vector<384xf32>
    %89 = vector.shape_cast %88 : vector<384xf32> to vector<1x384xf32>
    %90 = math.tanh %89 : vector<1x384xf32>
    %c2 = arith.constant 2 : index
    %c0_19 = arith.constant 0 : index
    %91 = vector.load %arg0[%c2, %c0_19] : memref<8x384xf32, #tpu.memory_space<vmem>>, vector<1x384xf32>
    %92 = vector.broadcast %1 : vector<64x1xf32> to vector<64x384xf32>
    %93 = vector.broadcast %91 : vector<1x384xf32> to vector<64x384xf32>
    %94 = arith.mulf %92, %93 : vector<64x384xf32>
    %cst_20 = arith.constant dense<0.000000e+00> : vector<64x384xf32>
    %95 = tpu.matmul %10, %85, %cst_20 {dimension_numbers = #tpu.dot_dimension_numbers<[1], [0], [0], [1], [0, 0, 1, 1], [], []>} : vector<64x16xf32>, vector<16x384xf32>, vector<64x384xf32> -> vector<64x384xf32>
    %96 = arith.addf %94, %95 : vector<64x384xf32>
    %97 = vector.broadcast %2 : vector<64x1xf32> to vector<64x384xf32>
    %98 = arith.addf %96, %97 : vector<64x384xf32>
    %99 = vector.extract_strided_slice %98 {offsets = [0, 0], sizes = [16, 384], strides = [1, 1]} : vector<64x384xf32> to vector<16x384xf32>
    %100 = arith.negf %99 : vector<16x384xf32>
    %101 = math.exp %100 : vector<16x384xf32>
    %cst_21 = arith.constant 1.000000e+00 : f32
    %102 = vector.broadcast %cst_21 : f32 to vector<16x384xf32>
    %103 = arith.addf %102, %101 : vector<16x384xf32>
    %104 = arith.divf %102, %103 : vector<16x384xf32>
    %105 = vector.extract_strided_slice %98 {offsets = [16, 0], sizes = [16, 384], strides = [1, 1]} : vector<64x384xf32> to vector<16x384xf32>
    %106 = arith.negf %105 : vector<16x384xf32>
    %107 = math.exp %106 : vector<16x384xf32>
    %cst_22 = arith.constant 1.000000e+00 : f32
    %108 = vector.broadcast %cst_22 : f32 to vector<16x384xf32>
    %109 = arith.addf %108, %107 : vector<16x384xf32>
    %110 = arith.divf %108, %109 : vector<16x384xf32>
    %111 = vector.extract_strided_slice %98 {offsets = [32, 0], sizes = [16, 384], strides = [1, 1]} : vector<64x384xf32> to vector<16x384xf32>
    %112 = math.tanh %111 : vector<16x384xf32>
    %113 = vector.extract_strided_slice %98 {offsets = [48, 0], sizes = [16, 384], strides = [1, 1]} : vector<64x384xf32> to vector<16x384xf32>
    %114 = arith.negf %113 : vector<16x384xf32>
    %115 = math.exp %114 : vector<16x384xf32>
    %cst_23 = arith.constant 1.000000e+00 : f32
    %116 = vector.broadcast %cst_23 : f32 to vector<16x384xf32>
    %117 = arith.addf %116, %115 : vector<16x384xf32>
    %118 = arith.divf %116, %117 : vector<16x384xf32>
    %119 = arith.mulf %110, %83 : vector<16x384xf32>
    %120 = arith.mulf %104, %112 : vector<16x384xf32>
    %121 = arith.addf %119, %120 : vector<16x384xf32>
    %122 = math.tanh %121 : vector<16x384xf32>
    %123 = arith.mulf %118, %122 : vector<16x384xf32>
    %124 = vector.broadcast %3 : vector<16x1xf32> to vector<16x384xf32>
    %125 = arith.mulf %124, %123 : vector<16x384xf32>
    %cst_24 = arith.constant dense<0.000000e+00> : vector<384xf32>
    %126 = vector.multi_reduction <add>, %125, %cst_24 [0] : vector<16x384xf32> to vector<384xf32>
    %127 = vector.shape_cast %126 : vector<384xf32> to vector<1x384xf32>
    %128 = math.tanh %127 : vector<1x384xf32>
    %c3 = arith.constant 3 : index
    %c0_25 = arith.constant 0 : index
    %129 = vector.load %arg0[%c3, %c0_25] : memref<8x384xf32, #tpu.memory_space<vmem>>, vector<1x384xf32>
    %130 = vector.broadcast %1 : vector<64x1xf32> to vector<64x384xf32>
    %131 = vector.broadcast %129 : vector<1x384xf32> to vector<64x384xf32>
    %132 = arith.mulf %130, %131 : vector<64x384xf32>
    %cst_26 = arith.constant dense<0.000000e+00> : vector<64x384xf32>
    %133 = tpu.matmul %10, %123, %cst_26 {dimension_numbers = #tpu.dot_dimension_numbers<[1], [0], [0], [1], [0, 0, 1, 1], [], []>} : vector<64x16xf32>, vector<16x384xf32>, vector<64x384xf32> -> vector<64x384xf32>
    %134 = arith.addf %132, %133 : vector<64x384xf32>
    %135 = vector.broadcast %2 : vector<64x1xf32> to vector<64x384xf32>
    %136 = arith.addf %134, %135 : vector<64x384xf32>
    %137 = vector.extract_strided_slice %136 {offsets = [0, 0], sizes = [16, 384], strides = [1, 1]} : vector<64x384xf32> to vector<16x384xf32>
    %138 = arith.negf %137 : vector<16x384xf32>
    %139 = math.exp %138 : vector<16x384xf32>
    %cst_27 = arith.constant 1.000000e+00 : f32
    %140 = vector.broadcast %cst_27 : f32 to vector<16x384xf32>
    %141 = arith.addf %140, %139 : vector<16x384xf32>
    %142 = arith.divf %140, %141 : vector<16x384xf32>
    %143 = vector.extract_strided_slice %136 {offsets = [16, 0], sizes = [16, 384], strides = [1, 1]} : vector<64x384xf32> to vector<16x384xf32>
    %144 = arith.negf %143 : vector<16x384xf32>
    %145 = math.exp %144 : vector<16x384xf32>
    %cst_28 = arith.constant 1.000000e+00 : f32
    %146 = vector.broadcast %cst_28 : f32 to vector<16x384xf32>
    %147 = arith.addf %146, %145 : vector<16x384xf32>
    %148 = arith.divf %146, %147 : vector<16x384xf32>
    %149 = vector.extract_strided_slice %136 {offsets = [32, 0], sizes = [16, 384], strides = [1, 1]} : vector<64x384xf32> to vector<16x384xf32>
    %150 = math.tanh %149 : vector<16x384xf32>
    %151 = vector.extract_strided_slice %136 {offsets = [48, 0], sizes = [16, 384], strides = [1, 1]} : vector<64x384xf32> to vector<16x384xf32>
    %152 = arith.negf %151 : vector<16x384xf32>
    %153 = math.exp %152 : vector<16x384xf32>
    %cst_29 = arith.constant 1.000000e+00 : f32
    %154 = vector.broadcast %cst_29 : f32 to vector<16x384xf32>
    %155 = arith.addf %154, %153 : vector<16x384xf32>
    %156 = arith.divf %154, %155 : vector<16x384xf32>
    %157 = arith.mulf %148, %121 : vector<16x384xf32>
    %158 = arith.mulf %142, %150 : vector<16x384xf32>
    %159 = arith.addf %157, %158 : vector<16x384xf32>
    %160 = math.tanh %159 : vector<16x384xf32>
    %161 = arith.mulf %156, %160 : vector<16x384xf32>
    %162 = vector.broadcast %3 : vector<16x1xf32> to vector<16x384xf32>
    %163 = arith.mulf %162, %161 : vector<16x384xf32>
    %cst_30 = arith.constant dense<0.000000e+00> : vector<384xf32>
    %164 = vector.multi_reduction <add>, %163, %cst_30 [0] : vector<16x384xf32> to vector<384xf32>
    %165 = vector.shape_cast %164 : vector<384xf32> to vector<1x384xf32>
    %166 = math.tanh %165 : vector<1x384xf32>
    %c4 = arith.constant 4 : index
    %c0_31 = arith.constant 0 : index
    %167 = vector.load %arg0[%c4, %c0_31] : memref<8x384xf32, #tpu.memory_space<vmem>>, vector<1x384xf32>
    %168 = vector.broadcast %1 : vector<64x1xf32> to vector<64x384xf32>
    %169 = vector.broadcast %167 : vector<1x384xf32> to vector<64x384xf32>
    %170 = arith.mulf %168, %169 : vector<64x384xf32>
    %cst_32 = arith.constant dense<0.000000e+00> : vector<64x384xf32>
    %171 = tpu.matmul %10, %161, %cst_32 {dimension_numbers = #tpu.dot_dimension_numbers<[1], [0], [0], [1], [0, 0, 1, 1], [], []>} : vector<64x16xf32>, vector<16x384xf32>, vector<64x384xf32> -> vector<64x384xf32>
    %172 = arith.addf %170, %171 : vector<64x384xf32>
    %173 = vector.broadcast %2 : vector<64x1xf32> to vector<64x384xf32>
    %174 = arith.addf %172, %173 : vector<64x384xf32>
    %175 = vector.extract_strided_slice %174 {offsets = [0, 0], sizes = [16, 384], strides = [1, 1]} : vector<64x384xf32> to vector<16x384xf32>
    %176 = arith.negf %175 : vector<16x384xf32>
    %177 = math.exp %176 : vector<16x384xf32>
    %cst_33 = arith.constant 1.000000e+00 : f32
    %178 = vector.broadcast %cst_33 : f32 to vector<16x384xf32>
    %179 = arith.addf %178, %177 : vector<16x384xf32>
    %180 = arith.divf %178, %179 : vector<16x384xf32>
    %181 = vector.extract_strided_slice %174 {offsets = [16, 0], sizes = [16, 384], strides = [1, 1]} : vector<64x384xf32> to vector<16x384xf32>
    %182 = arith.negf %181 : vector<16x384xf32>
    %183 = math.exp %182 : vector<16x384xf32>
    %cst_34 = arith.constant 1.000000e+00 : f32
    %184 = vector.broadcast %cst_34 : f32 to vector<16x384xf32>
    %185 = arith.addf %184, %183 : vector<16x384xf32>
    %186 = arith.divf %184, %185 : vector<16x384xf32>
    %187 = vector.extract_strided_slice %174 {offsets = [32, 0], sizes = [16, 384], strides = [1, 1]} : vector<64x384xf32> to vector<16x384xf32>
    %188 = math.tanh %187 : vector<16x384xf32>
    %189 = vector.extract_strided_slice %174 {offsets = [48, 0], sizes = [16, 384], strides = [1, 1]} : vector<64x384xf32> to vector<16x384xf32>
    %190 = arith.negf %189 : vector<16x384xf32>
    %191 = math.exp %190 : vector<16x384xf32>
    %cst_35 = arith.constant 1.000000e+00 : f32
    %192 = vector.broadcast %cst_35 : f32 to vector<16x384xf32>
    %193 = arith.addf %192, %191 : vector<16x384xf32>
    %194 = arith.divf %192, %193 : vector<16x384xf32>
    %195 = arith.mulf %186, %159 : vector<16x384xf32>
    %196 = arith.mulf %180, %188 : vector<16x384xf32>
    %197 = arith.addf %195, %196 : vector<16x384xf32>
    %198 = math.tanh %197 : vector<16x384xf32>
    %199 = arith.mulf %194, %198 : vector<16x384xf32>
    %200 = vector.broadcast %3 : vector<16x1xf32> to vector<16x384xf32>
    %201 = arith.mulf %200, %199 : vector<16x384xf32>
    %cst_36 = arith.constant dense<0.000000e+00> : vector<384xf32>
    %202 = vector.multi_reduction <add>, %201, %cst_36 [0] : vector<16x384xf32> to vector<384xf32>
    %203 = vector.shape_cast %202 : vector<384xf32> to vector<1x384xf32>
    %204 = math.tanh %203 : vector<1x384xf32>
    %205 = arith.maximumf %52, %90 : vector<1x384xf32>
    %206 = arith.maximumf %205, %128 : vector<1x384xf32>
    %207 = arith.maximumf %206, %166 : vector<1x384xf32>
    %208 = arith.maximumf %207, %204 : vector<1x384xf32>
    %209 = arith.subf %52, %208 : vector<1x384xf32>
    %210 = math.exp %209 : vector<1x384xf32>
    %211 = arith.subf %90, %208 : vector<1x384xf32>
    %212 = math.exp %211 : vector<1x384xf32>
    %213 = arith.subf %128, %208 : vector<1x384xf32>
    %214 = math.exp %213 : vector<1x384xf32>
    %215 = arith.subf %166, %208 : vector<1x384xf32>
    %216 = math.exp %215 : vector<1x384xf32>
    %217 = arith.subf %204, %208 : vector<1x384xf32>
    %218 = math.exp %217 : vector<1x384xf32>
    %219 = arith.addf %210, %212 : vector<1x384xf32>
    %220 = arith.addf %219, %214 : vector<1x384xf32>
    %221 = arith.addf %220, %216 : vector<1x384xf32>
    %222 = arith.addf %221, %218 : vector<1x384xf32>
    %223 = vector.broadcast %210 : vector<1x384xf32> to vector<16x384xf32>
    %224 = arith.mulf %223, %47 : vector<16x384xf32>
    %225 = vector.broadcast %212 : vector<1x384xf32> to vector<16x384xf32>
    %226 = arith.mulf %225, %85 : vector<16x384xf32>
    %227 = arith.addf %224, %226 : vector<16x384xf32>
    %228 = vector.broadcast %214 : vector<1x384xf32> to vector<16x384xf32>
    %229 = arith.mulf %228, %123 : vector<16x384xf32>
    %230 = arith.addf %227, %229 : vector<16x384xf32>
    %231 = vector.broadcast %216 : vector<1x384xf32> to vector<16x384xf32>
    %232 = arith.mulf %231, %161 : vector<16x384xf32>
    %233 = arith.addf %230, %232 : vector<16x384xf32>
    %234 = vector.broadcast %218 : vector<1x384xf32> to vector<16x384xf32>
    %235 = arith.mulf %234, %199 : vector<16x384xf32>
    %236 = arith.addf %233, %235 : vector<16x384xf32>
    %237 = vector.extract_strided_slice %236 {offsets = [0, 0], sizes = [16, 128], strides = [1, 1]} : vector<16x384xf32> to vector<16x128xf32>
    %238 = vector.broadcast %4 : vector<16x1xf32> to vector<16x128xf32>
    %239 = arith.mulf %238, %237 : vector<16x128xf32>
    %cst_37 = arith.constant dense<0.000000e+00> : vector<128xf32>
    %240 = vector.multi_reduction <add>, %239, %cst_37 [0] : vector<16x128xf32> to vector<128xf32>
    %241 = vector.shape_cast %240 : vector<128xf32> to vector<1x128xf32>
    %242 = vector.extract_strided_slice %222 {offsets = [0, 0], sizes = [1, 128], strides = [1, 1]} : vector<1x384xf32> to vector<1x128xf32>
    %243 = arith.divf %241, %242 : vector<1x128xf32>
    %244 = vector.extract_strided_slice %236 {offsets = [0, 128], sizes = [16, 128], strides = [1, 1]} : vector<16x384xf32> to vector<16x128xf32>
    %245 = vector.broadcast %5 : vector<16x1xf32> to vector<16x128xf32>
    %246 = arith.mulf %245, %244 : vector<16x128xf32>
    %cst_38 = arith.constant dense<0.000000e+00> : vector<128xf32>
    %247 = vector.multi_reduction <add>, %246, %cst_38 [0] : vector<16x128xf32> to vector<128xf32>
    %248 = vector.shape_cast %247 : vector<128xf32> to vector<1x128xf32>
    %249 = vector.extract_strided_slice %222 {offsets = [0, 128], sizes = [1, 128], strides = [1, 1]} : vector<1x384xf32> to vector<1x128xf32>
    %250 = arith.divf %248, %249 : vector<1x128xf32>
    %251 = arith.addf %243, %250 : vector<1x128xf32>
    %252 = vector.extract_strided_slice %236 {offsets = [0, 256], sizes = [16, 128], strides = [1, 1]} : vector<16x384xf32> to vector<16x128xf32>
    %253 = vector.broadcast %6 : vector<16x1xf32> to vector<16x128xf32>
    %254 = arith.mulf %253, %252 : vector<16x128xf32>
    %cst_39 = arith.constant dense<0.000000e+00> : vector<128xf32>
    %255 = vector.multi_reduction <add>, %254, %cst_39 [0] : vector<16x128xf32> to vector<128xf32>
    %256 = vector.shape_cast %255 : vector<128xf32> to vector<1x128xf32>
    %257 = vector.extract_strided_slice %222 {offsets = [0, 256], sizes = [1, 128], strides = [1, 1]} : vector<1x384xf32> to vector<1x128xf32>
    %258 = arith.divf %256, %257 : vector<1x128xf32>
    %259 = arith.addf %251, %258 : vector<1x128xf32>
    %c0_40 = arith.constant 0 : index
    %260 = memref.load %arg5[%c0_40] : memref<8xf32, #tpu.memory_space<smem>>
    %261 = vector.broadcast %260 : f32 to vector<1x128xf32>
    %262 = arith.addf %259, %261 : vector<1x128xf32>
    %c16 = arith.constant 16 : index
    %c0_41 = arith.constant 0 : index
    %263 = vector.load %arg1[%c16, %c0_41] : memref<32x128xf32, #tpu.memory_space<vmem>>, vector<16x128xf32>
    %cst_42 = arith.constant dense<0.000000e+00> : vector<16x128xf32>
    %264 = tpu.matmul %11, %263, %cst_42 {dimension_numbers = #tpu.dot_dimension_numbers<[1], [0], [0], [1], [0, 0, 1, 1], [], []>} : vector<16x16xf32>, vector<16x128xf32>, vector<16x128xf32> -> vector<16x128xf32>
    %265 = vector.broadcast %7 : vector<16x1xf32> to vector<16x128xf32>
    %266 = arith.addf %264, %265 : vector<16x128xf32>
    %cst_43 = arith.constant 0.000000e+00 : f32
    %267 = vector.broadcast %cst_43 : f32 to vector<16x128xf32>
    %268 = arith.maximumf %266, %267 : vector<16x128xf32>
    %cst_44 = arith.constant dense<0.000000e+00> : vector<8x128xf32>
    %269 = tpu.matmul %12, %268, %cst_44 {dimension_numbers = #tpu.dot_dimension_numbers<[1], [0], [0], [1], [0, 0, 1, 1], [], []>} : vector<8x16xf32>, vector<16x128xf32>, vector<8x128xf32> -> vector<8x128xf32>
    %270 = vector.broadcast %8 : vector<8x1xf32> to vector<8x128xf32>
    %271 = arith.addf %269, %270 : vector<8x128xf32>
    %cst_45 = arith.constant 0.000000e+00 : f32
    %272 = vector.broadcast %cst_45 : f32 to vector<8x128xf32>
    %273 = arith.maximumf %271, %272 : vector<8x128xf32>
    %274 = vector.broadcast %9 : vector<8x1xf32> to vector<8x128xf32>
    %275 = arith.mulf %274, %273 : vector<8x128xf32>
    %cst_46 = arith.constant dense<0.000000e+00> : vector<128xf32>
    %276 = vector.multi_reduction <add>, %275, %cst_46 [0] : vector<8x128xf32> to vector<128xf32>
    %277 = vector.shape_cast %276 : vector<128xf32> to vector<1x128xf32>
    %c1_47 = arith.constant 1 : index
    %278 = memref.load %arg5[%c1_47] : memref<8xf32, #tpu.memory_space<smem>>
    %279 = vector.broadcast %278 : f32 to vector<1x128xf32>
    %280 = arith.addf %277, %279 : vector<1x128xf32>
    %c0_48 = arith.constant 0 : index
    %c0_49 = arith.constant 0 : index
    %281 = vector.load %arg1[%c0_48, %c0_49] : memref<32x128xf32, #tpu.memory_space<vmem>>, vector<16x128xf32>
    %c0_50 = arith.constant 0 : index
    %c0_51 = arith.constant 0 : index
    %c0_52 = arith.constant 0 : index
    %282 = vector.load %arg2[%c0_50, %c0_51, %c0_52] : memref<2x128x128xf32, #tpu.memory_space<vmem>>, vector<1x128x128xf32>
    %283 = vector.shape_cast %282 : vector<1x128x128xf32> to vector<128x128xf32>
    %c1_53 = arith.constant 1 : index
    %c0_54 = arith.constant 0 : index
    %c0_55 = arith.constant 0 : index
    %284 = vector.load %arg2[%c1_53, %c0_54, %c0_55] : memref<2x128x128xf32, #tpu.memory_space<vmem>>, vector<1x128x128xf32>
    %285 = vector.shape_cast %284 : vector<1x128x128xf32> to vector<128x128xf32>
    %cst_56 = arith.constant dense<0.000000e+00> : vector<16x128xf32>
    %286 = tpu.matmul %281, %283, %cst_56 {dimension_numbers = #tpu.dot_dimension_numbers<[1], [0], [0], [1], [0, 0, 1, 1], [], []>} : vector<16x128xf32>, vector<128x128xf32>, vector<16x128xf32> -> vector<16x128xf32>
    %cst_57 = arith.constant dense<0.000000e+00> : vector<16x128xf32>
    %287 = tpu.matmul %286, %283, %cst_57 {dimension_numbers = #tpu.dot_dimension_numbers<[1], [0], [0], [1], [0, 0, 1, 1], [], []>} : vector<16x128xf32>, vector<128x128xf32>, vector<16x128xf32> -> vector<16x128xf32>
    %cst_58 = arith.constant dense<0.000000e+00> : vector<16x128xf32>
    %288 = tpu.matmul %281, %285, %cst_58 {dimension_numbers = #tpu.dot_dimension_numbers<[1], [0], [0], [1], [0, 0, 1, 1], [], []>} : vector<16x128xf32>, vector<128x128xf32>, vector<16x128xf32> -> vector<16x128xf32>
    %cst_59 = arith.constant dense<0.000000e+00> : vector<16x128xf32>
    %289 = tpu.matmul %288, %285, %cst_59 {dimension_numbers = #tpu.dot_dimension_numbers<[1], [0], [0], [1], [0, 0, 1, 1], [], []>} : vector<16x128xf32>, vector<128x128xf32>, vector<16x128xf32> -> vector<16x128xf32>
    %cst_60 = arith.constant 0.000000e+00 : f32
    %290 = vector.broadcast %cst_60 : f32 to vector<1x128xf32>
    %c2_61 = arith.constant 2 : index
    %291 = memref.load %arg5[%c2_61] : memref<8xf32, #tpu.memory_space<smem>>
    %292 = vector.broadcast %291 : f32 to vector<1x128xf32>
    %293 = arith.addf %290, %292 : vector<1x128xf32>
    %294 = vector.extract_strided_slice %0 {offsets = [0, 9], sizes = [16, 1], strides = [1, 1]} : vector<64x16xf32> to vector<16x1xf32>
    %295 = vector.broadcast %294 : vector<16x1xf32> to vector<16x128xf32>
    %296 = arith.mulf %295, %281 : vector<16x128xf32>
    %cst_62 = arith.constant dense<0.000000e+00> : vector<128xf32>
    %297 = vector.multi_reduction <add>, %296, %cst_62 [0] : vector<16x128xf32> to vector<128xf32>
    %298 = vector.shape_cast %297 : vector<128xf32> to vector<1x128xf32>
    %299 = arith.addf %293, %298 : vector<1x128xf32>
    %300 = vector.extract_strided_slice %0 {offsets = [0, 10], sizes = [16, 1], strides = [1, 1]} : vector<64x16xf32> to vector<16x1xf32>
    %301 = vector.broadcast %300 : vector<16x1xf32> to vector<16x128xf32>
    %302 = arith.mulf %301, %286 : vector<16x128xf32>
    %cst_63 = arith.constant dense<0.000000e+00> : vector<128xf32>
    %303 = vector.multi_reduction <add>, %302, %cst_63 [0] : vector<16x128xf32> to vector<128xf32>
    %304 = vector.shape_cast %303 : vector<128xf32> to vector<1x128xf32>
    %305 = arith.addf %299, %304 : vector<1x128xf32>
    %306 = vector.extract_strided_slice %0 {offsets = [0, 11], sizes = [16, 1], strides = [1, 1]} : vector<64x16xf32> to vector<16x1xf32>
    %307 = vector.broadcast %306 : vector<16x1xf32> to vector<16x128xf32>
    %308 = arith.mulf %307, %287 : vector<16x128xf32>
    %cst_64 = arith.constant dense<0.000000e+00> : vector<128xf32>
    %309 = vector.multi_reduction <add>, %308, %cst_64 [0] : vector<16x128xf32> to vector<128xf32>
    %310 = vector.shape_cast %309 : vector<128xf32> to vector<1x128xf32>
    %311 = arith.addf %305, %310 : vector<1x128xf32>
    %312 = vector.extract_strided_slice %0 {offsets = [0, 12], sizes = [16, 1], strides = [1, 1]} : vector<64x16xf32> to vector<16x1xf32>
    %313 = vector.broadcast %312 : vector<16x1xf32> to vector<16x128xf32>
    %314 = arith.mulf %313, %288 : vector<16x128xf32>
    %cst_65 = arith.constant dense<0.000000e+00> : vector<128xf32>
    %315 = vector.multi_reduction <add>, %314, %cst_65 [0] : vector<16x128xf32> to vector<128xf32>
    %316 = vector.shape_cast %315 : vector<128xf32> to vector<1x128xf32>
    %317 = arith.addf %311, %316 : vector<1x128xf32>
    %318 = vector.extract_strided_slice %0 {offsets = [0, 13], sizes = [16, 1], strides = [1, 1]} : vector<64x16xf32> to vector<16x1xf32>
    %319 = vector.broadcast %318 : vector<16x1xf32> to vector<16x128xf32>
    %320 = arith.mulf %319, %289 : vector<16x128xf32>
    %cst_66 = arith.constant dense<0.000000e+00> : vector<128xf32>
    %321 = vector.multi_reduction <add>, %320, %cst_66 [0] : vector<16x128xf32> to vector<128xf32>
    %322 = vector.shape_cast %321 : vector<128xf32> to vector<1x128xf32>
    %323 = arith.addf %317, %322 : vector<1x128xf32>
    %cst_67 = arith.constant 0.000000e+00 : f32
    %324 = vector.broadcast %cst_67 : f32 to vector<1x128xf32>
    %325 = arith.maximumf %323, %324 : vector<1x128xf32>
    %c3_68 = arith.constant 3 : index
    %326 = memref.load %arg5[%c3_68] : memref<8xf32, #tpu.memory_space<smem>>
    %327 = vector.broadcast %326 : f32 to vector<1x128xf32>
    %328 = arith.mulf %327, %262 : vector<1x128xf32>
    %c4_69 = arith.constant 4 : index
    %329 = memref.load %arg5[%c4_69] : memref<8xf32, #tpu.memory_space<smem>>
    %330 = vector.broadcast %329 : f32 to vector<1x128xf32>
    %331 = arith.mulf %330, %325 : vector<1x128xf32>
    %332 = arith.addf %328, %331 : vector<1x128xf32>
    %c5 = arith.constant 5 : index
    %333 = memref.load %arg5[%c5] : memref<8xf32, #tpu.memory_space<smem>>
    %334 = vector.broadcast %333 : f32 to vector<1x128xf32>
    %335 = arith.mulf %334, %280 : vector<1x128xf32>
    %336 = arith.addf %332, %335 : vector<1x128xf32>
    %c6 = arith.constant 6 : index
    %337 = memref.load %arg5[%c6] : memref<8xf32, #tpu.memory_space<smem>>
    %338 = vector.broadcast %337 : f32 to vector<1x128xf32>
    %339 = arith.addf %336, %338 : vector<1x128xf32>
    %cst_70 = arith.constant 0.000000e+00 : f32
    %340 = vector.broadcast %cst_70 : f32 to vector<1x128xf32>
    %341 = arith.maximumf %339, %340 : vector<1x128xf32>
    %342 = vector.shape_cast %341 : vector<1x128xf32> to vector<1x128xf32>
    %343 = vector.broadcast %342 : vector<1x128xf32> to vector<8x128xf32>
    %c0_71 = arith.constant 0 : index
    %c0_72 = arith.constant 0 : index
    %344 = vector.load %arg6[%c0_71, %c0_72] : memref<8x128xf32, #tpu.memory_space<vmem>>, vector<8x128xf32>
    tpu.vector_store %arg6[%c0_71, %c0_72], %343 {strides = array<i32>} : memref<8x128xf32, #tpu.memory_space<vmem>>, vector<8x128xf32>,
    return
  }
}

</mosaic_0001>

<llo_original>
// kernel: hgst_pallas.1
$region0: #{hgst_pallas.1}
  #allocation0 [shape = 'u32[]', space=smem, size = 0x4, offset = 0x4, fixed_abs, tag = 'smem constant byte address 0x4 - core index']
  #allocation1 [shape = 'u32[144,128]{1,0:T(1,128)}', space=vmem, size = 0x12000, scoped, tag = 'internal scratch']
  %s0 = inlined_call_operand.vmem [shape: f32[8,384], index: 0, kind: input, shape index: {}]
  %s1 = inlined_call_operand.vmem [shape: f32[32,128], index: 1, kind: input, shape index: {}]
  %s2 = inlined_call_operand.vmem [shape: f32[2,128,128], index: 2, kind: input, shape index: {}]
  %s3 = inlined_call_operand.vmem [shape: f32[88,16], index: 3, kind: input, shape index: {}]
  %s4 = inlined_call_operand.vmem [shape: f32[64,16], index: 4, kind: input, shape index: {}]
  %s5 = inlined_call_operand.vmem [shape: f32[8], index: 5, kind: input, shape index: {}]
  %s6 = inlined_call_operand.vmem [shape: f32[8,128], index: 6, kind: output, shape index: {}]
  %s7 = sld [smem:[#allocation0]]
  $region38: #{hgst_pallas.1} parent=0
    _
  %s9 = ssub.s32 1, %s7
  %s10 = scalar_select 0, %s9, %s7
  $region1: #{hgst_pallas.1} parent=0
    #allocation2 [shape = 'u8[512]{0}', space=smem, size = 0x200, scoped, tag = 'input window, operand 5, single buffered']
    #allocation3 [shape = 's32[1]{0}', space=sflag, size = 0x4, scoped, tag = 'scoped memory for hgst_pallas.1']
    %11 = vsyncpa [#allocation3], 0
    // Predicated region
    $region2: #{hgst_pallas.1} parent=1 // pred_check
      _
    $region3: #{hgst_pallas.1} parent=1 // pred_check_branch
      %13 = sbr.rel (0) target = $region5
    $region4: #{hgst_pallas.1} parent=1 // pred_region
      _
    $region5: #{hgst_pallas.1} parent=1 // pred_fallthru
      _
    // Predicated region
    $region6: #{hgst_pallas.1} parent=1 // pred_check
      _
    $region7: #{hgst_pallas.1} parent=1 // pred_check_branch
      %15 = sbr.rel (0) target = $region9
    $region8: #{hgst_pallas.1} parent=1 // pred_region
      _
    $region9: #{hgst_pallas.1} parent=1 // pred_fallthru
      _
    // Predicated region
    $region10: #{hgst_pallas.1} parent=1 // pred_check
      _
    $region11: #{hgst_pallas.1} parent=1 // pred_check_branch
      %17 = sbr.rel (0) target = $region13
    $region12: #{hgst_pallas.1} parent=1 // pred_region
      _
    $region13: #{hgst_pallas.1} parent=1 // pred_fallthru
      _
    // Predicated region
    $region14: #{hgst_pallas.1} parent=1 // pred_check
      _
    $region15: #{hgst_pallas.1} parent=1 // pred_check_branch
      %19 = sbr.rel (0) target = $region17
    $region16: #{hgst_pallas.1} parent=1 // pred_region
      _
    $region17: #{hgst_pallas.1} parent=1 // pred_fallthru
      _
    // Predicated region
    $region18: #{hgst_pallas.1} parent=1 // pred_check
      _
    $region19: #{hgst_pallas.1} parent=1 // pred_check_branch
      %21 = sbr.rel (0) target = $region21
    $region20: #{hgst_pallas.1} parent=1 // pred_region
      _
    $region21: #{hgst_pallas.1} parent=1 // pred_fallthru
      _
    // Predicated region
    $region22: #{hgst_pallas.1} parent=1 // pred_check
      _
    $region23: #{hgst_pallas.1} parent=1 // pred_check_branch
      %23 = sbr.rel (0) target = $region25
    $region24: #{hgst_pallas.1} parent=1 // pred_region
      %s25 = ssub.s32 16, 16
      %26 = vsyncadd [#allocation3], %s25
      %s28 = sshll.u32 %s5, 4
      %s29 = int_to_ptr.vmem [resolvable:$true] %s28
      %31 = dma.vmem_to_smem %s29, 16, [#allocation2], [#allocation3]
    $region25: #{hgst_pallas.1} parent=1 // pred_fallthru
      _
    // Predicated region
    $region26: #{hgst_pallas.1} parent=1 // pred_check
      _
    $region27: #{hgst_pallas.1} parent=1 // pred_check_branch
      %33 = sbr.rel (0) target = $region29
    $region28: #{hgst_pallas.1} parent=1 // pred_region
      %34 = dma.done [#allocation3], 16
    $region29: #{hgst_pallas.1} parent=1 // pred_fallthru
      _
    %35 = sfence
    %v36 = vld [vmem:[%s4] sm:$0xff]
    %v37 = vld [vmem:[%s4 + $0x8] sm:$0xff]
    %v38 = vld [vmem:[%s4 + $0x10] sm:$0xff]
    %v39 = vld [vmem:[%s4 + $0x18] sm:$0xff]
    %v40 = vld [vmem:[%s4 + $0x20] sm:$0xff]
    %v41 = vld [vmem:[%s4 + $0x28] sm:$0xff]
    %v42 = vld [vmem:[%s4 + $0x30] sm:$0xff]
    %v43 = vld [vmem:[%s4 + $0x38] sm:$0xff]
    %v44 = vld [vmem:[%s3] sm:$0xff]
    %v45 = vld [vmem:[%s3 + $0x8] sm:$0xff]
    %v46 = vld [vmem:[%s3 + $0x10] sm:$0xff]
    %v47 = vld [vmem:[%s3 + $0x18] sm:$0xff]
    %v48 = vld [vmem:[%s3 + $0x20] sm:$0xff]
    %v49 = vld [vmem:[%s3 + $0x28] sm:$0xff]
    %v50 = vld [vmem:[%s3 + $0x30] sm:$0xff]
    %v51 = vld [vmem:[%s3 + $0x38] sm:$0xff]
    %v52 = vld [vmem:[%s3 + $0x40] sm:$0xff]
    %v53 = vld [vmem:[%s3 + $0x48] sm:$0xff]
    %v54 = vld [vmem:[%s3 + $0x50] sm:$0xff]
    %v55 = vld [vmem:[%s0] ss:$8 sm:$0x7]
    %57 = vset.pattern.permute.xlu0 0
    %58 = vperm.xlu0 %57, %v36
    %v59 = vpop.permute.xlu0 %58
    %62 = vset.pattern.permute.xlu0 0
    %63 = vperm.xlu0 %62, %v37
    %v64 = vpop.permute.xlu0 %63
    %67 = vset.pattern.permute.xlu0 0
    %68 = vperm.xlu0 %67, %v38
    %v69 = vpop.permute.xlu0 %68
    %72 = vset.pattern.permute.xlu0 0
    %73 = vperm.xlu0 %72, %v39
    %v74 = vpop.permute.xlu0 %73
    %77 = vset.pattern.permute.xlu0 0
    %78 = vperm.xlu0 %77, %v40
    %v79 = vpop.permute.xlu0 %78
    %82 = vset.pattern.permute.xlu0 0
    %83 = vperm.xlu0 %82, %v41
    %v84 = vpop.permute.xlu0 %83
    %87 = vset.pattern.permute.xlu0 0
    %88 = vperm.xlu0 %87, %v42
    %v89 = vpop.permute.xlu0 %88
    %92 = vset.pattern.permute.xlu0 0
    %93 = vperm.xlu0 %92, %v43
    %v94 = vpop.permute.xlu0 %93
    %v97 = vlaneseq
    %v98 = vshrl.u32 %v97, 7
    %v99 = vsub.s32 0, %v98
    %v100 = vrot.slane %v55, %v99
    %v101 = vlaneseq
    %v102 = vshrl.u32 %v101, 7
    %v103 = vsub.s32 1, %v102
    %v104 = vrot.slane %v55, %v103
    %v105 = vlaneseq
    %v106 = vshrl.u32 %v105, 7
    %v107 = vsub.s32 2, %v106
    %v108 = vrot.slane %v55, %v107
    %v112 = vmul.f32 %v59, %v100
    %v113 = vmul.f32 %v59, %v104
    %v114 = vmul.f32 %v59, %v108
    %v115 = vmul.f32 %v64, %v100
    %v116 = vmul.f32 %v64, %v104
    %v117 = vmul.f32 %v64, %v108
    %v118 = vmul.f32 %v69, %v100
    %v119 = vmul.f32 %v69, %v104
    %v120 = vmul.f32 %v69, %v108
    %v121 = vmul.f32 %v74, %v100
    %v122 = vmul.f32 %v74, %v104
    %v123 = vmul.f32 %v74, %v108
    %v124 = vmul.f32 %v79, %v100
    %v125 = vmul.f32 %v79, %v104
    %v126 = vmul.f32 %v79, %v108
    %v127 = vmul.f32 %v84, %v100
    %v128 = vmul.f32 %v84, %v104
    %v129 = vmul.f32 %v84, %v108
    %v130 = vmul.f32 %v89, %v100
    %v131 = vmul.f32 %v89, %v104
    %v132 = vmul.f32 %v89, %v108
    %v133 = vmul.f32 %v94, %v100
    %v134 = vmul.f32 %v94, %v104
    %v135 = vmul.f32 %v94, %v108
    %vm136 = vcmask 130048
    %v138 = vsel %vm136, %v44, 0
    %v141 = vsel %vm136, %v45, 0
    %v144 = vsel %vm136, %v46, 0
    %v147 = vsel %vm136, %v47, 0
    %v150 = vsel %vm136, %v48, 0
    %v153 = vsel %vm136, %v49, 0
    %v156 = vsel %vm136, %v50, 0
    %v159 = vsel %vm136, %v51, 0
    %161 = vmatprep.subr.mxu0 0.0
    %162 = vmatpush1.msra.mxu0 0.0
    %163 = vmatprep.subr.mxu0 0.0
    %164 = vmatpush1.msra.mxu0 0.0
    %165 = vmatprep.subr.mxu0 0.0
    %166 = vmatpush1.msra.mxu0 0.0
    %167 = vmatprep.subr.mxu0 0.0
    %168 = vmatpush1.msra.mxu0 0.0
    %169 = vmatprep.subr.mxu0 0.0
    %170 = vmatpush1.msra.mxu0 0.0
    %171 = vmatprep.subr.mxu0 0.0
    %172 = vmatpush1.msra.mxu0 0.0
    %173 = vmatprep.subr.mxu0 0.0
    %174 = vmatpush1.msra.mxu0 0.0
    %175 = vmatprep.subr.mxu0 0.0
    %176 = vmatpush1.msra.mxu0 0.0
    %177 = vmatprep.subr.mxu0 0.0
    %178 = vmatpush1.msra.mxu0 0.0
    %179 = vmatprep.subr.mxu0 0.0
    %180 = vmatpush1.msra.mxu0 0.0
    %181 = vmatprep.subr.mxu0 0.0
    %182 = vmatpush1.msra.mxu0 0.0
    %183 = vmatprep.subr.mxu0 0.0
    %184 = vmatpush1.msra.mxu0 0.0
    %185 = vmatprep.subr.mxu0 0.0
    %186 = vmatpush1.msra.mxu0 0.0
    %187 = vmatprep.subr.mxu0 0.0
    %188 = vmatpush1.msra.mxu0 0.0
    %189 = vmatprep.subr.mxu0 0.0
    %190 = vmatpush1.msra.mxu0 0.0
    %191 = vmatprep.subr.mxu0 0.0
    %192 = vmatpush1.msra.mxu0 0.0
    %193 = vmatprep.subr.mxu0 0.0
    %194 = vmatpush1.msra.mxu0 0.0
    %195 = vmatprep.subr.mxu0 0.0
    %196 = vmatpush1.msra.mxu0 0.0
    %197 = vmatprep.subr.mxu0 0.0
    %198 = vmatpush1.msra.mxu0 0.0
    %199 = vmatprep.subr.mxu0 0.0
    %200 = vmatpush1.msra.mxu0 0.0
    %201 = vmatprep.subr.mxu0 0.0
    %202 = vmatpush1.msra.mxu0 0.0
    %203 = vmatprep.subr.mxu0 0.0
    %204 = vmatpush1.msra.mxu0 0.0
    %205 = vmatprep.subr.mxu0 0.0
    %206 = vmatpush1.msra.mxu0 0.0
    %207 = vmatprep.subr.mxu0 0.0
    %208 = vmatpush1.msra.mxu0 0.0
    %209 = vmatprep.subr.mxu0 0.0
    %210 = vmatpush1.msra.mxu0 0.0
    %211 = vmatprep.subr.mxu0 0.0
    %212 = vmatpush1.msra.mxu0 0.0
    %213 = vmatprep.subr.mxu0 0.0
    %214 = vmatpush1.msra.mxu0 0.0
    %215 = vmatprep.subr.mxu0 0.0
    %216 = vmatpush1.msra.mxu0 0.0
    %217 = vmatprep.subr.mxu0 0.0
    %218 = vmatpush1.msra.mxu0 0.0
    %219 = vmatprep.subr.mxu0 0.0
    %220 = vmatpush1.msra.mxu0 0.0
    %221 = vmatprep.subr.mxu0 0.0
    %222 = vmatpush1.msra.mxu0 0.0
    %223 = vmatprep.subr.mxu0 0.0
    %224 = vmatpush1.msra.mxu0 0.0
    %225 = vmatprep.mubr.f32.mxu0 0.0
    %226 = vmatmul.mubr.f32.gmra.mrb[0].mxu0 %v138
    %v227 = vpop.f32.mrb[0].mxu0
    %v228 = vadd.f32 0.0, %v227
    %v229 = vpop.f32.mrb[0].mxu0
    %v230 = vadd.f32 0.0, %v229
    %231 = vmatprep.mubr.f32.mxu0 0.0
    %232 = vmatmul.mubr.f32.gmra.mrb[0].mxu0 %v141
    %v233 = vpop.f32.mrb[0].mxu0
    %v234 = vadd.f32 0.0, %v233
    %v235 = vpop.f32.mrb[0].mxu0
    %v236 = vadd.f32 0.0, %v235
    %237 = vmatprep.mubr.f32.mxu0 0.0
    %238 = vmatmul.mubr.f32.gmra.mrb[0].mxu0 %v144
    %v239 = vpop.f32.mrb[0].mxu0
    %v240 = vadd.f32 0.0, %v239
    %v241 = vpop.f32.mrb[0].mxu0
    %v242 = vadd.f32 0.0, %v241
    %243 = vmatprep.mubr.f32.mxu0 0.0
    %244 = vmatmul.mubr.f32.gmra.mrb[0].mxu0 %v147
    %v245 = vpop.f32.mrb[0].mxu0
    %v246 = vadd.f32 0.0, %v245
    %v247 = vpop.f32.mrb[0].mxu0
    %v248 = vadd.f32 0.0, %v247
    %249 = vmatprep.mubr.f32.mxu0 0.0
    %250 = vmatmul.mubr.f32.gmra.mrb[0].mxu0 %v150
    %v251 = vpop.f32.mrb[0].mxu0
    %v252 = vadd.f32 0.0, %v251
    %v253 = vpop.f32.mrb[0].mxu0
    %v254 = vadd.f32 0.0, %v253
    %255 = vmatprep.mubr.f32.mxu0 0.0
    %256 = vmatmul.mubr.f32.gmra.mrb[0].mxu0 %v153
    %v257 = vpop.f32.mrb[0].mxu0
    %v258 = vadd.f32 0.0, %v257
    %v259 = vpop.f32.mrb[0].mxu0
    %v260 = vadd.f32 0.0, %v259
    %261 = vmatprep.mubr.f32.mxu0 0.0
    %262 = vmatmul.mubr.f32.gmra.mrb[0].mxu0 %v156
    %v263 = vpop.f32.mrb[0].mxu0
    %v264 = vadd.f32 0.0, %v263
    %v265 = vpop.f32.mrb[0].mxu0
    %v266 = vadd.f32 0.0, %v265
    %267 = vmatprep.mubr.f32.mxu0 0.0
    %268 = vmatmul.mubr.f32.gmra.mrb[0].mxu0 %v159
    %v269 = vpop.f32.mrb[0].mxu0
    %v270 = vadd.f32 0.0, %v269
    %v271 = vpop.f32.mrb[0].mxu0
    %v272 = vadd.f32 0.0, %v271
    %273 = vdwg.mxu0
    %v274 = vadd.f32 %v112, %v228
    %v275 = vadd.f32 %v113, %v230
    %v276 = vadd.f32 %v114, %v228
    %v277 = vadd.f32 %v115, %v234
    %v278 = vadd.f32 %v116, %v236
    %v279 = vadd.f32 %v117, %v234
    %v280 = vadd.f32 %v118, %v240
    %v281 = vadd.f32 %v119, %v242
    %v282 = vadd.f32 %v120, %v240
    %v283 = vadd.f32 %v121, %v246
    %v284 = vadd.f32 %v122, %v248
    %v285 = vadd.f32 %v123, %v246
    %v286 = vadd.f32 %v124, %v252
    %v287 = vadd.f32 %v125, %v254
    %v288 = vadd.f32 %v126, %v252
    %v289 = vadd.f32 %v127, %v258
    %v290 = vadd.f32 %v128, %v260
    %v291 = vadd.f32 %v129, %v258
    %v292 = vadd.f32 %v130, %v264
    %v293 = vadd.f32 %v131, %v266
    %v294 = vadd.f32 %v132, %v264
    %v295 = vadd.f32 %v133, %v270
    %v296 = vadd.f32 %v134, %v272
    %v297 = vadd.f32 %v135, %v270
    %298 = vset.pattern.permute.xlu0 1
    %299 = vperm.xlu0 %298, %v36
    %v300 = vpop.permute.xlu0 %299
    %302 = vset.pattern.permute.xlu0 1
    %303 = vperm.xlu0 %302, %v37
    %v304 = vpop.permute.xlu0 %303
    %306 = vset.pattern.permute.xlu0 1
    %307 = vperm.xlu0 %306, %v38
    %v308 = vpop.permute.xlu0 %307
    %310 = vset.pattern.permute.xlu0 1
    %311 = vperm.xlu0 %310, %v39
    %v312 = vpop.permute.xlu0 %311
    %314 = vset.pattern.permute.xlu0 1
    %315 = vperm.xlu0 %314, %v40
    %v316 = vpop.permute.xlu0 %315
    %318 = vset.pattern.permute.xlu0 1
    %319 = vperm.xlu0 %318, %v41
    %v320 = vpop.permute.xlu0 %319
    %322 = vset.pattern.permute.xlu0 1
    %323 = vperm.xlu0 %322, %v42
    %v324 = vpop.permute.xlu0 %323
    %326 = vset.pattern.permute.xlu0 1
    %327 = vperm.xlu0 %326, %v43
    %v328 = vpop.permute.xlu0 %327
    %v330 = vadd.f32 %v274, %v300
    %v331 = vadd.f32 %v275, %v300
    %v332 = vadd.f32 %v276, %v300
    %v333 = vadd.f32 %v277, %v304
    %v334 = vadd.f32 %v278, %v304
    %v335 = vadd.f32 %v279, %v304
    %v336 = vadd.f32 %v280, %v308
    %v337 = vadd.f32 %v281, %v308
    %v338 = vadd.f32 %v282, %v308
    %v339 = vadd.f32 %v283, %v312
    %v340 = vadd.f32 %v284, %v312
    %v341 = vadd.f32 %v285, %v312
    %v342 = vadd.f32 %v286, %v316
    %v343 = vadd.f32 %v287, %v316
    %v344 = vadd.f32 %v288, %v316
    %v345 = vadd.f32 %v289, %v320
    %v346 = vadd.f32 %v290, %v320
    %v347 = vadd.f32 %v291, %v320
    %v348 = vadd.f32 %v292, %v324
    %v349 = vadd.f32 %v293, %v324
    %v350 = vadd.f32 %v294, %v324
    %v351 = vadd.f32 %v295, %v328
    %v352 = vadd.f32 %v296, %v328
    %v353 = vadd.f32 %v297, %v328
    %v354 = vxor.u32 %v330, 2147483648
    %v355 = vxor.u32 %v331, 2147483648
    %v356 = vxor.u32 %v332, 2147483648
    %v357 = vxor.u32 %v333, 2147483648
    %v358 = vxor.u32 %v334, 2147483648
    %v359 = vxor.u32 %v335, 2147483648
    %v360 = vmul.f32 %v354, 1.442695
    %v361 = vpow.pop %v360
    %v362 = vmul.f32 %v355, 1.442695
    %v363 = vpow.pop %v362
    %v364 = vmul.f32 %v356, 1.442695
    %v365 = vpow.pop %v364
    %v366 = vmul.f32 %v357, 1.442695
    %v367 = vpow.pop %v366
    %v368 = vmul.f32 %v358, 1.442695
    %v369 = vpow.pop %v368
    %v370 = vmul.f32 %v359, 1.442695
    %v371 = vpow.pop %v370
    %v372 = vadd.f32 %v361, 1.0
    %v373 = vadd.f32 %v363, 1.0
    %v374 = vadd.f32 %v365, 1.0
    %v375 = vadd.f32 %v367, 1.0
    %v376 = vadd.f32 %v369, 1.0
    %v377 = vadd.f32 %v371, 1.0
    %v378 = vrcp.pop %v372
    %v379 = vmul.f32 1.0, %v378
    %v380 = vrcp.pop %v373
    %v381 = vmul.f32 1.0, %v380
    %v382 = vrcp.pop %v374
    %v383 = vmul.f32 1.0, %v382
    %v384 = vrcp.pop %v375
    %v385 = vmul.f32 1.0, %v384
    %v386 = vrcp.pop %v376
    %v387 = vmul.f32 1.0, %v386
    %v388 = vrcp.pop %v377
    %v389 = vmul.f32 1.0, %v388
    %v390 = vxor.u32 %v336, 2147483648
    %v391 = vxor.u32 %v337, 2147483648
    %v392 = vxor.u32 %v338, 2147483648
    %v393 = vxor.u32 %v339, 2147483648
    %v394 = vxor.u32 %v340, 2147483648
    %v395 = vxor.u32 %v341, 2147483648
    %v396 = vmul.f32 %v390, 1.442695
    %v397 = vpow.pop %v396
    %v398 = vmul.f32 %v391, 1.442695
    %v399 = vpow.pop %v398
    %v400 = vmul.f32 %v392, 1.442695
    %v401 = vpow.pop %v400
    %v402 = vmul.f32 %v393, 1.442695
    %v403 = vpow.pop %v402
    %v404 = vmul.f32 %v394, 1.442695
    %v405 = vpow.pop %v404
    %v406 = vmul.f32 %v395, 1.442695
    %v407 = vpow.pop %v406
    %v408 = vadd.f32 %v397, 1.0
    %v409 = vadd.f32 %v399, 1.0
    %v410 = vadd.f32 %v401, 1.0
    %v411 = vadd.f32 %v403, 1.0
    %v412 = vadd.f32 %v405, 1.0
    %v413 = vadd.f32 %v407, 1.0
    %v414 = vrcp.pop %v408
    %v415 = vmul.f32 1.0, %v414
    %v416 = vrcp.pop %v409
    %v417 = vmul.f32 1.0, %v416
    %v418 = vrcp.pop %v410
    %v419 = vmul.f32 1.0, %v418
    %v420 = vrcp.pop %v411
    %v421 = vmul.f32 1.0, %v420
    %v422 = vrcp.pop %v412
    %v423 = vmul.f32 1.0, %v422
    %v424 = vrcp.pop %v413
    %v425 = vmul.f32 1.0, %v424
    %v426 = vtanh.pop %v342
    %v427 = vtanh.pop %v343
    %v428 = vtanh.pop %v344
    %v429 = vtanh.pop %v345
    %v430 = vtanh.pop %v346
    %v431 = vtanh.pop %v347
    %v432 = vxor.u32 %v348, 2147483648
    %v433 = vxor.u32 %v349, 2147483648
    %v434 = vxor.u32 %v350, 2147483648
    %v435 = vxor.u32 %v351, 2147483648
    %v436 = vxor.u32 %v352, 2147483648
    %v437 = vxor.u32 %v353, 2147483648
    %v438 = vmul.f32 %v432, 1.442695
    %v439 = vpow.pop %v438
    %v440 = vmul.f32 %v433, 1.442695
    %v441 = vpow.pop %v440
    %v442 = vmul.f32 %v434, 1.442695
    %v443 = vpow.pop %v442
    %v444 = vmul.f32 %v435, 1.442695
    %v445 = vpow.pop %v444
    %v446 = vmul.f32 %v436, 1.442695
    %v447 = vpow.pop %v446
    %v448 = vmul.f32 %v437, 1.442695
    %v449 = vpow.pop %v448
    %v450 = vadd.f32 %v439, 1.0
    %v451 = vadd.f32 %v441, 1.0
    %v452 = vadd.f32 %v443, 1.0
    %v453 = vadd.f32 %v445, 1.0
    %v454 = vadd.f32 %v447, 1.0
    %v455 = vadd.f32 %v449, 1.0
    %v456 = vrcp.pop %v450
    %v457 = vmul.f32 1.0, %v456
    %v458 = vrcp.pop %v451
    %v459 = vmul.f32 1.0, %v458
    %v460 = vrcp.pop %v452
    %v461 = vmul.f32 1.0, %v460
    %v462 = vrcp.pop %v453
    %v463 = vmul.f32 1.0, %v462
    %v464 = vrcp.pop %v454
    %v465 = vmul.f32 1.0, %v464
    %v466 = vrcp.pop %v455
    %v467 = vmul.f32 1.0, %v466
    %v468 = vmul.f32 %v415, 0.0
    %v469 = vmul.f32 %v417, 0.0
    %v470 = vmul.f32 %v419, 0.0
    %v471 = vmul.f32 %v421, 0.0
    %v472 = vmul.f32 %v423, 0.0
    %v473 = vmul.f32 %v425, 0.0
    %v474 = vmul.f32 %v379, %v426
    %v475 = vmul.f32 %v381, %v427
    %v476 = vmul.f32 %v383, %v428
    %v477 = vmul.f32 %v385, %v429
    %v478 = vmul.f32 %v387, %v430
    %v479 = vmul.f32 %v389, %v431
    %v480 = vadd.f32 %v468, %v474
    %v481 = vadd.f32 %v469, %v475
    %v482 = vadd.f32 %v470, %v476
    %v483 = vadd.f32 %v471, %v477
    %v484 = vadd.f32 %v472, %v478
    %v485 = vadd.f32 %v473, %v479
    %v486 = vtanh.pop %v480
    %v487 = vtanh.pop %v481
    %v488 = vtanh.pop %v482
    %v489 = vtanh.pop %v483
    %v490 = vtanh.pop %v484
    %v491 = vtanh.pop %v485
    %v492 = vmul.f32 %v457, %v486
    %v493 = vmul.f32 %v459, %v487
    %v494 = vmul.f32 %v461, %v488
    %v495 = vmul.f32 %v463, %v489
    %v496 = vmul.f32 %v465, %v490
    %v497 = vmul.f32 %v467, %v491
    %498 = vset.pattern.permute.xlu0 2
    %499 = vperm.xlu0 %498, %v36
    %v500 = vpop.permute.xlu0 %499
    %502 = vset.pattern.permute.xlu0 2
    %503 = vperm.xlu0 %502, %v37
    %v504 = vpop.permute.xlu0 %503
    %v506 = vmul.f32 %v500, %v492
    %v507 = vmul.f32 %v500, %v493
    %v508 = vmul.f32 %v500, %v494
    %v509 = vmul.f32 %v504, %v495
    %v510 = vmul.f32 %v504, %v496
    %v511 = vmul.f32 %v504, %v497
    %v512 = vadd.f32 %v506, %v509
    %v513 = vrot.slane %v512, 4
    %v514 = vadd.f32 %v512, %v513
    %v515 = vrot.slane %v514, 2
    %v516 = vadd.f32 %v514, %v515
    %v517 = vrot.slane %v516, 1
    %v518 = vadd.f32 %v516, %v517
    %v519 = vadd.f32 %v507, %v510
    %v520 = vrot.slane %v519, 4
    %v521 = vadd.f32 %v519, %v520
    %v522 = vrot.slane %v521, 2
    %v523 = vadd.f32 %v521, %v522
    %v524 = vrot.slane %v523, 1
    %v525 = vadd.f32 %v523, %v524
    %v526 = vadd.f32 %v508, %v511
    %v527 = vrot.slane %v526, 4
    %v528 = vadd.f32 %v526, %v527
    %v529 = vrot.slane %v528, 2
    %v530 = vadd.f32 %v528, %v529
    %v531 = vrot.slane %v530, 1
    %v532 = vadd.f32 %v530, %v531
    %v533 = vtanh.pop %v518
    %v534 = vtanh.pop %v525
    %v535 = vtanh.pop %v532
    %s536 = scalar_lea.vmem %s0, 1
    %v537 = vld [vmem:[%s536] ss:$8 sm:$0x7]
    %v539 = vlaneseq
    %v540 = vshrl.u32 %v539, 7
    %v541 = vsub.s32 0, %v540
    %v542 = vrot.slane %v537, %v541
    %v543 = vlaneseq
    %v544 = vshrl.u32 %v543, 7
    %v545 = vsub.s32 1, %v544
    %v546 = vrot.slane %v537, %v545
    %v547 = vlaneseq
    %v548 = vshrl.u32 %v547, 7
    %v549 = vsub.s32 2, %v548
    %v550 = vrot.slane %v537, %v549
    %v554 = vmul.f32 %v59, %v542
    %v555 = vmul.f32 %v59, %v546
    %v556 = vmul.f32 %v59, %v550
    %v557 = vmul.f32 %v64, %v542
    %v558 = vmul.f32 %v64, %v546
    %v559 = vmul.f32 %v64, %v550
    %v560 = vmul.f32 %v69, %v542
    %v561 = vmul.f32 %v69, %v546
    %v562 = vmul.f32 %v69, %v550
    %v563 = vmul.f32 %v74, %v542
    %v564 = vmul.f32 %v74, %v546
    %v565 = vmul.f32 %v74, %v550
    %v566 = vmul.f32 %v79, %v542
    %v567 = vmul.f32 %v79, %v546
    %v568 = vmul.f32 %v79, %v550
    %v569 = vmul.f32 %v84, %v542
    %v570 = vmul.f32 %v84, %v546
    %v571 = vmul.f32 %v84, %v550
    %v572 = vmul.f32 %v89, %v542
    %v573 = vmul.f32 %v89, %v546
    %v574 = vmul.f32 %v89, %v550
    %v575 = vmul.f32 %v94, %v542
    %v576 = vmul.f32 %v94, %v546
    %v577 = vmul.f32 %v94, %v550
    %578 = vmatprep.subr.mxu0 %v493
    %579 = vmatpush1.msra.mxu0 %v492
    %580 = vmatprep.subr.mxu0 %v496
    %581 = vmatpush1.msra.mxu0 %v495
    %582 = vmatprep.subr.mxu0 0.0
    %583 = vmatpush1.msra.mxu0 0.0
    %584 = vmatprep.subr.mxu0 0.0
    %585 = vmatpush1.msra.mxu0 0.0
    %586 = vmatprep.subr.mxu0 0.0
    %587 = vmatpush1.msra.mxu0 0.0
    %588 = vmatprep.subr.mxu0 0.0
    %589 = vmatpush1.msra.mxu0 0.0
    %590 = vmatprep.subr.mxu0 0.0
    %591 = vmatpush1.msra.mxu0 0.0
    %592 = vmatprep.subr.mxu0 0.0
    %593 = vmatpush1.msra.mxu0 0.0
    %594 = vmatprep.subr.mxu0 0.0
    %595 = vmatpush1.msra.mxu0 0.0
    %596 = vmatprep.subr.mxu0 0.0
    %597 = vmatpush1.msra.mxu0 0.0
    %598 = vmatprep.subr.mxu0 0.0
    %599 = vmatpush1.msra.mxu0 0.0
    %600 = vmatprep.subr.mxu0 0.0
    %601 = vmatpush1.msra.mxu0 0.0
    %602 = vmatprep.subr.mxu0 0.0
    %603 = vmatpush1.msra.mxu0 0.0
    %604 = vmatprep.subr.mxu0 0.0
    %605 = vmatpush1.msra.mxu0 0.0
    %606 = vmatprep.subr.mxu0 0.0
    %607 = vmatpush1.msra.mxu0 0.0
    %608 = vmatprep.subr.mxu0 0.0
    %609 = vmatpush1.msra.mxu0 0.0
    %610 = vmatprep.subr.mxu0 0.0
    %611 = vmatpush1.msra.mxu0 0.0
    %612 = vmatprep.subr.mxu0 0.0
    %613 = vmatpush1.msra.mxu0 0.0
    %614 = vmatprep.subr.mxu0 0.0
    %615 = vmatpush1.msra.mxu0 0.0
    %616 = vmatprep.subr.mxu0 0.0
    %617 = vmatpush1.msra.mxu0 0.0
    %618 = vmatprep.subr.mxu0 0.0
    %619 = vmatpush1.msra.mxu0 0.0
    %620 = vmatprep.subr.mxu0 0.0
    %621 = vmatpush1.msra.mxu0 0.0
    %622 = vmatprep.subr.mxu0 0.0
    %623 = vmatpush1.msra.mxu0 0.0
    %624 = vmatprep.subr.mxu0 0.0
    %625 = vmatpush1.msra.mxu0 0.0
    %626 = vmatprep.subr.mxu0 0.0
    %627 = vmatpush1.msra.mxu0 0.0
    %628 = vmatprep.subr.mxu0 0.0
    %629 = vmatpush1.msra.mxu0 0.0
    %630 = vmatprep.subr.mxu0 0.0
    %631 = vmatpush1.msra.mxu0 0.0
    %632 = vmatprep.subr.mxu0 0.0
    %633 = vmatpush1.msra.mxu0 0.0
    %634 = vmatprep.subr.mxu0 0.0
    %635 = vmatpush1.msra.mxu0 0.0
    %636 = vmatprep.subr.mxu0 0.0
    %637 = vmatpush1.msra.mxu0 0.0
    %638 = vmatprep.subr.mxu0 0.0
    %639 = vmatpush1.msra.mxu0 0.0
    %640 = vmatprep.subr.mxu0 0.0
    %641 = vmatpush1.msra.mxu0 0.0
    %642 = vmatprep.mubr.f32.mxu0 0.0
    %643 = vmatmul.mubr.f32.gmra.mrb[0].mxu0 %v138
    %v644 = vpop.f32.mrb[0].mxu0
    %v645 = vadd.f32 0.0, %v644
    %v646 = vpop.f32.mrb[0].mxu0
    %v647 = vadd.f32 0.0, %v646
    %648 = vmatprep.mubr.f32.mxu0 0.0
    %649 = vmatmul.mubr.f32.gmra.mrb[0].mxu0 %v141
    %v650 = vpop.f32.mrb[0].mxu0
    %v651 = vadd.f32 0.0, %v650
    %v652 = vpop.f32.mrb[0].mxu0
    %v653 = vadd.f32 0.0, %v652
    %654 = vmatprep.mubr.f32.mxu0 0.0
    %655 = vmatmul.mubr.f32.gmra.mrb[0].mxu0 %v144
    %v656 = vpop.f32.mrb[0].mxu0
    %v657 = vadd.f32 0.0, %v656
    %v658 = vpop.f32.mrb[0].mxu0
    %v659 = vadd.f32 0.0, %v658
    %660 = vmatprep.mubr.f32.mxu0 0.0
    %661 = vmatmul.mubr.f32.gmra.mrb[0].mxu0 %v147
    %v662 = vpop.f32.mrb[0].mxu0
    %v663 = vadd.f32 0.0, %v662
    %v664 = vpop.f32.mrb[0].mxu0
    %v665 = vadd.f32 0.0, %v664
    %666 = vmatprep.mubr.f32.mxu0 0.0
    %667 = vmatmul.mubr.f32.gmra.mrb[0].mxu0 %v150
    %v668 = vpop.f32.mrb[0].mxu0
    %v669 = vadd.f32 0.0, %v668
    %v670 = vpop.f32.mrb[0].mxu0
    %v671 = vadd.f32 0.0, %v670
    %672 = vmatprep.mubr.f32.mxu0 0.0
    %673 = vmatmul.mubr.f32.gmra.mrb[0].mxu0 %v153
    %v674 = vpop.f32.mrb[0].mxu0
    %v675 = vadd.f32 0.0, %v674
    %v676 = vpop.f32.mrb[0].mxu0
    %v677 = vadd.f32 0.0, %v676
    %678 = vmatprep.mubr.f32.mxu0 0.0
    %679 = vmatmul.mubr.f32.gmra.mrb[0].mxu0 %v156
    %v680 = vpop.f32.mrb[0].mxu0
    %v681 = vadd.f32 0.0, %v680
    %v682 = vpop.f32.mrb[0].mxu0
    %v683 = vadd.f32 0.0, %v682
    %684 = vmatprep.mubr.f32.mxu0 0.0
    %685 = vmatmul.mubr.f32.gmra.mrb[0].mxu0 %v159
    %v686 = vpop.f32.mrb[0].mxu0
    %v687 = vadd.f32 0.0, %v686
    %v688 = vpop.f32.mrb[0].mxu0
    %v689 = vadd.f32 0.0, %v688
    %690 = vdwg.mxu0
    %691 = vmatprep.subr.mxu0 0.0
    %692 = vmatpush1.msra.mxu0 %v494
    %693 = vmatprep.subr.mxu0 0.0
    %694 = vmatpush1.msra.mxu0 %v497
    %695 = vmatprep.subr.mxu0 0.0
    %696 = vmatpush1.msra.mxu0 0.0
    %697 = vmatprep.subr.mxu0 0.0
    %698 = vmatpush1.msra.mxu0 0.0
    %699 = vmatprep.subr.mxu0 0.0
    %700 = vmatpush1.msra.mxu0 0.0
    %701 = vmatprep.subr.mxu0 0.0
    %702 = vmatpush1.msra.mxu0 0.0
    %703 = vmatprep.subr.mxu0 0.0
    %704 = vmatpush1.msra.mxu0 0.0
    %705 = vmatprep.subr.mxu0 0.0
    %706 = vmatpush1.msra.mxu0 0.0
    %707 = vmatprep.subr.mxu0 0.0
    %708 = vmatpush1.msra.mxu0 0.0
    %709 = vmatprep.subr.mxu0 0.0
    %710 = vmatpush1.msra.mxu0 0.0
    %711 = vmatprep.subr.mxu0 0.0
    %712 = vmatpush1.msra.mxu0 0.0
    %713 = vmatprep.subr.mxu0 0.0
    %714 = vmatpush1.msra.mxu0 0.0
    %715 = vmatprep.subr.mxu0 0.0
    %716 = vmatpush1.msra.mxu0 0.0
    %717 = vmatprep.subr.mxu0 0.0
    %718 = vmatpush1.msra.mxu0 0.0
    %719 = vmatprep.subr.mxu0 0.0
    %720 = vmatpush1.msra.mxu0 0.0
    %721 = vmatprep.subr.mxu0 0.0
    %722 = vmatpush1.msra.mxu0 0.0
    %723 = vmatprep.subr.mxu0 0.0
    %724 = vmatpush1.msra.mxu0 0.0
    %725 = vmatprep.subr.mxu0 0.0
    %726 = vmatpush1.msra.mxu0 0.0
    %727 = vmatprep.subr.mxu0 0.0
    %728 = vmatpush1.msra.mxu0 0.0
    %729 = vmatprep.subr.mxu0 0.0
    %730 = vmatpush1.msra.mxu0 0.0
    %731 = vmatprep.subr.mxu0 0.0
    %732 = vmatpush1.msra.mxu0 0.0
    %733 = vmatprep.subr.mxu0 0.0
    %734 = vmatpush1.msra.mxu0 0.0
    %735 = vmatprep.subr.mxu0 0.0
    %736 = vmatpush1.msra.mxu0 0.0
    %737 = vmatprep.subr.mxu0 0.0
    %738 = vmatpush1.msra.mxu0 0.0
    %739 = vmatprep.subr.mxu0 0.0
    %740 = vmatpush1.msra.mxu0 0.0
    %741 = vmatprep.subr.mxu0 0.0
    %742 = vmatpush1.msra.mxu0 0.0
    %743 = vmatprep.subr.mxu0 0.0
    %744 = vmatpush1.msra.mxu0 0.0
    %745 = vmatprep.subr.mxu0 0.0
    %746 = vmatpush1.msra.mxu0 0.0
    %747 = vmatprep.subr.mxu0 0.0
    %748 = vmatpush1.msra.mxu0 0.0
    %749 = vmatprep.subr.mxu0 0.0
    %750 = vmatpush1.msra.mxu0 0.0
    %751 = vmatprep.subr.mxu0 0.0
    %752 = vmatpush1.msra.mxu0 0.0
    %753 = vmatprep.subr.mxu0 0.0
    %754 = vmatpush1.msra.mxu0 0.0
    %755 = vmatprep.mubr.f32.mxu0 0.0
    %756 = vmatmul.mubr.f32.gmra.mrb[0].mxu0 %v138
    %v757 = vpop.f32.mrb[0].mxu0
    %v758 = vadd.f32 0.0, %v757
    %v759 = vpop.f32.mrb[0].mxu0
    %760 = vmatprep.mubr.f32.mxu0 0.0
    %761 = vmatmul.mubr.f32.gmra.mrb[0].mxu0 %v141
    %v762 = vpop.f32.mrb[0].mxu0
    %v763 = vadd.f32 0.0, %v762
    %v764 = vpop.f32.mrb[0].mxu0
    %765 = vmatprep.mubr.f32.mxu0 0.0
    %766 = vmatmul.mubr.f32.gmra.mrb[0].mxu0 %v144
    %v767 = vpop.f32.mrb[0].mxu0
    %v768 = vadd.f32 0.0, %v767
    %v769 = vpop.f32.mrb[0].mxu0
    %770 = vmatprep.mubr.f32.mxu0 0.0
    %771 = vmatmul.mubr.f32.gmra.mrb[0].mxu0 %v147
    %v772 = vpop.f32.mrb[0].mxu0
    %v773 = vadd.f32 0.0, %v772
    %v774 = vpop.f32.mrb[0].mxu0
    %775 = vmatprep.mubr.f32.mxu0 0.0
    %776 = vmatmul.mubr.f32.gmra.mrb[0].mxu0 %v150
    %v777 = vpop.f32.mrb[0].mxu0
    %v778 = vadd.f32 0.0, %v777
    %v779 = vpop.f32.mrb[0].mxu0
    %780 = vmatprep.mubr.f32.mxu0 0.0
    %781 = vmatmul.mubr.f32.gmra.mrb[0].mxu0 %v153
    %v782 = vpop.f32.mrb[0].mxu0
    %v783 = vadd.f32 0.0, %v782
    %v784 = vpop.f32.mrb[0].mxu0
    %785 = vmatprep.mubr.f32.mxu0 0.0
    %786 = vmatmul.mubr.f32.gmra.mrb[0].mxu0 %v156
    %v787 = vpop.f32.mrb[0].mxu0
    %v788 = vadd.f32 0.0, %v787
    %v789 = vpop.f32.mrb[0].mxu0
    %790 = vmatprep.mubr.f32.mxu0 0.0
    %791 = vmatmul.mubr.f32.gmra.mrb[0].mxu0 %v159
    %v792 = vpop.f32.mrb[0].mxu0
    %v793 = vadd.f32 0.0, %v792
    %v794 = vpop.f32.mrb[0].mxu0
    %795 = vdwg.mxu0
    %v796 = vadd.f32 %v554, %v645
    %v797 = vadd.f32 %v555, %v647
    %v798 = vadd.f32 %v556, %v758
    %v799 = vadd.f32 %v557, %v651
    %v800 = vadd.f32 %v558, %v653
    %v801 = vadd.f32 %v559, %v763
    %v802 = vadd.f32 %v560, %v657
    %v803 = vadd.f32 %v561, %v659
    %v804 = vadd.f32 %v562, %v768
    %v805 = vadd.f32 %v563, %v663
    %v806 = vadd.f32 %v564, %v665
    %v807 = vadd.f32 %v565, %v773
    %v808 = vadd.f32 %v566, %v669
    %v809 = vadd.f32 %v567, %v671
    %v810 = vadd.f32 %v568, %v778
    %v811 = vadd.f32 %v569, %v675
    %v812 = vadd.f32 %v570, %v677
    %v813 = vadd.f32 %v571, %v783
    %v814 = vadd.f32 %v572, %v681
    %v815 = vadd.f32 %v573, %v683
    %v816 = vadd.f32 %v574, %v788
    %v817 = vadd.f32 %v575, %v687
    %v818 = vadd.f32 %v576, %v689
    %v819 = vadd.f32 %v577, %v793
    %v820 = vadd.f32 %v796, %v300
    %v821 = vadd.f32 %v797, %v300
    %v822 = vadd.f32 %v798, %v300
    %v823 = vadd.f32 %v799, %v304
    %v824 = vadd.f32 %v800, %v304
    %v825 = vadd.f32 %v801, %v304
    %v826 = vadd.f32 %v802, %v308
    %v827 = vadd.f32 %v803, %v308
    %v828 = vadd.f32 %v804, %v308
    %v829 = vadd.f32 %v805, %v312
    %v830 = vadd.f32 %v806, %v312
    %v831 = vadd.f32 %v807, %v312
    %v832 = vadd.f32 %v808, %v316
    %v833 = vadd.f32 %v809, %v316
    %v834 = vadd.f32 %v810, %v316
    %v835 = vadd.f32 %v811, %v320
    %v836 = vadd.f32 %v812, %v320
    %v837 = vadd.f32 %v813, %v320
    %v838 = vadd.f32 %v814, %v324
    %v839 = vadd.f32 %v815, %v324
    %v840 = vadd.f32 %v816, %v324
    %v841 = vadd.f32 %v817, %v328
    %v842 = vadd.f32 %v818, %v328
    %v843 = vadd.f32 %v819, %v328
    %v844 = vxor.u32 %v820, 2147483648
    %v845 = vxor.u32 %v821, 2147483648
    %v846 = vxor.u32 %v822, 2147483648
    %v847 = vxor.u32 %v823, 2147483648
    %v848 = vxor.u32 %v824, 2147483648
    %v849 = vxor.u32 %v825, 2147483648
    %v850 = vmul.f32 %v844, 1.442695
    %v851 = vpow.pop %v850
    %v852 = vmul.f32 %v845, 1.442695
    %v853 = vpow.pop %v852
    %v854 = vmul.f32 %v846, 1.442695
    %v855 = vpow.pop %v854
    %v856 = vmul.f32 %v847, 1.442695
    %v857 = vpow.pop %v856
    %v858 = vmul.f32 %v848, 1.442695
    %v859 = vpow.pop %v858
    %v860 = vmul.f32 %v849, 1.442695
    %v861 = vpow.pop %v860
    %v862 = vadd.f32 %v851, 1.0
    %v863 = vadd.f32 %v853, 1.0
    %v864 = vadd.f32 %v855, 1.0
    %v865 = vadd.f32 %v857, 1.0
    %v866 = vadd.f32 %v859, 1.0
    %v867 = vadd.f32 %v861, 1.0
    %v868 = vrcp.pop %v862
    %v869 = vmul.f32 1.0, %v868
    %v870 = vrcp.pop %v863
    %v871 = vmul.f32 1.0, %v870
    %v872 = vrcp.pop %v864
    %v873 = vmul.f32 1.0, %v872
    %v874 = vrcp.pop %v865
    %v875 = vmul.f32 1.0, %v874
    %v876 = vrcp.pop %v866
    %v877 = vmul.f32 1.0, %v876
    %v878 = vrcp.pop %v867
    %v879 = vmul.f32 1.0, %v878
    %v880 = vxor.u32 %v826, 2147483648
    %v881 = vxor.u32 %v827, 2147483648
    %v882 = vxor.u32 %v828, 2147483648
    %v883 = vxor.u32 %v829, 2147483648
    %v884 = vxor.u32 %v830, 2147483648
    %v885 = vxor.u32 %v831, 2147483648
    %v886 = vmul.f32 %v880, 1.442695
    %v887 = vpow.pop %v886
    %v888 = vmul.f32 %v881, 1.442695
    %v889 = vpow.pop %v888
    %v890 = vmul.f32 %v882, 1.442695
    %v891 = vpow.pop %v890
    %v892 = vmul.f32 %v883, 1.442695
    %v893 = vpow.pop %v892
    %v894 = vmul.f32 %v884, 1.442695
    %v895 = vpow.pop %v894
    %v896 = vmul.f32 %v885, 1.442695
    %v897 = vpow.pop %v896
    %v898 = vadd.f32 %v887, 1.0
    %v899 = vadd.f32 %v889, 1.0
    %v900 = vadd.f32 %v891, 1.0
    %v901 = vadd.f32 %v893, 1.0
    %v902 = vadd.f32 %v895, 1.0
    %v903 = vadd.f32 %v897, 1.0
    %v904 = vrcp.pop %v898
    %v905 = vmul.f32 1.0, %v904
    %v906 = vrcp.pop %v899
    %v907 = vmul.f32 1.0, %v906
    %v908 = vrcp.pop %v900
    %v909 = vmul.f32 1.0, %v908
    %v910 = vrcp.pop %v901
    %v911 = vmul.f32 1.0, %v910
    %v912 = vrcp.pop %v902
    %v913 = vmul.f32 1.0, %v912
    %v914 = vrcp.pop %v903
    %v915 = vmul.f32 1.0, %v914
    %v916 = vtanh.pop %v832
    %v917 = vtanh.pop %v833
    %v918 = vtanh.pop %v834
    %v919 = vtanh.pop %v835
    %v920 = vtanh.pop %v836
    %v921 = vtanh.pop %v837
    %v922 = vxor.u32 %v838, 2147483648
    %v923 = vxor.u32 %v839, 2147483648
    %v924 = vxor.u32 %v840, 2147483648
    %v925 = vxor.u32 %v841, 2147483648
    %v926 = vxor.u32 %v842, 2147483648
    %v927 = vxor.u32 %v843, 2147483648
    %v928 = vmul.f32 %v922, 1.442695
    %v929 = vpow.pop %v928
    %v930 = vmul.f32 %v923, 1.442695
    %v931 = vpow.pop %v930
    %v932 = vmul.f32 %v924, 1.442695
    %v933 = vpow.pop %v932
    %v934 = vmul.f32 %v925, 1.442695
    %v935 = vpow.pop %v934
    %v936 = vmul.f32 %v926, 1.442695
    %v937 = vpow.pop %v936
    %v938 = vmul.f32 %v927, 1.442695
    %v939 = vpow.pop %v938
    %v940 = vadd.f32 %v929, 1.0
    %v941 = vadd.f32 %v931, 1.0
    %v942 = vadd.f32 %v933, 1.0
    %v943 = vadd.f32 %v935, 1.0
    %v944 = vadd.f32 %v937, 1.0
    %v945 = vadd.f32 %v939, 1.0
    %v946 = vrcp.pop %v940
    %v947 = vmul.f32 1.0, %v946
    %v948 = vrcp.pop %v941
    %v949 = vmul.f32 1.0, %v948
    %v950 = vrcp.pop %v942
    %v951 = vmul.f32 1.0, %v950
    %v952 = vrcp.pop %v943
    %v953 = vmul.f32 1.0, %v952
    %v954 = vrcp.pop %v944
    %v955 = vmul.f32 1.0, %v954
    %v956 = vrcp.pop %v945
    %v957 = vmul.f32 1.0, %v956
    %v958 = vmul.f32 %v905, %v480
    %v959 = vmul.f32 %v907, %v481
    %v960 = vmul.f32 %v909, %v482
    %v961 = vmul.f32 %v911, %v483
    %v962 = vmul.f32 %v913, %v484
    %v963 = vmul.f32 %v915, %v485
    %v964 = vmul.f32 %v869, %v916
    %v965 = vmul.f32 %v871, %v917
    %v966 = vmul.f32 %v873, %v918
    %v967 = vmul.f32 %v875, %v919
    %v968 = vmul.f32 %v877, %v920
    %v969 = vmul.f32 %v879, %v921
    %v970 = vadd.f32 %v958, %v964
    %v971 = vadd.f32 %v959, %v965
    %v972 = vadd.f32 %v960, %v966
    %v973 = vadd.f32 %v961, %v967
    %v974 = vadd.f32 %v962, %v968
    %v975 = vadd.f32 %v963, %v969
    %v976 = vtanh.pop %v970
    %v977 = vtanh.pop %v971
    %v978 = vtanh.pop %v972
    %v979 = vtanh.pop %v973
    %v980 = vtanh.pop %v974
    %v981 = vtanh.pop %v975
    %v982 = vmul.f32 %v947, %v976
    %v983 = vmul.f32 %v949, %v977
    %v984 = vmul.f32 %v951, %v978
    %v985 = vmul.f32 %v953, %v979
    %v986 = vmul.f32 %v955, %v980
    %v987 = vmul.f32 %v957, %v981
    %v988 = vmul.f32 %v500, %v982
    %v989 = vmul.f32 %v500, %v983
    %v990 = vmul.f32 %v500, %v984
    %v991 = vmul.f32 %v504, %v985
    %v992 = vmul.f32 %v504, %v986
    %v993 = vmul.f32 %v504, %v987
    %v994 = vadd.f32 %v988, %v991
    %v995 = vrot.slane %v994, 4
    %v996 = vadd.f32 %v994, %v995
    %v997 = vrot.slane %v996, 2
    %v998 = vadd.f32 %v996, %v997
    %v999 = vrot.slane %v998, 1
    %v1000 = vadd.f32 %v998, %v999
    %v1001 = vadd.f32 %v989, %v992
    %v1002 = vrot.slane %v1001, 4
    %v1003 = vadd.f32 %v1001, %v1002
    %v1004 = vrot.slane %v1003, 2
    %v1005 = vadd.f32 %v1003, %v1004
    %v1006 = vrot.slane %v1005, 1
    %v1007 = vadd.f32 %v1005, %v1006
    %v1008 = vadd.f32 %v990, %v993
    %v1009 = vrot.slane %v1008, 4
    %v1010 = vadd.f32 %v1008, %v1009
    %v1011 = vrot.slane %v1010, 2
    %v1012 = vadd.f32 %v1010, %v1011
    %v1013 = vrot.slane %v1012, 1
    %v1014 = vadd.f32 %v1012, %v1013
    %v1015 = vtanh.pop %v1000
    %v1016 = vtanh.pop %v1007
    %v1017 = vtanh.pop %v1014
    %s1018 = scalar_lea.vmem %s0, 2
    %v1019 = vld [vmem:[%s1018] ss:$8 sm:$0x7]
    %v1021 = vlaneseq
    %v1022 = vshrl.u32 %v1021, 7
    %v1023 = vsub.s32 0, %v1022
    %v1024 = vrot.slane %v1019, %v1023
    %v1025 = vlaneseq
    %v1026 = vshrl.u32 %v1025, 7
    %v1027 = vsub.s32 1, %v1026
    %v1028 = vrot.slane %v1019, %v1027
    %v1029 = vlaneseq
    %v1030 = vshrl.u32 %v1029, 7
    %v1031 = vsub.s32 2, %v1030
    %v1032 = vrot.slane %v1019, %v1031
    %v1036 = vmul.f32 %v59, %v1024
    %v1037 = vmul.f32 %v59, %v1028
    %v1038 = vmul.f32 %v59, %v1032
    %v1039 = vmul.f32 %v64, %v1024
    %v1040 = vmul.f32 %v64, %v1028
    %v1041 = vmul.f32 %v64, %v1032
    %v1042 = vmul.f32 %v69, %v1024
    %v1043 = vmul.f32 %v69, %v1028
    %v1044 = vmul.f32 %v69, %v1032
    %v1045 = vmul.f32 %v74, %v1024
    %v1046 = vmul.f32 %v74, %v1028
    %v1047 = vmul.f32 %v74, %v1032
    %v1048 = vmul.f32 %v79, %v1024
    %v1049 = vmul.f32 %v79, %v1028
    %v1050 = vmul.f32 %v79, %v1032
    %v1051 = vmul.f32 %v84, %v1024
    %v1052 = vmul.f32 %v84, %v1028
    %v1053 = vmul.f32 %v84, %v1032
    %v1054 = vmul.f32 %v89, %v1024
    %v1055 = vmul.f32 %v89, %v1028
    %v1056 = vmul.f32 %v89, %v1032
    %v1057 = vmul.f32 %v94, %v1024
    %v1058 = vmul.f32 %v94, %v1028
    %v1059 = vmul.f32 %v94, %v1032
    %1060 = vmatprep.subr.mxu0 %v983
    %1061 = vmatpush1.msra.mxu0 %v982
    %1062 = vmatprep.subr.mxu0 %v986
    %1063 = vmatpush1.msra.mxu0 %v985
    %1064 = vmatprep.subr.mxu0 0.0
    %1065 = vmatpush1.msra.mxu0 0.0
    %1066 = vmatprep.subr.mxu0 0.0
    %1067 = vmatpush1.msra.mxu0 0.0
    %1068 = vmatprep.subr.mxu0 0.0
    %1069 = vmatpush1.msra.mxu0 0.0
    %1070 = vmatprep.subr.mxu0 0.0
    %1071 = vmatpush1.msra.mxu0 0.0
    %1072 = vmatprep.subr.mxu0 0.0
    %1073 = vmatpush1.msra.mxu0 0.0
    %1074 = vmatprep.subr.mxu0 0.0
    %1075 = vmatpush1.msra.mxu0 0.0
    %1076 = vmatprep.subr.mxu0 0.0
    %1077 = vmatpush1.msra.mxu0 0.0
    %1078 = vmatprep.subr.mxu0 0.0
    %1079 = vmatpush1.msra.mxu0 0.0
    %1080 = vmatprep.subr.mxu0 0.0
    %1081 = vmatpush1.msra.mxu0 0.0
    %1082 = vmatprep.subr.mxu0 0.0
    %1083 = vmatpush1.msra.mxu0 0.0
    %1084 = vmatprep.subr.mxu0 0.0
    %1085 = vmatpush1.msra.mxu0 0.0
    %1086 = vmatprep.subr.mxu0 0.0
    %1087 = vmatpush1.msra.mxu0 0.0
    %1088 = vmatprep.subr.mxu0 0.0
    %1089 = vmatpush1.msra.mxu0 0.0
    %1090 = vmatprep.subr.mxu0 0.0
    %1091 = vmatpush1.msra.mxu0 0.0
    %1092 = vmatprep.subr.mxu0 0.0
    %1093 = vmatpush1.msra.mxu0 0.0
    %1094 = vmatprep.subr.mxu0 0.0
    %1095 = vmatpush1.msra.mxu0 0.0
    %1096 = vmatprep.subr.mxu0 0.0
    %1097 = vmatpush1.msra.mxu0 0.0
    %1098 = vmatprep.subr.mxu0 0.0
    %1099 = vmatpush1.msra.mxu0 0.0
    %1100 = vmatprep.subr.mxu0 0.0
    %1101 = vmatpush1.msra.mxu0 0.0
    %1102 = vmatprep.subr.mxu0 0.0
    %1103 = vmatpush1.msra.mxu0 0.0
    %1104 = vmatprep.subr.mxu0 0.0
    %1105 = vmatpush1.msra.mxu0 0.0
    %1106 = vmatprep.subr.mxu0 0.0
    %1107 = vmatpush1.msra.mxu0 0.0
    %1108 = vmatprep.subr.mxu0 0.0
    %1109 = vmatpush1.msra.mxu0 0.0
    %1110 = vmatprep.subr.mxu0 0.0
    %1111 = vmatpush1.msra.mxu0 0.0
    %1112 = vmatprep.subr.mxu0 0.0
    %1113 = vmatpush1.msra.mxu0 0.0
    %1114 = vmatprep.subr.mxu0 0.0
    %1115 = vmatpush1.msra.mxu0 0.0
    %1116 = vmatprep.subr.mxu0 0.0
    %1117 = vmatpush1.msra.mxu0 0.0
    %1118 = vmatprep.subr.mxu0 0.0
    %1119 = vmatpush1.msra.mxu0 0.0
    %1120 = vmatprep.subr.mxu0 0.0
    %1121 = vmatpush1.msra.mxu0 0.0
    %1122 = vmatprep.subr.mxu0 0.0
    %1123 = vmatpush1.msra.mxu0 0.0
    %1124 = vmatprep.mubr.f32.mxu0 0.0
    %1125 = vmatmul.mubr.f32.gmra.mrb[0].mxu0 %v138
    %v1126 = vpop.f32.mrb[0].mxu0
    %v1127 = vadd.f32 0.0, %v1126
    %v1128 = vpop.f32.mrb[0].mxu0
    %v1129 = vadd.f32 0.0, %v1128
    %1130 = vmatprep.mubr.f32.mxu0 0.0
    %1131 = vmatmul.mubr.f32.gmra.mrb[0].mxu0 %v141
    %v1132 = vpop.f32.mrb[0].mxu0
    %v1133 = vadd.f32 0.0, %v1132
    %v1134 = vpop.f32.mrb[0].mxu0
    %v1135 = vadd.f32 0.0, %v1134
    %1136 = vmatprep.mubr.f32.mxu0 0.0
    %1137 = vmatmul.mubr.f32.gmra.mrb[0].mxu0 %v144
    %v1138 = vpop.f32.mrb[0].mxu0
    %v1139 = vadd.f32 0.0, %v1138
    %v1140 = vpop.f32.mrb[0].mxu0
    %v1141 = vadd.f32 0.0, %v1140
    %1142 = vmatprep.mubr.f32.mxu0 0.0
    %1143 = vmatmul.mubr.f32.gmra.mrb[0].mxu0 %v147
    %v1144 = vpop.f32.mrb[0].mxu0
    %v1145 = vadd.f32 0.0, %v1144
    %v1146 = vpop.f32.mrb[0].mxu0
    %v1147 = vadd.f32 0.0, %v1146
    %1148 = vmatprep.mubr.f32.mxu0 0.0
    %1149 = vmatmul.mubr.f32.gmra.mrb[0].mxu0 %v150
    %v1150 = vpop.f32.mrb[0].mxu0
    %v1151 = vadd.f32 0.0, %v1150
    %v1152 = vpop.f32.mrb[0].mxu0
    %v1153 = vadd.f32 0.0, %v1152
    %1154 = vmatprep.mubr.f32.mxu0 0.0
    %1155 = vmatmul.mubr.f32.gmra.mrb[0].mxu0 %v153
    %v1156 = vpop.f32.mrb[0].mxu0
    %v1157 = vadd.f32 0.0, %v1156
    %v1158 = vpop.f32.mrb[0].mxu0
    %v1159 = vadd.f32 0.0, %v1158
    %1160 = vmatprep.mubr.f32.mxu0 0.0
    %1161 = vmatmul.mubr.f32.gmra.mrb[0].mxu0 %v156
    %v1162 = vpop.f32.mrb[0].mxu0
    %v1163 = vadd.f32 0.0, %v1162
    %v1164 = vpop.f32.mrb[0].mxu0
    %v1165 = vadd.f32 0.0, %v1164
    %1166 = vmatprep.mubr.f32.mxu0 0.0
    %1167 = vmatmul.mubr.f32.gmra.mrb[0].mxu0 %v159
    %v1168 = vpop.f32.mrb[0].mxu0
    %v1169 = vadd.f32 0.0, %v1168
    %v1170 = vpop.f32.mrb[0].mxu0
    %v1171 = vadd.f32 0.0, %v1170
    %1172 = vdwg.mxu0
    %1173 = vmatprep.subr.mxu0 0.0
    %1174 = vmatpush1.msra.mxu0 %v984
    %1175 = vmatprep.subr.mxu0 0.0
    %1176 = vmatpush1.msra.mxu0 %v987
    %1177 = vmatprep.subr.mxu0 0.0
    %1178 = vmatpush1.msra.mxu0 0.0
    %1179 = vmatprep.subr.mxu0 0.0
    %1180 = vmatpush1.msra.mxu0 0.0
    %1181 = vmatprep.subr.mxu0 0.0
    %1182 = vmatpush1.msra.mxu0 0.0
    %1183 = vmatprep.subr.mxu0 0.0
    %1184 = vmatpush1.msra.mxu0 0.0
    %1185 = vmatprep.subr.mxu0 0.0
    %1186 = vmatpush1.msra.mxu0 0.0
    %1187 = vmatprep.subr.mxu0 0.0
    %1188 = vmatpush1.msra.mxu0 0.0
    %1189 = vmatprep.subr.mxu0 0.0
    %1190 = vmatpush1.msra.mxu0 0.0
    %1191 = vmatprep.subr.mxu0 0.0
    %1192 = vmatpush1.msra.mxu0 0.0
    %1193 = vmatprep.subr.mxu0 0.0
    %1194 = vmatpush1.msra.mxu0 0.0
    %1195 = vmatprep.subr.mxu0 0.0
    %1196 = vmatpush1.msra.mxu0 0.0
    %1197 = vmatprep.subr.mxu0 0.0
    %1198 = vmatpush1.msra.mxu0 0.0
    %1199 = vmatprep.subr.mxu0 0.0
    %1200 = vmatpush1.msra.mxu0 0.0
    %1201 = vmatprep.subr.mxu0 0.0
    %1202 = vmatpush1.msra.mxu0 0.0
    %1203 = vmatprep.subr.mxu0 0.0
    %1204 = vmatpush1.msra.mxu0 0.0
    %1205 = vmatprep.subr.mxu0 0.0
    %1206 = vmatpush1.msra.mxu0 0.0
    %1207 = vmatprep.subr.mxu0 0.0
    %1208 = vmatpush1.msra.mxu0 0.0
    %1209 = vmatprep.subr.mxu0 0.0
    %1210 = vmatpush1.msra.mxu0 0.0
    %1211 = vmatprep.subr.mxu0 0.0
    %1212 = vmatpush1.msra.mxu0 0.0
    %1213 = vmatprep.subr.mxu0 0.0
    %1214 = vmatpush1.msra.mxu0 0.0
    %1215 = vmatprep.subr.mxu0 0.0
    %1216 = vmatpush1.msra.mxu0 0.0
    %1217 = vmatprep.subr.mxu0 0.0
    %1218 = vmatpush1.msra.mxu0 0.0
    %1219 = vmatprep.subr.mxu0 0.0
    %1220 = vmatpush1.msra.mxu0 0.0
    %1221 = vmatprep.subr.mxu0 0.0
    %1222 = vmatpush1.msra.mxu0 0.0
    %1223 = vmatprep.subr.mxu0 0.0
    %1224 = vmatpush1.msra.mxu0 0.0
    %1225 = vmatprep.subr.mxu0 0.0
    %1226 = vmatpush1.msra.mxu0 0.0
    %1227 = vmatprep.subr.mxu0 0.0
    %1228 = vmatpush1.msra.mxu0 0.0
    %1229 = vmatprep.subr.mxu0 0.0
    %1230 = vmatpush1.msra.mxu0 0.0
    %1231 = vmatprep.subr.mxu0 0.0
    %1232 = vmatpush1.msra.mxu0 0.0
    %1233 = vmatprep.subr.mxu0 0.0
    %1234 = vmatpush1.msra.mxu0 0.0
    %1235 = vmatprep.subr.mxu0 0.0
    %1236 = vmatpush1.msra.mxu0 0.0
    %1237 = vmatprep.mubr.f32.mxu0 0.0
    %1238 = vmatmul.mubr.f32.gmra.mrb[0].mxu0 %v138
    %v1239 = vpop.f32.mrb[0].mxu0
    %v1240 = vadd.f32 0.0, %v1239
    %v1241 = vpop.f32.mrb[0].mxu0
    %1242 = vmatprep.mubr.f32.mxu0 0.0
    %1243 = vmatmul.mubr.f32.gmra.mrb[0].mxu0 %v141
    %v1244 = vpop.f32.mrb[0].mxu0
    %v1245 = vadd.f32 0.0, %v1244
    %v1246 = vpop.f32.mrb[0].mxu0
    %1247 = vmatprep.mubr.f32.mxu0 0.0
    %1248 = vmatmul.mubr.f32.gmra.mrb[0].mxu0 %v144
    %v1249 = vpop.f32.mrb[0].mxu0
    %v1250 = vadd.f32 0.0, %v1249
    %v1251 = vpop.f32.mrb[0].mxu0
    %1252 = vmatprep.mubr.f32.mxu0 0.0
    %1253 = vmatmul.mubr.f32.gmra.mrb[0].mxu0 %v147
    %v1254 = vpop.f32.mrb[0].mxu0
    %v1255 = vadd.f32 0.0, %v1254
    %v1256 = vpop.f32.mrb[0].mxu0
    %1257 = vmatprep.mubr.f32.mxu0 0.0
    %1258 = vmatmul.mubr.f32.gmra.mrb[0].mxu0 %v150
    %v1259 = vpop.f32.mrb[0].mxu0
    %v1260 = vadd.f32 0.0, %v1259
    %v1261 = vpop.f32.mrb[0].mxu0
    %1262 = vmatprep.mubr.f32.mxu0 0.0
    %1263 = vmatmul.mubr.f32.gmra.mrb[0].mxu0 %v153
    %v1264 = vpop.f32.mrb[0].mxu0
    %v1265 = vadd.f32 0.0, %v1264
    %v1266 = vpop.f32.mrb[0].mxu0
    %1267 = vmatprep.mubr.f32.mxu0 0.0
    %1268 = vmatmul.mubr.f32.gmra.mrb[0].mxu0 %v156
    %v1269 = vpop.f32.mrb[0].mxu0
    %v1270 = vadd.f32 0.0, %v1269
    %v1271 = vpop.f32.mrb[0].mxu0
    %1272 = vmatprep.mubr.f32.mxu0 0.0
    %1273 = vmatmul.mubr.f32.gmra.mrb[0].mxu0 %v159
    %v1274 = vpop.f32.mrb[0].mxu0
    %v1275 = vadd.f32 0.0, %v1274
    %v1276 = vpop.f32.mrb[0].mxu0
    %1277 = vdwg.mxu0
    %v1278 = vadd.f32 %v1036, %v1127
    %v1279 = vadd.f32 %v1037, %v1129
    %v1280 = vadd.f32 %v1038, %v1240
    %v1281 = vadd.f32 %v1039, %v1133
    %v1282 = vadd.f32 %v1040, %v1135
    %v1283 = vadd.f32 %v1041, %v1245
    %v1284 = vadd.f32 %v1042, %v1139
    %v1285 = vadd.f32 %v1043, %v1141
    %v1286 = vadd.f32 %v1044, %v1250
    %v1287 = vadd.f32 %v1045, %v1145
    %v1288 = vadd.f32 %v1046, %v1147
    %v1289 = vadd.f32 %v1047, %v1255
    %v1290 = vadd.f32 %v1048, %v1151
    %v1291 = vadd.f32 %v1049, %v1153
    %v1292 = vadd.f32 %v1050, %v1260
    %v1293 = vadd.f32 %v1051, %v1157
    %v1294 = vadd.f32 %v1052, %v1159
    %v1295 = vadd.f32 %v1053, %v1265
    %v1296 = vadd.f32 %v1054, %v1163
    %v1297 = vadd.f32 %v1055, %v1165
    %v1298 = vadd.f32 %v1056, %v1270
    %v1299 = vadd.f32 %v1057, %v1169
    %v1300 = vadd.f32 %v1058, %v1171
    %v1301 = vadd.f32 %v1059, %v1275
    %v1302 = vadd.f32 %v1278, %v300
    %v1303 = vadd.f32 %v1279, %v300
    %v1304 = vadd.f32 %v1280, %v300
    %v1305 = vadd.f32 %v1281, %v304
    %v1306 = vadd.f32 %v1282, %v304
    %v1307 = vadd.f32 %v1283, %v304
    %v1308 = vadd.f32 %v1284, %v308
    %v1309 = vadd.f32 %v1285, %v308
    %v1310 = vadd.f32 %v1286, %v308
    %v1311 = vadd.f32 %v1287, %v312
    %v1312 = vadd.f32 %v1288, %v312
    %v1313 = vadd.f32 %v1289, %v312
    %v1314 = vadd.f32 %v1290, %v316
    %v1315 = vadd.f32 %v1291, %v316
    %v1316 = vadd.f32 %v1292, %v316
    %v1317 = vadd.f32 %v1293, %v320
    %v1318 = vadd.f32 %v1294, %v320
    %v1319 = vadd.f32 %v1295, %v320
    %v1320 = vadd.f32 %v1296, %v324
    %v1321 = vadd.f32 %v1297, %v324
    %v1322 = vadd.f32 %v1298, %v324
    %v1323 = vadd.f32 %v1299, %v328
    %v1324 = vadd.f32 %v1300, %v328
    %v1325 = vadd.f32 %v1301, %v328
    %v1326 = vxor.u32 %v1302, 2147483648
    %v1327 = vxor.u32 %v1303, 2147483648
    %v1328 = vxor.u32 %v1304, 2147483648
    %v1329 = vxor.u32 %v1305, 2147483648
    %v1330 = vxor.u32 %v1306, 2147483648
    %v1331 = vxor.u32 %v1307, 2147483648
    %v1332 = vmul.f32 %v1326, 1.442695
    %v1333 = vpow.pop %v1332
    %v1334 = vmul.f32 %v1327, 1.442695
    %v1335 = vpow.pop %v1334
    %v1336 = vmul.f32 %v1328, 1.442695
    %v1337 = vpow.pop %v1336
    %v1338 = vmul.f32 %v1329, 1.442695
    %v1339 = vpow.pop %v1338
    %v1340 = vmul.f32 %v1330, 1.442695
    %v1341 = vpow.pop %v1340
    %v1342 = vmul.f32 %v1331, 1.442695
    %v1343 = vpow.pop %v1342
    %v1344 = vadd.f32 %v1333, 1.0
    %v1345 = vadd.f32 %v1335, 1.0
    %v1346 = vadd.f32 %v1337, 1.0
    %v1347 = vadd.f32 %v1339, 1.0
    %v1348 = vadd.f32 %v1341, 1.0
    %v1349 = vadd.f32 %v1343, 1.0
    %v1350 = vrcp.pop %v1344
    %v1351 = vmul.f32 1.0, %v1350
    %v1352 = vrcp.pop %v1345
    %v1353 = vmul.f32 1.0, %v1352
    %v1354 = vrcp.pop %v1346
    %v1355 = vmul.f32 1.0, %v1354
    %v1356 = vrcp.pop %v1347
    %v1357 = vmul.f32 1.0, %v1356
    %v1358 = vrcp.pop %v1348
    %v1359 = vmul.f32 1.0, %v1358
    %v1360 = vrcp.pop %v1349
    %v1361 = vmul.f32 1.0, %v1360
    %v1362 = vxor.u32 %v1308, 2147483648
    %v1363 = vxor.u32 %v1309, 2147483648
    %v1364 = vxor.u32 %v1310, 2147483648
    %v1365 = vxor.u32 %v1311, 2147483648
    %v1366 = vxor.u32 %v1312, 2147483648
    %v1367 = vxor.u32 %v1313, 2147483648
    %v1368 = vmul.f32 %v1362, 1.442695
    %v1369 = vpow.pop %v1368
    %v1370 = vmul.f32 %v1363, 1.442695
    %v1371 = vpow.pop %v1370
    %v1372 = vmul.f32 %v1364, 1.442695
    %v1373 = vpow.pop %v1372
    %v1374 = vmul.f32 %v1365, 1.442695
    %v1375 = vpow.pop %v1374
    %v1376 = vmul.f32 %v1366, 1.442695
    %v1377 = vpow.pop %v1376
    %v1378 = vmul.f32 %v1367, 1.442695
    %v1379 = vpow.pop %v1378
    %v1380 = vadd.f32 %v1369, 1.0
    %v1381 = vadd.f32 %v1371, 1.0
    %v1382 = vadd.f32 %v1373, 1.0
    %v1383 = vadd.f32 %v1375, 1.0
    %v1384 = vadd.f32 %v1377, 1.0
    %v1385 = vadd.f32 %v1379, 1.0
    %v1386 = vrcp.pop %v1380
    %v1387 = vmul.f32 1.0, %v1386
    %v1388 = vrcp.pop %v1381
    %v1389 = vmul.f32 1.0, %v1388
    %v1390 = vrcp.pop %v1382
    %v1391 = vmul.f32 1.0, %v1390
    %v1392 = vrcp.pop %v1383
    %v1393 = vmul.f32 1.0, %v1392
    %v1394 = vrcp.pop %v1384
    %v1395 = vmul.f32 1.0, %v1394
    %v1396 = vrcp.pop %v1385
    %v1397 = vmul.f32 1.0, %v1396
    %v1398 = vtanh.pop %v1314
    %v1399 = vtanh.pop %v1315
    %v1400 = vtanh.pop %v1316
    %v1401 = vtanh.pop %v1317
    %v1402 = vtanh.pop %v1318
    %v1403 = vtanh.pop %v1319
    %v1404 = vxor.u32 %v1320, 2147483648
    %v1405 = vxor.u32 %v1321, 2147483648
    %v1406 = vxor.u32 %v1322, 2147483648
    %v1407 = vxor.u32 %v1323, 2147483648
    %v1408 = vxor.u32 %v1324, 2147483648
    %v1409 = vxor.u32 %v1325, 2147483648
    %v1410 = vmul.f32 %v1404, 1.442695
    %v1411 = vpow.pop %v1410
    %v1412 = vmul.f32 %v1405, 1.442695
    %v1413 = vpow.pop %v1412
    %v1414 = vmul.f32 %v1406, 1.442695
    %v1415 = vpow.pop %v1414
    %v1416 = vmul.f32 %v1407, 1.442695
    %v1417 = vpow.pop %v1416
    %v1418 = vmul.f32 %v1408, 1.442695
    %v1419 = vpow.pop %v1418
    %v1420 = vmul.f32 %v1409, 1.442695
    %v1421 = vpow.pop %v1420
    %v1422 = vadd.f32 %v1411, 1.0
    %v1423 = vadd.f32 %v1413, 1.0
    %v1424 = vadd.f32 %v1415, 1.0
    %v1425 = vadd.f32 %v1417, 1.0
    %v1426 = vadd.f32 %v1419, 1.0
    %v1427 = vadd.f32 %v1421, 1.0
    %v1428 = vrcp.pop %v1422
    %v1429 = vmul.f32 1.0, %v1428
    %v1430 = vrcp.pop %v1423
    %v1431 = vmul.f32 1.0, %v1430
    %v1432 = vrcp.pop %v1424
    %v1433 = vmul.f32 1.0, %v1432
    %v1434 = vrcp.pop %v1425
    %v1435 = vmul.f32 1.0, %v1434
    %v1436 = vrcp.pop %v1426
    %v1437 = vmul.f32 1.0, %v1436
    %v1438 = vrcp.pop %v1427
    %v1439 = vmul.f32 1.0, %v1438
    %v1440 = vmul.f32 %v1387, %v970
    %v1441 = vmul.f32 %v1389, %v971
    %v1442 = vmul.f32 %v1391, %v972
    %v1443 = vmul.f32 %v1393, %v973
    %v1444 = vmul.f32 %v1395, %v974
    %v1445 = vmul.f32 %v1397, %v975
    %v1446 = vmul.f32 %v1351, %v1398
    %v1447 = vmul.f32 %v1353, %v1399
    %v1448 = vmul.f32 %v1355, %v1400
    %v1449 = vmul.f32 %v1357, %v1401
    %v1450 = vmul.f32 %v1359, %v1402
    %v1451 = vmul.f32 %v1361, %v1403
    %v1452 = vadd.f32 %v1440, %v1446
    %v1453 = vadd.f32 %v1441, %v1447
    %v1454 = vadd.f32 %v1442, %v1448
    %v1455 = vadd.f32 %v1443, %v1449
    %v1456 = vadd.f32 %v1444, %v1450
    %v1457 = vadd.f32 %v1445, %v1451
    %v1458 = vtanh.pop %v1452
    %v1459 = vtanh.pop %v1453
    %v1460 = vtanh.pop %v1454
    %v1461 = vtanh.pop %v1455
    %v1462 = vtanh.pop %v1456
    %v1463 = vtanh.pop %v1457
    %v1464 = vmul.f32 %v1429, %v1458
    %v1465 = vmul.f32 %v1431, %v1459
    %v1466 = vmul.f32 %v1433, %v1460
    %v1467 = vmul.f32 %v1435, %v1461
    %v1468 = vmul.f32 %v1437, %v1462
    %v1469 = vmul.f32 %v1439, %v1463
    %v1470 = vmul.f32 %v500, %v1464
    %v1471 = vmul.f32 %v500, %v1465
    %v1472 = vmul.f32 %v500, %v1466
    %v1473 = vmul.f32 %v504, %v1467
    %v1474 = vmul.f32 %v504, %v1468
    %v1475 = vmul.f32 %v504, %v1469
    %v1476 = vadd.f32 %v1470, %v1473
    %v1477 = vrot.slane %v1476, 4
    %v1478 = vadd.f32 %v1476, %v1477
    %v1479 = vrot.slane %v1478, 2
    %v1480 = vadd.f32 %v1478, %v1479
    %v1481 = vrot.slane %v1480, 1
    %v1482 = vadd.f32 %v1480, %v1481
    %v1483 = vadd.f32 %v1471, %v1474
    %v1484 = vrot.slane %v1483, 4
    %v1485 = vadd.f32 %v1483, %v1484
    %v1486 = vrot.slane %v1485, 2
    %v1487 = vadd.f32 %v1485, %v1486
    %v1488 = vrot.slane %v1487, 1
    %v1489 = vadd.f32 %v1487, %v1488
    %v1490 = vadd.f32 %v1472, %v1475
    %v1491 = vrot.slane %v1490, 4
    %v1492 = vadd.f32 %v1490, %v1491
    %v1493 = vrot.slane %v1492, 2
    %v1494 = vadd.f32 %v1492, %v1493
    %v1495 = vrot.slane %v1494, 1
    %v1496 = vadd.f32 %v1494, %v1495
    %v1497 = vtanh.pop %v1482
    %v1498 = vtanh.pop %v1489
    %v1499 = vtanh.pop %v1496
    %s1500 = scalar_lea.vmem %s0, 3
    %v1501 = vld [vmem:[%s1500] ss:$8 sm:$0x7]
    %v1503 = vlaneseq
    %v1504 = vshrl.u32 %v1503, 7
    %v1505 = vsub.s32 0, %v1504
    %v1506 = vrot.slane %v1501, %v1505
    %v1507 = vlaneseq
    %v1508 = vshrl.u32 %v1507, 7
    %v1509 = vsub.s32 1, %v1508
    %v1510 = vrot.slane %v1501, %v1509
    %v1511 = vlaneseq
    %v1512 = vshrl.u32 %v1511, 7
    %v1513 = vsub.s32 2, %v1512
    %v1514 = vrot.slane %v1501, %v1513
    %v1518 = vmul.f32 %v59, %v1506
    %v1519 = vmul.f32 %v59, %v1510
    %v1520 = vmul.f32 %v59, %v1514
    %v1521 = vmul.f32 %v64, %v1506
    %v1522 = vmul.f32 %v64, %v1510
    %v1523 = vmul.f32 %v64, %v1514
    %v1524 = vmul.f32 %v69, %v1506
    %v1525 = vmul.f32 %v69, %v1510
    %v1526 = vmul.f32 %v69, %v1514
    %v1527 = vmul.f32 %v74, %v1506
    %v1528 = vmul.f32 %v74, %v1510
    %v1529 = vmul.f32 %v74, %v1514
    %v1530 = vmul.f32 %v79, %v1506
    %v1531 = vmul.f32 %v79, %v1510
    %v1532 = vmul.f32 %v79, %v1514
    %v1533 = vmul.f32 %v84, %v1506
    %v1534 = vmul.f32 %v84, %v1510
    %v1535 = vmul.f32 %v84, %v1514
    %v1536 = vmul.f32 %v89, %v1506
    %v1537 = vmul.f32 %v89, %v1510
    %v1538 = vmul.f32 %v89, %v1514
    %v1539 = vmul.f32 %v94, %v1506
    %v1540 = vmul.f32 %v94, %v1510
    %v1541 = vmul.f32 %v94, %v1514
    %1542 = vmatprep.subr.mxu0 %v1465
    %1543 = vmatpush1.msra.mxu0 %v1464
    %1544 = vmatprep.subr.mxu0 %v1468
    %1545 = vmatpush1.msra.mxu0 %v1467
    %1546 = vmatprep.subr.mxu0 0.0
    %1547 = vmatpush1.msra.mxu0 0.0
    %1548 = vmatprep.subr.mxu0 0.0
    %1549 = vmatpush1.msra.mxu0 0.0
    %1550 = vmatprep.subr.mxu0 0.0
    %1551 = vmatpush1.msra.mxu0 0.0
    %1552 = vmatprep.subr.mxu0 0.0
    %1553 = vmatpush1.msra.mxu0 0.0
    %1554 = vmatprep.subr.mxu0 0.0
    %1555 = vmatpush1.msra.mxu0 0.0
    %1556 = vmatprep.subr.mxu0 0.0
    %1557 = vmatpush1.msra.mxu0 0.0
    %1558 = vmatprep.subr.mxu0 0.0
    %1559 = vmatpush1.msra.mxu0 0.0
    %1560 = vmatprep.subr.mxu0 0.0
    %1561 = vmatpush1.msra.mxu0 0.0
    %1562 = vmatprep.subr.mxu0 0.0
    %1563 = vmatpush1.msra.mxu0 0.0
    %1564 = vmatprep.subr.mxu0 0.0
    %1565 = vmatpush1.msra.mxu0 0.0
    %1566 = vmatprep.subr.mxu0 0.0
    %1567 = vmatpush1.msra.mxu0 0.0
    %1568 = vmatprep.subr.mxu0 0.0
    %1569 = vmatpush1.msra.mxu0 0.0
    %1570 = vmatprep.subr.mxu0 0.0
    %1571 = vmatpush1.msra.mxu0 0.0
    %1572 = vmatprep.subr.mxu0 0.0
    %1573 = vmatpush1.msra.mxu0 0.0
    %1574 = vmatprep.subr.mxu0 0.0
    %1575 = vmatpush1.msra.mxu0 0.0
    %1576 = vmatprep.subr.mxu0 0.0
    %1577 = vmatpush1.msra.mxu0 0.0
    %1578 = vmatprep.subr.mxu0 0.0
    %1579 = vmatpush1.msra.mxu0 0.0
    %1580 = vmatprep.subr.mxu0 0.0
    %1581 = vmatpush1.msra.mxu0 0.0
    %1582 = vmatprep.subr.mxu0 0.0
    %1583 = vmatpush1.msra.mxu0 0.0
    %1584 = vmatprep.subr.mxu0 0.0
    %1585 = vmatpush1.msra.mxu0 0.0
    %1586 = vmatprep.subr.mxu0 0.0
    %1587 = vmatpush1.msra.mxu0 0.0
    %1588 = vmatprep.subr.mxu0 0.0
    %1589 = vmatpush1.msra.mxu0 0.0
    %1590 = vmatprep.subr.mxu0 0.0
    %1591 = vmatpush1.msra.mxu0 0.0
    %1592 = vmatprep.subr.mxu0 0.0
    %1593 = vmatpush1.msra.mxu0 0.0
    %1594 = vmatprep.subr.mxu0 0.0
    %1595 = vmatpush1.msra.mxu0 0.0
    %1596 = vmatprep.subr.mxu0 0.0
    %1597 = vmatpush1.msra.mxu0 0.0
    %1598 = vmatprep.subr.mxu0 0.0
    %1599 = vmatpush1.msra.mxu0 0.0
    %1600 = vmatprep.subr.mxu0 0.0
    %1601 = vmatpush1.msra.mxu0 0.0
    %1602 = vmatprep.subr.mxu0 0.0
    %1603 = vmatpush1.msra.mxu0 0.0
    %1604 = vmatprep.subr.mxu0 0.0
    %1605 = vmatpush1.msra.mxu0 0.0
    %1606 = vmatprep.mubr.f32.mxu0 0.0
    %1607 = vmatmul.mubr.f32.gmra.mrb[0].mxu0 %v138
    %v1608 = vpop.f32.mrb[0].mxu0
    %v1609 = vadd.f32 0.0, %v1608
    %v1610 = vpop.f32.mrb[0].mxu0
    %v1611 = vadd.f32 0.0, %v1610
    %1612 = vmatprep.mubr.f32.mxu0 0.0
    %1613 = vmatmul.mubr.f32.gmra.mrb[0].mxu0 %v141
    %v1614 = vpop.f32.mrb[0].mxu0
    %v1615 = vadd.f32 0.0, %v1614
    %v1616 = vpop.f32.mrb[0].mxu0
    %v1617 = vadd.f32 0.0, %v1616
    %1618 = vmatprep.mubr.f32.mxu0 0.0
    %1619 = vmatmul.mubr.f32.gmra.mrb[0].mxu0 %v144
    %v1620 = vpop.f32.mrb[0].mxu0
    %v1621 = vadd.f32 0.0, %v1620
    %v1622 = vpop.f32.mrb[0].mxu0
    %v1623 = vadd.f32 0.0, %v1622
    %1624 = vmatprep.mubr.f32.mxu0 0.0
    %1625 = vmatmul.mubr.f32.gmra.mrb[0].mxu0 %v147
    %v1626 = vpop.f32.mrb[0].mxu0
    %v1627 = vadd.f32 0.0, %v1626
    %v1628 = vpop.f32.mrb[0].mxu0
    %v1629 = vadd.f32 0.0, %v1628
    %1630 = vmatprep.mubr.f32.mxu0 0.0
    %1631 = vmatmul.mubr.f32.gmra.mrb[0].mxu0 %v150
    %v1632 = vpop.f32.mrb[0].mxu0
    %v1633 = vadd.f32 0.0, %v1632
    %v1634 = vpop.f32.mrb[0].mxu0
    %v1635 = vadd.f32 0.0, %v1634
    %1636 = vmatprep.mubr.f32.mxu0 0.0
    %1637 = vmatmul.mubr.f32.gmra.mrb[0].mxu0 %v153
    %v1638 = vpop.f32.mrb[0].mxu0
    %v1639 = vadd.f32 0.0, %v1638
    %v1640 = vpop.f32.mrb[0].mxu0
    %v1641 = vadd.f32 0.0, %v1640
    %1642 = vmatprep.mubr.f32.mxu0 0.0
    %1643 = vmatmul.mubr.f32.gmra.mrb[0].mxu0 %v156
    %v1644 = vpop.f32.mrb[0].mxu0
    %v1645 = vadd.f32 0.0, %v1644
    %v1646 = vpop.f32.mrb[0].mxu0
    %v1647 = vadd.f32 0.0, %v1646
    %1648 = vmatprep.mubr.f32.mxu0 0.0
    %1649 = vmatmul.mubr.f32.gmra.mrb[0].mxu0 %v159
    %v1650 = vpop.f32.mrb[0].mxu0
    %v1651 = vadd.f32 0.0, %v1650
    %v1652 = vpop.f32.mrb[0].mxu0
    %v1653 = vadd.f32 0.0, %v1652
    %1654 = vdwg.mxu0
    %1655 = vmatprep.subr.mxu0 0.0
    %1656 = vmatpush1.msra.mxu0 %v1466
    %1657 = vmatprep.subr.mxu0 0.0
    %1658 = vmatpush1.msra.mxu0 %v1469
    %1659 = vmatprep.subr.mxu0 0.0
    %1660 = vmatpush1.msra.mxu0 0.0
    %1661 = vmatprep.subr.mxu0 0.0
    %1662 = vmatpush1.msra.mxu0 0.0
    %1663 = vmatprep.subr.mxu0 0.0
    %1664 = vmatpush1.msra.mxu0 0.0
    %1665 = vmatprep.subr.mxu0 0.0
    %1666 = vmatpush1.msra.mxu0 0.0
    %1667 = vmatprep.subr.mxu0 0.0
    %1668 = vmatpush1.msra.mxu0 0.0
    %1669 = vmatprep.subr.mxu0 0.0
    %1670 = vmatpush1.msra.mxu0 0.0
    %1671 = vmatprep.subr.mxu0 0.0
    %1672 = vmatpush1.msra.mxu0 0.0
    %1673 = vmatprep.subr.mxu0 0.0
    %1674 = vmatpush1.msra.mxu0 0.0
    %1675 = vmatprep.subr.mxu0 0.0
    %1676 = vmatpush1.msra.mxu0 0.0
    %1677 = vmatprep.subr.mxu0 0.0
    %1678 = vmatpush1.msra.mxu0 0.0
    %1679 = vmatprep.subr.mxu0 0.0
    %1680 = vmatpush1.msra.mxu0 0.0
    %1681 = vmatprep.subr.mxu0 0.0
    %1682 = vmatpush1.msra.mxu0 0.0
    %1683 = vmatprep.subr.mxu0 0.0
    %1684 = vmatpush1.msra.mxu0 0.0
    %1685 = vmatprep.subr.mxu0 0.0
    %1686 = vmatpush1.msra.mxu0 0.0
    %1687 = vmatprep.subr.mxu0 0.0
    %1688 = vmatpush1.msra.mxu0 0.0
    %1689 = vmatprep.subr.mxu0 0.0
    %1690 = vmatpush1.msra.mxu0 0.0
    %1691 = vmatprep.subr.mxu0 0.0
    %1692 = vmatpush1.msra.mxu0 0.0
    %1693 = vmatprep.subr.mxu0 0.0
    %1694 = vmatpush1.msra.mxu0 0.0
    %1695 = vmatprep.subr.mxu0 0.0
    %1696 = vmatpush1.msra.mxu0 0.0
    %1697 = vmatprep.subr.mxu0 0.0
    %1698 = vmatpush1.msra.mxu0 0.0
    %1699 = vmatprep.subr.mxu0 0.0
    %1700 = vmatpush1.msra.mxu0 0.0
    %1701 = vmatprep.subr.mxu0 0.0
    %1702 = vmatpush1.msra.mxu0 0.0
    %1703 = vmatprep.subr.mxu0 0.0
    %1704 = vmatpush1.msra.mxu0 0.0
    %1705 = vmatprep.subr.mxu0 0.0
    %1706 = vmatpush1.msra.mxu0 0.0
    %1707 = vmatprep.subr.mxu0 0.0
    %1708 = vmatpush1.msra.mxu0 0.0
    %1709 = vmatprep.subr.mxu0 0.0
    %1710 = vmatpush1.msra.mxu0 0.0
    %1711 = vmatprep.subr.mxu0 0.0
    %1712 = vmatpush1.msra.mxu0 0.0
    %1713 = vmatprep.subr.mxu0 0.0
    %1714 = vmatpush1.msra.mxu0 0.0
    %1715 = vmatprep.subr.mxu0 0.0
    %1716 = vmatpush1.msra.mxu0 0.0
    %1717 = vmatprep.subr.mxu0 0.0
    %1718 = vmatpush1.msra.mxu0 0.0
    %1719 = vmatprep.mubr.f32.mxu0 0.0
    %1720 = vmatmul.mubr.f32.gmra.mrb[0].mxu0 %v138
    %v1721 = vpop.f32.mrb[0].mxu0
    %v1722 = vadd.f32 0.0, %v1721
    %v1723 = vpop.f32.mrb[0].mxu0
    %1724 = vmatprep.mubr.f32.mxu0 0.0
    %1725 = vmatmul.mubr.f32.gmra.mrb[0].mxu0 %v141
    %v1726 = vpop.f32.mrb[0].mxu0
    %v1727 = vadd.f32 0.0, %v1726
    %v1728 = vpop.f32.mrb[0].mxu0
    %1729 = vmatprep.mubr.f32.mxu0 0.0
    %1730 = vmatmul.mubr.f32.gmra.mrb[0].mxu0 %v144
    %v1731 = vpop.f32.mrb[0].mxu0
    %v1732 = vadd.f32 0.0, %v1731
    %v1733 = vpop.f32.mrb[0].mxu0
    %1734 = vmatprep.mubr.f32.mxu0 0.0
    %1735 = vmatmul.mubr.f32.gmra.mrb[0].mxu0 %v147
    %v1736 = vpop.f32.mrb[0].mxu0
    %v1737 = vadd.f32 0.0, %v1736
    %v1738 = vpop.f32.mrb[0].mxu0
    %1739 = vmatprep.mubr.f32.mxu0 0.0
    %1740 = vmatmul.mubr.f32.gmra.mrb[0].mxu0 %v150
    %v1741 = vpop.f32.mrb[0].mxu0
    %v1742 = vadd.f32 0.0, %v1741
    %v1743 = vpop.f32.mrb[0].mxu0
    %1744 = vmatprep.mubr.f32.mxu0 0.0
    %1745 = vmatmul.mubr.f32.gmra.mrb[0].mxu0 %v153
    %v1746 = vpop.f32.mrb[0].mxu0
    %v1747 = vadd.f32 0.0, %v1746
    %v1748 = vpop.f32.mrb[0].mxu0
    %1749 = vmatprep.mubr.f32.mxu0 0.0
    %1750 = vmatmul.mubr.f32.gmra.mrb[0].mxu0 %v156
    %v1751 = vpop.f32.mrb[0].mxu0
    %v1752 = vadd.f32 0.0, %v1751
    %v1753 = vpop.f32.mrb[0].mxu0
    %1754 = vmatprep.mubr.f32.mxu0 0.0
    %1755 = vmatmul.mubr.f32.gmra.mrb[0].mxu0 %v159
    %v1756 = vpop.f32.mrb[0].mxu0
    %v1757 = vadd.f32 0.0, %v1756
    %v1758 = vpop.f32.mrb[0].mxu0
    %1759 = vdwg.mxu0
    %v1760 = vadd.f32 %v1518, %v1609
    %v1761 = vadd.f32 %v1519, %v1611
    %v1762 = vadd.f32 %v1520, %v1722
    %v1763 = vadd.f32 %v1521, %v1615
    %v1764 = vadd.f32 %v1522, %v1617
    %v1765 = vadd.f32 %v1523, %v1727
    %v1766 = vadd.f32 %v1524, %v1621
    %v1767 = vadd.f32 %v1525, %v1623
    %v1768 = vadd.f32 %v1526, %v1732
    %v1769 = vadd.f32 %v1527, %v1627
    %v1770 = vadd.f32 %v1528, %v1629
    %v1771 = vadd.f32 %v1529, %v1737
    %v1772 = vadd.f32 %v1530, %v1633
    %v1773 = vadd.f32 %v1531, %v1635
    %v1774 = vadd.f32 %v1532, %v1742
    %v1775 = vadd.f32 %v1533, %v1639
    %v1776 = vadd.f32 %v1534, %v1641
    %v1777 = vadd.f32 %v1535, %v1747
    %v1778 = vadd.f32 %v1536, %v1645
    %v1779 = vadd.f32 %v1537, %v1647
    %v1780 = vadd.f32 %v1538, %v1752
    %v1781 = vadd.f32 %v1539, %v1651
    %v1782 = vadd.f32 %v1540, %v1653
    %v1783 = vadd.f32 %v1541, %v1757
    %v1784 = vadd.f32 %v1760, %v300
    %v1785 = vadd.f32 %v1761, %v300
    %v1786 = vadd.f32 %v1762, %v300
    %v1787 = vadd.f32 %v1763, %v304
    %v1788 = vadd.f32 %v1764, %v304
    %v1789 = vadd.f32 %v1765, %v304
    %v1790 = vadd.f32 %v1766, %v308
    %v1791 = vadd.f32 %v1767, %v308
    %v1792 = vadd.f32 %v1768, %v308
    %v1793 = vadd.f32 %v1769, %v312
    %v1794 = vadd.f32 %v1770, %v312
    %v1795 = vadd.f32 %v1771, %v312
    %v1796 = vadd.f32 %v1772, %v316
    %v1797 = vadd.f32 %v1773, %v316
    %v1798 = vadd.f32 %v1774, %v316
    %v1799 = vadd.f32 %v1775, %v320
    %v1800 = vadd.f32 %v1776, %v320
    %v1801 = vadd.f32 %v1777, %v320
    %v1802 = vadd.f32 %v1778, %v324
    %v1803 = vadd.f32 %v1779, %v324
    %v1804 = vadd.f32 %v1780, %v324
    %v1805 = vadd.f32 %v1781, %v328
    %v1806 = vadd.f32 %v1782, %v328
    %v1807 = vadd.f32 %v1783, %v328
    %v1808 = vxor.u32 %v1784, 2147483648
    %v1809 = vxor.u32 %v1785, 2147483648
    %v1810 = vxor.u32 %v1786, 2147483648
    %v1811 = vxor.u32 %v1787, 2147483648
    %v1812 = vxor.u32 %v1788, 2147483648
    %v1813 = vxor.u32 %v1789, 2147483648
    %v1814 = vmul.f32 %v1808, 1.442695
    %v1815 = vpow.pop %v1814
    %v1816 = vmul.f32 %v1809, 1.442695
    %v1817 = vpow.pop %v1816
    %v1818 = vmul.f32 %v1810, 1.442695
    %v1819 = vpow.pop %v1818
    %v1820 = vmul.f32 %v1811, 1.442695
    %v1821 = vpow.pop %v1820
    %v1822 = vmul.f32 %v1812, 1.442695
    %v1823 = vpow.pop %v1822
    %v1824 = vmul.f32 %v1813, 1.442695
    %v1825 = vpow.pop %v1824
    %v1826 = vadd.f32 %v1815, 1.0
    %v1827 = vadd.f32 %v1817, 1.0
    %v1828 = vadd.f32 %v1819, 1.0
    %v1829 = vadd.f32 %v1821, 1.0
    %v1830 = vadd.f32 %v1823, 1.0
    %v1831 = vadd.f32 %v1825, 1.0
    %v1832 = vrcp.pop %v1826
    %v1833 = vmul.f32 1.0, %v1832
    %v1834 = vrcp.pop %v1827
    %v1835 = vmul.f32 1.0, %v1834
    %v1836 = vrcp.pop %v1828
    %v1837 = vmul.f32 1.0, %v1836
    %v1838 = vrcp.pop %v1829
    %v1839 = vmul.f32 1.0, %v1838
    %v1840 = vrcp.pop %v1830
    %v1841 = vmul.f32 1.0, %v1840
    %v1842 = vrcp.pop %v1831
    %v1843 = vmul.f32 1.0, %v1842
    %v1844 = vxor.u32 %v1790, 2147483648
    %v1845 = vxor.u32 %v1791, 2147483648
    %v1846 = vxor.u32 %v1792, 2147483648
    %v1847 = vxor.u32 %v1793, 2147483648
    %v1848 = vxor.u32 %v1794, 2147483648
    %v1849 = vxor.u32 %v1795, 2147483648
    %v1850 = vmul.f32 %v1844, 1.442695
    %v1851 = vpow.pop %v1850
    %v1852 = vmul.f32 %v1845, 1.442695
    %v1853 = vpow.pop %v1852
    %v1854 = vmul.f32 %v1846, 1.442695
    %v1855 = vpow.pop %v1854
    %v1856 = vmul.f32 %v1847, 1.442695
    %v1857 = vpow.pop %v1856
    %v1858 = vmul.f32 %v1848, 1.442695
    %v1859 = vpow.pop %v1858
    %v1860 = vmul.f32 %v1849, 1.442695
    %v1861 = vpow.pop %v1860
    %v1862 = vadd.f32 %v1851, 1.0
    %v1863 = vadd.f32 %v1853, 1.0
    %v1864 = vadd.f32 %v1855, 1.0
    %v1865 = vadd.f32 %v1857, 1.0
    %v1866 = vadd.f32 %v1859, 1.0
    %v1867 = vadd.f32 %v1861, 1.0
    %v1868 = vrcp.pop %v1862
    %v1869 = vmul.f32 1.0, %v1868
    %v1870 = vrcp.pop %v1863
    %v1871 = vmul.f32 1.0, %v1870
    %v1872 = vrcp.pop %v1864
    %v1873 = vmul.f32 1.0, %v1872
    %v1874 = vrcp.pop %v1865
    %v1875 = vmul.f32 1.0, %v1874
    %v1876 = vrcp.pop %v1866
    %v1877 = vmul.f32 1.0, %v1876
    %v1878 = vrcp.pop %v1867
    %v1879 = vmul.f32 1.0, %v1878
    %v1880 = vtanh.pop %v1796
    %v1881 = vtanh.pop %v1797
    %v1882 = vtanh.pop %v1798
    %v1883 = vtanh.pop %v1799
    %v1884 = vtanh.pop %v1800
    %v1885 = vtanh.pop %v1801
    %v1886 = vxor.u32 %v1802, 2147483648
    %v1887 = vxor.u32 %v1803, 2147483648
    %v1888 = vxor.u32 %v1804, 2147483648
    %v1889 = vxor.u32 %v1805, 2147483648
    %v1890 = vxor.u32 %v1806, 2147483648
    %v1891 = vxor.u32 %v1807, 2147483648
    %v1892 = vmul.f32 %v1886, 1.442695
    %v1893 = vpow.pop %v1892
    %v1894 = vmul.f32 %v1887, 1.442695
    %v1895 = vpow.pop %v1894
    %v1896 = vmul.f32 %v1888, 1.442695
    %v1897 = vpow.pop %v1896
    %v1898 = vmul.f32 %v1889, 1.442695
    %v1899 = vpow.pop %v1898
    %v1900 = vmul.f32 %v1890, 1.442695
    %v1901 = vpow.pop %v1900
    %v1902 = vmul.f32 %v1891, 1.442695
    %v1903 = vpow.pop %v1902
    %v1904 = vadd.f32 %v1893, 1.0
    %v1905 = vadd.f32 %v1895, 1.0
    %v1906 = vadd.f32 %v1897, 1.0
    %v1907 = vadd.f32 %v1899, 1.0
    %v1908 = vadd.f32 %v1901, 1.0
    %v1909 = vadd.f32 %v1903, 1.0
    %v1910 = vrcp.pop %v1904
    %v1911 = vmul.f32 1.0, %v1910
    %v1912 = vrcp.pop %v1905
    %v1913 = vmul.f32 1.0, %v1912
    %v1914 = vrcp.pop %v1906
    %v1915 = vmul.f32 1.0, %v1914
    %v1916 = vrcp.pop %v1907
    %v1917 = vmul.f32 1.0, %v1916
    %v1918 = vrcp.pop %v1908
    %v1919 = vmul.f32 1.0, %v1918
    %v1920 = vrcp.pop %v1909
    %v1921 = vmul.f32 1.0, %v1920
    %v1922 = vmul.f32 %v1869, %v1452
    %v1923 = vmul.f32 %v1871, %v1453
    %v1924 = vmul.f32 %v1873, %v1454
    %v1925 = vmul.f32 %v1875, %v1455
    %v1926 = vmul.f32 %v1877, %v1456
    %v1927 = vmul.f32 %v1879, %v1457
    %v1928 = vmul.f32 %v1833, %v1880
    %v1929 = vmul.f32 %v1835, %v1881
    %v1930 = vmul.f32 %v1837, %v1882
    %v1931 = vmul.f32 %v1839, %v1883
    %v1932 = vmul.f32 %v1841, %v1884
    %v1933 = vmul.f32 %v1843, %v1885
    %v1934 = vadd.f32 %v1922, %v1928
    %v1935 = vadd.f32 %v1923, %v1929
    %v1936 = vadd.f32 %v1924, %v1930
    %v1937 = vadd.f32 %v1925, %v1931
    %v1938 = vadd.f32 %v1926, %v1932
    %v1939 = vadd.f32 %v1927, %v1933
    %v1940 = vtanh.pop %v1934
    %v1941 = vtanh.pop %v1935
    %v1942 = vtanh.pop %v1936
    %v1943 = vtanh.pop %v1937
    %v1944 = vtanh.pop %v1938
    %v1945 = vtanh.pop %v1939
    %v1946 = vmul.f32 %v1911, %v1940
    %v1947 = vmul.f32 %v1913, %v1941
    %v1948 = vmul.f32 %v1915, %v1942
    %v1949 = vmul.f32 %v1917, %v1943
    %v1950 = vmul.f32 %v1919, %v1944
    %v1951 = vmul.f32 %v1921, %v1945
    %v1952 = vmul.f32 %v500, %v1946
    %v1953 = vmul.f32 %v500, %v1947
    %v1954 = vmul.f32 %v500, %v1948
    %v1955 = vmul.f32 %v504, %v1949
    %v1956 = vmul.f32 %v504, %v1950
    %v1957 = vmul.f32 %v504, %v1951
    %v1958 = vadd.f32 %v1952, %v1955
    %v1959 = vrot.slane %v1958, 4
    %v1960 = vadd.f32 %v1958, %v1959
    %v1961 = vrot.slane %v1960, 2
    %v1962 = vadd.f32 %v1960, %v1961
    %v1963 = vrot.slane %v1962, 1
    %v1964 = vadd.f32 %v1962, %v1963
    %v1965 = vadd.f32 %v1953, %v1956
    %v1966 = vrot.slane %v1965, 4
    %v1967 = vadd.f32 %v1965, %v1966
    %v1968 = vrot.slane %v1967, 2
    %v1969 = vadd.f32 %v1967, %v1968
    %v1970 = vrot.slane %v1969, 1
    %v1971 = vadd.f32 %v1969, %v1970
    %v1972 = vadd.f32 %v1954, %v1957
    %v1973 = vrot.slane %v1972, 4
    %v1974 = vadd.f32 %v1972, %v1973
    %v1975 = vrot.slane %v1974, 2
    %v1976 = vadd.f32 %v1974, %v1975
    %v1977 = vrot.slane %v1976, 1
    %v1978 = vadd.f32 %v1976, %v1977
    %v1979 = vtanh.pop %v1964
    %v1980 = vtanh.pop %v1971
    %v1981 = vtanh.pop %v1978
    %s1982 = scalar_lea.vmem %s0, 4
    %v1983 = vld [vmem:[%s1982] ss:$8 sm:$0x7]
    %v1985 = vlaneseq
    %v1986 = vshrl.u32 %v1985, 7
    %v1987 = vsub.s32 0, %v1986
    %v1988 = vrot.slane %v1983, %v1987
    %v1989 = vlaneseq
    %v1990 = vshrl.u32 %v1989, 7
    %v1991 = vsub.s32 1, %v1990
    %v1992 = vrot.slane %v1983, %v1991
    %v1993 = vlaneseq
    %v1994 = vshrl.u32 %v1993, 7
    %v1995 = vsub.s32 2, %v1994
    %v1996 = vrot.slane %v1983, %v1995
    %v2000 = vmul.f32 %v59, %v1988
    %v2001 = vmul.f32 %v59, %v1992
    %v2002 = vmul.f32 %v59, %v1996
    %v2003 = vmul.f32 %v64, %v1988
    %v2004 = vmul.f32 %v64, %v1992
    %v2005 = vmul.f32 %v64, %v1996
    %v2006 = vmul.f32 %v69, %v1988
    %v2007 = vmul.f32 %v69, %v1992
    %v2008 = vmul.f32 %v69, %v1996
    %v2009 = vmul.f32 %v74, %v1988
    %v2010 = vmul.f32 %v74, %v1992
    %v2011 = vmul.f32 %v74, %v1996
    %v2012 = vmul.f32 %v79, %v1988
    %v2013 = vmul.f32 %v79, %v1992
    %v2014 = vmul.f32 %v79, %v1996
    %v2015 = vmul.f32 %v84, %v1988
    %v2016 = vmul.f32 %v84, %v1992
    %v2017 = vmul.f32 %v84, %v1996
    %v2018 = vmul.f32 %v89, %v1988
    %v2019 = vmul.f32 %v89, %v1992
    %v2020 = vmul.f32 %v89, %v1996
    %v2021 = vmul.f32 %v94, %v1988
    %v2022 = vmul.f32 %v94, %v1992
    %v2023 = vmul.f32 %v94, %v1996
    %2024 = vmatprep.subr.mxu0 %v1947
    %2025 = vmatpush1.msra.mxu0 %v1946
    %2026 = vmatprep.subr.mxu0 %v1950
    %2027 = vmatpush1.msra.mxu0 %v1949
    %2028 = vmatprep.subr.mxu0 0.0
    %2029 = vmatpush1.msra.mxu0 0.0
    %2030 = vmatprep.subr.mxu0 0.0
    %2031 = vmatpush1.msra.mxu0 0.0
    %2032 = vmatprep.subr.mxu0 0.0
    %2033 = vmatpush1.msra.mxu0 0.0
    %2034 = vmatprep.subr.mxu0 0.0
    %2035 = vmatpush1.msra.mxu0 0.0
    %2036 = vmatprep.subr.mxu0 0.0
    %2037 = vmatpush1.msra.mxu0 0.0
    %2038 = vmatprep.subr.mxu0 0.0
    %2039 = vmatpush1.msra.mxu0 0.0
    %2040 = vmatprep.subr.mxu0 0.0
    %2041 = vmatpush1.msra.mxu0 0.0
    %2042 = vmatprep.subr.mxu0 0.0
    %2043 = vmatpush1.msra.mxu0 0.0
    %2044 = vmatprep.subr.mxu0 0.0
    %2045 = vmatpush1.msra.mxu0 0.0
    %2046 = vmatprep.subr.mxu0 0.0
    %2047 = vmatpush1.msra.mxu0 0.0
    %2048 = vmatprep.subr.mxu0 0.0
    %2049 = vmatpush1.msra.mxu0 0.0
    %2050 = vmatprep.subr.mxu0 0.0
    %2051 = vmatpush1.msra.mxu0 0.0
    %2052 = vmatprep.subr.mxu0 0.0
    %2053 = vmatpush1.msra.mxu0 0.0
    %2054 = vmatprep.subr.mxu0 0.0
    %2055 = vmatpush1.msra.mxu0 0.0
    %2056 = vmatprep.subr.mxu0 0.0
    %2057 = vmatpush1.msra.mxu0 0.0
    %2058 = vmatprep.subr.mxu0 0.0
    %2059 = vmatpush1.msra.mxu0 0.0
    %2060 = vmatprep.subr.mxu0 0.0
    %2061 = vmatpush1.msra.mxu0 0.0
    %2062 = vmatprep.subr.mxu0 0.0
    %2063 = vmatpush1.msra.mxu0 0.0
    %2064 = vmatprep.subr.mxu0 0.0
    %2065 = vmatpush1.msra.mxu0 0.0
    %2066 = vmatprep.subr.mxu0 0.0
    %2067 = vmatpush1.msra.mxu0 0.0
    %2068 = vmatprep.subr.mxu0 0.0
    %2069 = vmatpush1.msra.mxu0 0.0
    %2070 = vmatprep.subr.mxu0 0.0
    %2071 = vmatpush1.msra.mxu0 0.0
    %2072 = vmatprep.subr.mxu0 0.0
    %2073 = vmatpush1.msra.mxu0 0.0
    %2074 = vmatprep.subr.mxu0 0.0
    %2075 = vmatpush1.msra.mxu0 0.0
    %2076 = vmatprep.subr.mxu0 0.0
    %2077 = vmatpush1.msra.mxu0 0.0
    %2078 = vmatprep.subr.mxu0 0.0
    %2079 = vmatpush1.msra.mxu0 0.0
    %2080 = vmatprep.subr.mxu0 0.0
    %2081 = vmatpush1.msra.mxu0 0.0
    %2082 = vmatprep.subr.mxu0 0.0
    %2083 = vmatpush1.msra.mxu0 0.0
    %2084 = vmatprep.subr.mxu0 0.0
    %2085 = vmatpush1.msra.mxu0 0.0
    %2086 = vmatprep.subr.mxu0 0.0
    %2087 = vmatpush1.msra.mxu0 0.0
    %2088 = vmatprep.mubr.f32.mxu0 0.0
    %2089 = vmatmul.mubr.f32.gmra.mrb[0].mxu0 %v138
    %v2090 = vpop.f32.mrb[0].mxu0
    %v2091 = vadd.f32 0.0, %v2090
    %v2092 = vpop.f32.mrb[0].mxu0
    %v2093 = vadd.f32 0.0, %v2092
    %2094 = vmatprep.mubr.f32.mxu0 0.0
    %2095 = vmatmul.mubr.f32.gmra.mrb[0].mxu0 %v141
    %v2096 = vpop.f32.mrb[0].mxu0
    %v2097 = vadd.f32 0.0, %v2096
    %v2098 = vpop.f32.mrb[0].mxu0
    %v2099 = vadd.f32 0.0, %v2098
    %2100 = vmatprep.mubr.f32.mxu0 0.0
    %2101 = vmatmul.mubr.f32.gmra.mrb[0].mxu0 %v144
    %v2102 = vpop.f32.mrb[0].mxu0
    %v2103 = vadd.f32 0.0, %v2102
    %v2104 = vpop.f32.mrb[0].mxu0
    %v2105 = vadd.f32 0.0, %v2104
    %2106 = vmatprep.mubr.f32.mxu0 0.0
    %2107 = vmatmul.mubr.f32.gmra.mrb[0].mxu0 %v147
    %v2108 = vpop.f32.mrb[0].mxu0
    %v2109 = vadd.f32 0.0, %v2108
    %v2110 = vpop.f32.mrb[0].mxu0
    %v2111 = vadd.f32 0.0, %v2110
    %2112 = vmatprep.mubr.f32.mxu0 0.0
    %2113 = vmatmul.mubr.f32.gmra.mrb[0].mxu0 %v150
    %v2114 = vpop.f32.mrb[0].mxu0
    %v2115 = vadd.f32 0.0, %v2114
    %v2116 = vpop.f32.mrb[0].mxu0
    %v2117 = vadd.f32 0.0, %v2116
    %2118 = vmatprep.mubr.f32.mxu0 0.0
    %2119 = vmatmul.mubr.f32.gmra.mrb[0].mxu0 %v153
    %v2120 = vpop.f32.mrb[0].mxu0
    %v2121 = vadd.f32 0.0, %v2120
    %v2122 = vpop.f32.mrb[0].mxu0
    %v2123 = vadd.f32 0.0, %v2122
    %2124 = vmatprep.mubr.f32.mxu0 0.0
    %2125 = vmatmul.mubr.f32.gmra.mrb[0].mxu0 %v156
    %v2126 = vpop.f32.mrb[0].mxu0
    %v2127 = vadd.f32 0.0, %v2126
    %v2128 = vpop.f32.mrb[0].mxu0
    %v2129 = vadd.f32 0.0, %v2128
    %2130 = vmatprep.mubr.f32.mxu0 0.0
    %2131 = vmatmul.mubr.f32.gmra.mrb[0].mxu0 %v159
    %v2132 = vpop.f32.mrb[0].mxu0
    %v2133 = vadd.f32 0.0, %v2132
    %v2134 = vpop.f32.mrb[0].mxu0
    %v2135 = vadd.f32 0.0, %v2134
    %2136 = vdwg.mxu0
    %2137 = vmatprep.subr.mxu0 0.0
    %2138 = vmatpush1.msra.mxu0 %v1948
    %2139 = vmatprep.subr.mxu0 0.0
    %2140 = vmatpush1.msra.mxu0 %v1951
    %2141 = vmatprep.subr.mxu0 0.0
    %2142 = vmatpush1.msra.mxu0 0.0
    %2143 = vmatprep.subr.mxu0 0.0
    %2144 = vmatpush1.msra.mxu0 0.0
    %2145 = vmatprep.subr.mxu0 0.0
    %2146 = vmatpush1.msra.mxu0 0.0
    %2147 = vmatprep.subr.mxu0 0.0
    %2148 = vmatpush1.msra.mxu0 0.0
    %2149 = vmatprep.subr.mxu0 0.0
    %2150 = vmatpush1.msra.mxu0 0.0
    %2151 = vmatprep.subr.mxu0 0.0
    %2152 = vmatpush1.msra.mxu0 0.0
    %2153 = vmatprep.subr.mxu0 0.0
    %2154 = vmatpush1.msra.mxu0 0.0
    %2155 = vmatprep.subr.mxu0 0.0
    %2156 = vmatpush1.msra.mxu0 0.0
    %2157 = vmatprep.subr.mxu0 0.0
    %2158 = vmatpush1.msra.mxu0 0.0
    %2159 = vmatprep.subr.mxu0 0.0
    %2160 = vmatpush1.msra.mxu0 0.0
    %2161 = vmatprep.subr.mxu0 0.0
    %2162 = vmatpush1.msra.mxu0 0.0
    %2163 = vmatprep.subr.mxu0 0.0
    %2164 = vmatpush1.msra.mxu0 0.0
    %2165 = vmatprep.subr.mxu0 0.0
    %2166 = vmatpush1.msra.mxu0 0.0
    %2167 = vmatprep.subr.mxu0 0.0
    %2168 = vmatpush1.msra.mxu0 0.0
    %2169 = vmatprep.subr.mxu0 0.0
    %2170 = vmatpush1.msra.mxu0 0.0
    %2171 = vmatprep.subr.mxu0 0.0
    %2172 = vmatpush1.msra.mxu0 0.0
    %2173 = vmatprep.subr.mxu0 0.0
    %2174 = vmatpush1.msra.mxu0 0.0
    %2175 = vmatprep.subr.mxu0 0.0
    %2176 = vmatpush1.msra.mxu0 0.0
    %2177 = vmatprep.subr.mxu0 0.0
    %2178 = vmatpush1.msra.mxu0 0.0
    %2179 = vmatprep.subr.mxu0 0.0
    %2180 = vmatpush1.msra.mxu0 0.0
    %2181 = vmatprep.subr.mxu0 0.0
    %2182 = vmatpush1.msra.mxu0 0.0
    %2183 = vmatprep.subr.mxu0 0.0
    %2184 = vmatpush1.msra.mxu0 0.0
    %2185 = vmatprep.subr.mxu0 0.0
    %2186 = vmatpush1.msra.mxu0 0.0
    %2187 = vmatprep.subr.mxu0 0.0
    %2188 = vmatpush1.msra.mxu0 0.0
    %2189 = vmatprep.subr.mxu0 0.0
    %2190 = vmatpush1.msra.mxu0 0.0
    %2191 = vmatprep.subr.mxu0 0.0
    %2192 = vmatpush1.msra.mxu0 0.0
    %2193 = vmatprep.subr.mxu0 0.0
    %2194 = vmatpush1.msra.mxu0 0.0
    %2195 = vmatprep.subr.mxu0 0.0
    %2196 = vmatpush1.msra.mxu0 0.0
    %2197 = vmatprep.subr.mxu0 0.0
    %2198 = vmatpush1.msra.mxu0 0.0
    %2199 = vmatprep.subr.mxu0 0.0
    %2200 = vmatpush1.msra.mxu0 0.0
    %2201 = vmatprep.mubr.f32.mxu0 0.0
    %2202 = vmatmul.mubr.f32.gmra.mrb[0].mxu0 %v138
    %v2203 = vpop.f32.mrb[0].mxu0
    %v2204 = vadd.f32 0.0, %v2203
    %v2205 = vpop.f32.mrb[0].mxu0
    %2206 = vmatprep.mubr.f32.mxu0 0.0
    %2207 = vmatmul.mubr.f32.gmra.mrb[0].mxu0 %v141
    %v2208 = vpop.f32.mrb[0].mxu0
    %v2209 = vadd.f32 0.0, %v2208
    %v2210 = vpop.f32.mrb[0].mxu0
    %2211 = vmatprep.mubr.f32.mxu0 0.0
    %2212 = vmatmul.mubr.f32.gmra.mrb[0].mxu0 %v144
    %v2213 = vpop.f32.mrb[0].mxu0
    %v2214 = vadd.f32 0.0, %v2213
    %v2215 = vpop.f32.mrb[0].mxu0
    %2216 = vmatprep.mubr.f32.mxu0 0.0
    %2217 = vmatmul.mubr.f32.gmra.mrb[0].mxu0 %v147
    %v2218 = vpop.f32.mrb[0].mxu0
    %v2219 = vadd.f32 0.0, %v2218
    %v2220 = vpop.f32.mrb[0].mxu0
    %2221 = vmatprep.mubr.f32.mxu0 0.0
    %2222 = vmatmul.mubr.f32.gmra.mrb[0].mxu0 %v150
    %v2223 = vpop.f32.mrb[0].mxu0
    %v2224 = vadd.f32 0.0, %v2223
    %v2225 = vpop.f32.mrb[0].mxu0
    %2226 = vmatprep.mubr.f32.mxu0 0.0
    %2227 = vmatmul.mubr.f32.gmra.mrb[0].mxu0 %v153
    %v2228 = vpop.f32.mrb[0].mxu0
    %v2229 = vadd.f32 0.0, %v2228
    %v2230 = vpop.f32.mrb[0].mxu0
    %2231 = vmatprep.mubr.f32.mxu0 0.0
    %2232 = vmatmul.mubr.f32.gmra.mrb[0].mxu0 %v156
    %v2233 = vpop.f32.mrb[0].mxu0
    %v2234 = vadd.f32 0.0, %v2233
    %v2235 = vpop.f32.mrb[0].mxu0
    %2236 = vmatprep.mubr.f32.mxu0 0.0
    %2237 = vmatmul.mubr.f32.gmra.mrb[0].mxu0 %v159
    %v2238 = vpop.f32.mrb[0].mxu0
    %v2239 = vadd.f32 0.0, %v2238
    %v2240 = vpop.f32.mrb[0].mxu0
    %2241 = vdwg.mxu0
    %v2242 = vadd.f32 %v2000, %v2091
    %v2243 = vadd.f32 %v2001, %v2093
    %v2244 = vadd.f32 %v2002, %v2204
    %v2245 = vadd.f32 %v2003, %v2097
    %v2246 = vadd.f32 %v2004, %v2099
    %v2247 = vadd.f32 %v2005, %v2209
    %v2248 = vadd.f32 %v2006, %v2103
    %v2249 = vadd.f32 %v2007, %v2105
    %v2250 = vadd.f32 %v2008, %v2214
    %v2251 = vadd.f32 %v2009, %v2109
    %v2252 = vadd.f32 %v2010, %v2111
    %v2253 = vadd.f32 %v2011, %v2219
    %v2254 = vadd.f32 %v2012, %v2115
    %v2255 = vadd.f32 %v2013, %v2117
    %v2256 = vadd.f32 %v2014, %v2224
    %v2257 = vadd.f32 %v2015, %v2121
    %v2258 = vadd.f32 %v2016, %v2123
    %v2259 = vadd.f32 %v2017, %v2229
    %v2260 = vadd.f32 %v2018, %v2127
    %v2261 = vadd.f32 %v2019, %v2129
    %v2262 = vadd.f32 %v2020, %v2234
    %v2263 = vadd.f32 %v2021, %v2133
    %v2264 = vadd.f32 %v2022, %v2135
    %v2265 = vadd.f32 %v2023, %v2239
    %v2266 = vadd.f32 %v2242, %v300
    %v2267 = vadd.f32 %v2243, %v300
    %v2268 = vadd.f32 %v2244, %v300
    %v2269 = vadd.f32 %v2245, %v304
    %v2270 = vadd.f32 %v2246, %v304
    %v2271 = vadd.f32 %v2247, %v304
    %v2272 = vadd.f32 %v2248, %v308
    %v2273 = vadd.f32 %v2249, %v308
    %v2274 = vadd.f32 %v2250, %v308
    %v2275 = vadd.f32 %v2251, %v312
    %v2276 = vadd.f32 %v2252, %v312
    %v2277 = vadd.f32 %v2253, %v312
    %v2278 = vadd.f32 %v2254, %v316
    %v2279 = vadd.f32 %v2255, %v316
    %v2280 = vadd.f32 %v2256, %v316
    %v2281 = vadd.f32 %v2257, %v320
    %v2282 = vadd.f32 %v2258, %v320
    %v2283 = vadd.f32 %v2259, %v320
    %v2284 = vadd.f32 %v2260, %v324
    %v2285 = vadd.f32 %v2261, %v324
    %v2286 = vadd.f32 %v2262, %v324
    %v2287 = vadd.f32 %v2263, %v328
    %v2288 = vadd.f32 %v2264, %v328
    %v2289 = vadd.f32 %v2265, %v328
    %v2290 = vxor.u32 %v2266, 2147483648
    %v2291 = vxor.u32 %v2267, 2147483648
    %v2292 = vxor.u32 %v2268, 2147483648
    %v2293 = vxor.u32 %v2269, 2147483648
    %v2294 = vxor.u32 %v2270, 2147483648
    %v2295 = vxor.u32 %v2271, 2147483648
    %v2296 = vmul.f32 %v2290, 1.442695
    %v2297 = vpow.pop %v2296
    %v2298 = vmul.f32 %v2291, 1.442695
    %v2299 = vpow.pop %v2298
    %v2300 = vmul.f32 %v2292, 1.442695
    %v2301 = vpow.pop %v2300
    %v2302 = vmul.f32 %v2293, 1.442695
    %v2303 = vpow.pop %v2302
    %v2304 = vmul.f32 %v2294, 1.442695
    %v2305 = vpow.pop %v2304
    %v2306 = vmul.f32 %v2295, 1.442695
    %v2307 = vpow.pop %v2306
    %v2308 = vadd.f32 %v2297, 1.0
    %v2309 = vadd.f32 %v2299, 1.0
    %v2310 = vadd.f32 %v2301, 1.0
    %v2311 = vadd.f32 %v2303, 1.0
    %v2312 = vadd.f32 %v2305, 1.0
    %v2313 = vadd.f32 %v2307, 1.0
    %v2314 = vrcp.pop %v2308
    %v2315 = vmul.f32 1.0, %v2314
    %v2316 = vrcp.pop %v2309
    %v2317 = vmul.f32 1.0, %v2316
    %v2318 = vrcp.pop %v2310
    %v2319 = vmul.f32 1.0, %v2318
    %v2320 = vrcp.pop %v2311
    %v2321 = vmul.f32 1.0, %v2320
    %v2322 = vrcp.pop %v2312
    %v2323 = vmul.f32 1.0, %v2322
    %v2324 = vrcp.pop %v2313
    %v2325 = vmul.f32 1.0, %v2324
    %v2326 = vxor.u32 %v2272, 2147483648
    %v2327 = vxor.u32 %v2273, 2147483648
    %v2328 = vxor.u32 %v2274, 2147483648
    %v2329 = vxor.u32 %v2275, 2147483648
    %v2330 = vxor.u32 %v2276, 2147483648
    %v2331 = vxor.u32 %v2277, 2147483648
    %v2332 = vmul.f32 %v2326, 1.442695
    %v2333 = vpow.pop %v2332
    %v2334 = vmul.f32 %v2327, 1.442695
    %v2335 = vpow.pop %v2334
    %v2336 = vmul.f32 %v2328, 1.442695
    %v2337 = vpow.pop %v2336
    %v2338 = vmul.f32 %v2329, 1.442695
    %v2339 = vpow.pop %v2338
    %v2340 = vmul.f32 %v2330, 1.442695
    %v2341 = vpow.pop %v2340
    %v2342 = vmul.f32 %v2331, 1.442695
    %v2343 = vpow.pop %v2342
    %v2344 = vadd.f32 %v2333, 1.0
    %v2345 = vadd.f32 %v2335, 1.0
    %v2346 = vadd.f32 %v2337, 1.0
    %v2347 = vadd.f32 %v2339, 1.0
    %v2348 = vadd.f32 %v2341, 1.0
    %v2349 = vadd.f32 %v2343, 1.0
    %v2350 = vrcp.pop %v2344
    %v2351 = vmul.f32 1.0, %v2350
    %v2352 = vrcp.pop %v2345
    %v2353 = vmul.f32 1.0, %v2352
    %v2354 = vrcp.pop %v2346
    %v2355 = vmul.f32 1.0, %v2354
    %v2356 = vrcp.pop %v2347
    %v2357 = vmul.f32 1.0, %v2356
    %v2358 = vrcp.pop %v2348
    %v2359 = vmul.f32 1.0, %v2358
    %v2360 = vrcp.pop %v2349
    %v2361 = vmul.f32 1.0, %v2360
    %v2362 = vtanh.pop %v2278
    %v2363 = vtanh.pop %v2279
    %v2364 = vtanh.pop %v2280
    %v2365 = vtanh.pop %v2281
    %v2366 = vtanh.pop %v2282
    %v2367 = vtanh.pop %v2283
    %v2368 = vxor.u32 %v2284, 2147483648
    %v2369 = vxor.u32 %v2285, 2147483648
    %v2370 = vxor.u32 %v2286, 2147483648
    %v2371 = vxor.u32 %v2287, 2147483648
    %v2372 = vxor.u32 %v2288, 2147483648
    %v2373 = vxor.u32 %v2289, 2147483648
    %v2374 = vmul.f32 %v2368, 1.442695
    %v2375 = vpow.pop %v2374
    %v2376 = vmul.f32 %v2369, 1.442695
    %v2377 = vpow.pop %v2376
    %v2378 = vmul.f32 %v2370, 1.442695
    %v2379 = vpow.pop %v2378
    %v2380 = vmul.f32 %v2371, 1.442695
    %v2381 = vpow.pop %v2380
    %v2382 = vmul.f32 %v2372, 1.442695
    %v2383 = vpow.pop %v2382
    %v2384 = vmul.f32 %v2373, 1.442695
    %v2385 = vpow.pop %v2384
    %v2386 = vadd.f32 %v2375, 1.0
    %v2387 = vadd.f32 %v2377, 1.0
    %v2388 = vadd.f32 %v2379, 1.0
    %v2389 = vadd.f32 %v2381, 1.0
    %v2390 = vadd.f32 %v2383, 1.0
    %v2391 = vadd.f32 %v2385, 1.0
    %v2392 = vrcp.pop %v2386
    %v2393 = vmul.f32 1.0, %v2392
    %v2394 = vrcp.pop %v2387
    %v2395 = vmul.f32 1.0, %v2394
    %v2396 = vrcp.pop %v2388
    %v2397 = vmul.f32 1.0, %v2396
    %v2398 = vrcp.pop %v2389
    %v2399 = vmul.f32 1.0, %v2398
    %v2400 = vrcp.pop %v2390
    %v2401 = vmul.f32 1.0, %v2400
    %v2402 = vrcp.pop %v2391
    %v2403 = vmul.f32 1.0, %v2402
    %v2404 = vmul.f32 %v2351, %v1934
    %v2405 = vmul.f32 %v2353, %v1935
    %v2406 = vmul.f32 %v2355, %v1936
    %v2407 = vmul.f32 %v2357, %v1937
    %v2408 = vmul.f32 %v2359, %v1938
    %v2409 = vmul.f32 %v2361, %v1939
    %v2410 = vmul.f32 %v2315, %v2362
    %v2411 = vmul.f32 %v2317, %v2363
    %v2412 = vmul.f32 %v2319, %v2364
    %v2413 = vmul.f32 %v2321, %v2365
    %v2414 = vmul.f32 %v2323, %v2366
    %v2415 = vmul.f32 %v2325, %v2367
    %v2416 = vadd.f32 %v2404, %v2410
    %v2417 = vadd.f32 %v2405, %v2411
    %v2418 = vadd.f32 %v2406, %v2412
    %v2419 = vadd.f32 %v2407, %v2413
    %v2420 = vadd.f32 %v2408, %v2414
    %v2421 = vadd.f32 %v2409, %v2415
    %v2422 = vtanh.pop %v2416
    %v2423 = vtanh.pop %v2417
    %v2424 = vtanh.pop %v2418
    %v2425 = vtanh.pop %v2419
    %v2426 = vtanh.pop %v2420
    %v2427 = vtanh.pop %v2421
    %v2428 = vmul.f32 %v2393, %v2422
    %v2429 = vmul.f32 %v2395, %v2423
    %v2430 = vmul.f32 %v2397, %v2424
    %v2431 = vmul.f32 %v2399, %v2425
    %v2432 = vmul.f32 %v2401, %v2426
    %v2433 = vmul.f32 %v2403, %v2427
    %v2434 = vmul.f32 %v500, %v2428
    %v2435 = vmul.f32 %v500, %v2429
    %v2436 = vmul.f32 %v500, %v2430
    %v2437 = vmul.f32 %v504, %v2431
    %v2438 = vmul.f32 %v504, %v2432
    %v2439 = vmul.f32 %v504, %v2433
    %v2440 = vadd.f32 %v2434, %v2437
    %v2441 = vrot.slane %v2440, 4
    %v2442 = vadd.f32 %v2440, %v2441
    %v2443 = vrot.slane %v2442, 2
    %v2444 = vadd.f32 %v2442, %v2443
    %v2445 = vrot.slane %v2444, 1
    %v2446 = vadd.f32 %v2444, %v2445
    %v2447 = vadd.f32 %v2435, %v2438
    %v2448 = vrot.slane %v2447, 4
    %v2449 = vadd.f32 %v2447, %v2448
    %v2450 = vrot.slane %v2449, 2
    %v2451 = vadd.f32 %v2449, %v2450
    %v2452 = vrot.slane %v2451, 1
    %v2453 = vadd.f32 %v2451, %v2452
    %v2454 = vadd.f32 %v2436, %v2439
    %v2455 = vrot.slane %v2454, 4
    %v2456 = vadd.f32 %v2454, %v2455
    %v2457 = vrot.slane %v2456, 2
    %v2458 = vadd.f32 %v2456, %v2457
    %v2459 = vrot.slane %v2458, 1
    %v2460 = vadd.f32 %v2458, %v2459
    %v2461 = vtanh.pop %v2446
    %v2462 = vtanh.pop %v2453
    %v2463 = vtanh.pop %v2460
    %v2464 = vmax.f32 %v533, %v1015
    %v2465 = vmax.f32 %v534, %v1016
    %v2466 = vmax.f32 %v535, %v1017
    %v2467 = vmax.f32 %v2464, %v1497
    %v2468 = vmax.f32 %v2465, %v1498
    %v2469 = vmax.f32 %v2466, %v1499
    %v2470 = vmax.f32 %v2467, %v1979
    %v2471 = vmax.f32 %v2468, %v1980
    %v2472 = vmax.f32 %v2469, %v1981
    %v2473 = vmax.f32 %v2470, %v2461
    %v2474 = vmax.f32 %v2471, %v2462
    %v2475 = vmax.f32 %v2472, %v2463
    %v2476 = vsub.f32 %v533, %v2473
    %v2477 = vsub.f32 %v534, %v2474
    %v2478 = vsub.f32 %v535, %v2475
    %v2479 = vmul.f32 %v2476, 1.442695
    %v2480 = vpow.pop %v2479
    %v2481 = vmul.f32 %v2477, 1.442695
    %v2482 = vpow.pop %v2481
    %v2483 = vmul.f32 %v2478, 1.442695
    %v2484 = vpow.pop %v2483
    %v2485 = vsub.f32 %v1015, %v2473
    %v2486 = vsub.f32 %v1016, %v2474
    %v2487 = vsub.f32 %v1017, %v2475
    %v2488 = vmul.f32 %v2485, 1.442695
    %v2489 = vpow.pop %v2488
    %v2490 = vmul.f32 %v2486, 1.442695
    %v2491 = vpow.pop %v2490
    %v2492 = vmul.f32 %v2487, 1.442695
    %v2493 = vpow.pop %v2492
    %v2494 = vsub.f32 %v1497, %v2473
    %v2495 = vsub.f32 %v1498, %v2474
    %v2496 = vsub.f32 %v1499, %v2475
    %v2497 = vmul.f32 %v2494, 1.442695
    %v2498 = vpow.pop %v2497
    %v2499 = vmul.f32 %v2495, 1.442695
    %v2500 = vpow.pop %v2499
    %v2501 = vmul.f32 %v2496, 1.442695
    %v2502 = vpow.pop %v2501
    %v2503 = vsub.f32 %v1979, %v2473
    %v2504 = vsub.f32 %v1980, %v2474
    %v2505 = vsub.f32 %v1981, %v2475
    %v2506 = vmul.f32 %v2503, 1.442695
    %v2507 = vpow.pop %v2506
    %v2508 = vmul.f32 %v2504, 1.442695
    %v2509 = vpow.pop %v2508
    %v2510 = vmul.f32 %v2505, 1.442695
    %v2511 = vpow.pop %v2510
    %v2512 = vsub.f32 %v2461, %v2473
    %v2513 = vsub.f32 %v2462, %v2474
    %v2514 = vsub.f32 %v2463, %v2475
    %v2515 = vmul.f32 %v2512, 1.442695
    %v2516 = vpow.pop %v2515
    %v2517 = vmul.f32 %v2513, 1.442695
    %v2518 = vpow.pop %v2517
    %v2519 = vmul.f32 %v2514, 1.442695
    %v2520 = vpow.pop %v2519
    %v2521 = vadd.f32 %v2480, %v2489
    %v2522 = vadd.f32 %v2482, %v2491
    %v2523 = vadd.f32 %v2484, %v2493
    %v2524 = vadd.f32 %v2521, %v2498
    %v2525 = vadd.f32 %v2522, %v2500
    %v2526 = vadd.f32 %v2523, %v2502
    %v2527 = vadd.f32 %v2524, %v2507
    %v2528 = vadd.f32 %v2525, %v2509
    %v2529 = vadd.f32 %v2526, %v2511
    %v2530 = vadd.f32 %v2527, %v2516
    %v2531 = vadd.f32 %v2528, %v2518
    %v2532 = vadd.f32 %v2529, %v2520
    %v2533 = vmul.f32 %v2480, %v492
    %v2534 = vmul.f32 %v2482, %v493
    %v2535 = vmul.f32 %v2484, %v494
    %v2536 = vmul.f32 %v2480, %v495
    %v2537 = vmul.f32 %v2482, %v496
    %v2538 = vmul.f32 %v2484, %v497
    %v2539 = vmul.f32 %v2489, %v982
    %v2540 = vmul.f32 %v2491, %v983
    %v2541 = vmul.f32 %v2493, %v984
    %v2542 = vmul.f32 %v2489, %v985
    %v2543 = vmul.f32 %v2491, %v986
    %v2544 = vmul.f32 %v2493, %v987
    %v2545 = vadd.f32 %v2533, %v2539
    %v2546 = vadd.f32 %v2534, %v2540
    %v2547 = vadd.f32 %v2535, %v2541
    %v2548 = vadd.f32 %v2536, %v2542
    %v2549 = vadd.f32 %v2537, %v2543
    %v2550 = vadd.f32 %v2538, %v2544
    %v2551 = vmul.f32 %v2498, %v1464
    %v2552 = vmul.f32 %v2500, %v1465
    %v2553 = vmul.f32 %v2502, %v1466
    %v2554 = vmul.f32 %v2498, %v1467
    %v2555 = vmul.f32 %v2500, %v1468
    %v2556 = vmul.f32 %v2502, %v1469
    %v2557 = vadd.f32 %v2545, %v2551
    %v2558 = vadd.f32 %v2546, %v2552
    %v2559 = vadd.f32 %v2547, %v2553
    %v2560 = vadd.f32 %v2548, %v2554
    %v2561 = vadd.f32 %v2549, %v2555
    %v2562 = vadd.f32 %v2550, %v2556
    %v2563 = vmul.f32 %v2507, %v1946
    %v2564 = vmul.f32 %v2509, %v1947
    %v2565 = vmul.f32 %v2511, %v1948
    %v2566 = vmul.f32 %v2507, %v1949
    %v2567 = vmul.f32 %v2509, %v1950
    %v2568 = vmul.f32 %v2511, %v1951
    %v2569 = vadd.f32 %v2557, %v2563
    %v2570 = vadd.f32 %v2558, %v2564
    %v2571 = vadd.f32 %v2559, %v2565
    %v2572 = vadd.f32 %v2560, %v2566
    %v2573 = vadd.f32 %v2561, %v2567
    %v2574 = vadd.f32 %v2562, %v2568
    %v2575 = vmul.f32 %v2516, %v2428
    %v2576 = vmul.f32 %v2518, %v2429
    %v2577 = vmul.f32 %v2520, %v2430
    %v2578 = vmul.f32 %v2516, %v2431
    %v2579 = vmul.f32 %v2518, %v2432
    %v2580 = vmul.f32 %v2520, %v2433
    %v2581 = vadd.f32 %v2569, %v2575
    %v2582 = vadd.f32 %v2570, %v2576
    %v2583 = vadd.f32 %v2571, %v2577
    %v2584 = vadd.f32 %v2572, %v2578
    %v2585 = vadd.f32 %v2573, %v2579
    %v2586 = vadd.f32 %v2574, %v2580
    %2587 = vset.pattern.permute.xlu0 3
    %2588 = vperm.xlu0 %2587, %v36
    %v2589 = vpop.permute.xlu0 %2588
    %2591 = vset.pattern.permute.xlu0 3
    %2592 = vperm.xlu0 %2591, %v37
    %v2593 = vpop.permute.xlu0 %2592
    %v2595 = vmul.f32 %v2589, %v2581
    %v2596 = vmul.f32 %v2593, %v2584
    %v2597 = vadd.f32 %v2595, %v2596
    %v2598 = vrot.slane %v2597, 4
    %v2599 = vadd.f32 %v2597, %v2598
    %v2600 = vrot.slane %v2599, 2
    %v2601 = vadd.f32 %v2599, %v2600
    %v2602 = vrot.slane %v2601, 1
    %v2603 = vadd.f32 %v2601, %v2602
    %v2604 = vrcp.pop %v2530
    %v2605 = vmul.f32 %v2603, %v2604
    %2606 = vset.pattern.permute.xlu0 4
    %2607 = vperm.xlu0 %2606, %v36
    %v2608 = vpop.permute.xlu0 %2607
    %2610 = vset.pattern.permute.xlu0 4
    %2611 = vperm.xlu0 %2610, %v37
    %v2612 = vpop.permute.xlu0 %2611
    %v2614 = vmul.f32 %v2608, %v2582
    %v2615 = vmul.f32 %v2612, %v2585
    %v2616 = vadd.f32 %v2614, %v2615
    %v2617 = vrot.slane %v2616, 4
    %v2618 = vadd.f32 %v2616, %v2617
    %v2619 = vrot.slane %v2618, 2
    %v2620 = vadd.f32 %v2618, %v2619
    %v2621 = vrot.slane %v2620, 1
    %v2622 = vadd.f32 %v2620, %v2621
    %v2623 = vrcp.pop %v2531
    %v2624 = vmul.f32 %v2622, %v2623
    %v2625 = vadd.f32 %v2605, %v2624
    %2626 = vset.pattern.permute.xlu0 5
    %2627 = vperm.xlu0 %2626, %v36
    %v2628 = vpop.permute.xlu0 %2627
    %2630 = vset.pattern.permute.xlu0 5
    %2631 = vperm.xlu0 %2630, %v37
    %v2632 = vpop.permute.xlu0 %2631
    %v2634 = vmul.f32 %v2628, %v2583
    %v2635 = vmul.f32 %v2632, %v2586
    %v2636 = vadd.f32 %v2634, %v2635
    %v2637 = vrot.slane %v2636, 4
    %v2638 = vadd.f32 %v2636, %v2637
    %v2639 = vrot.slane %v2638, 2
    %v2640 = vadd.f32 %v2638, %v2639
    %v2641 = vrot.slane %v2640, 1
    %v2642 = vadd.f32 %v2640, %v2641
    %v2643 = vrcp.pop %v2532
    %v2644 = vmul.f32 %v2642, %v2643
    %v2645 = vadd.f32 %v2625, %v2644
    %s2646 = sld [smem:[#allocation2]]
    %v2647 = vstv %s2646
    %v2648 = vadd.f32 %v2645, %v2647
    %v2649 = vld [vmem:[%s1 + $0x10] sm:$0xff]
    %v2650 = vld [vmem:[%s1 + $0x18] sm:$0xff]
    %2651 = vset.pattern.permute.xlu0 6
    %2652 = vperm.xlu0 %2651, %v36
    %v2653 = vpop.permute.xlu0 %2652
    %2655 = vset.pattern.permute.xlu0 6
    %2656 = vperm.xlu0 %2655, %v37
    %v2657 = vpop.permute.xlu0 %2656
    %v2660 = vsel %vm136, %v52, 0
    %v2663 = vsel %vm136, %v53, 0
    %2665 = vmatprep.subr.mxu0 0.0
    %2666 = vmatpush1.msra.mxu0 %v2649
    %2667 = vmatprep.subr.mxu0 0.0
    %2668 = vmatpush1.msra.mxu0 %v2650
    %2669 = vmatprep.subr.mxu0 0.0
    %2670 = vmatpush1.msra.mxu0 0.0
    %2671 = vmatprep.subr.mxu0 0.0
    %2672 = vmatpush1.msra.mxu0 0.0
    %2673 = vmatprep.subr.mxu0 0.0
    %2674 = vmatpush1.msra.mxu0 0.0
    %2675 = vmatprep.subr.mxu0 0.0
    %2676 = vmatpush1.msra.mxu0 0.0
    %2677 = vmatprep.subr.mxu0 0.0
    %2678 = vmatpush1.msra.mxu0 0.0
    %2679 = vmatprep.subr.mxu0 0.0
    %2680 = vmatpush1.msra.mxu0 0.0
    %2681 = vmatprep.subr.mxu0 0.0
    %2682 = vmatpush1.msra.mxu0 0.0
    %2683 = vmatprep.subr.mxu0 0.0
    %2684 = vmatpush1.msra.mxu0 0.0
    %2685 = vmatprep.subr.mxu0 0.0
    %2686 = vmatpush1.msra.mxu0 0.0
    %2687 = vmatprep.subr.mxu0 0.0
    %2688 = vmatpush1.msra.mxu0 0.0
    %2689 = vmatprep.subr.mxu0 0.0
    %2690 = vmatpush1.msra.mxu0 0.0
    %2691 = vmatprep.subr.mxu0 0.0
    %2692 = vmatpush1.msra.mxu0 0.0
    %2693 = vmatprep.subr.mxu0 0.0
    %2694 = vmatpush1.msra.mxu0 0.0
    %2695 = vmatprep.subr.mxu0 0.0
    %2696 = vmatpush1.msra.mxu0 0.0
    %2697 = vmatprep.subr.mxu0 0.0
    %2698 = vmatpush1.msra.mxu0 0.0
    %2699 = vmatprep.subr.mxu0 0.0
    %2700 = vmatpush1.msra.mxu0 0.0
    %2701 = vmatprep.subr.mxu0 0.0
    %2702 = vmatpush1.msra.mxu0 0.0
    %2703 = vmatprep.subr.mxu0 0.0
    %2704 = vmatpush1.msra.mxu0 0.0
    %2705 = vmatprep.subr.mxu0 0.0
    %2706 = vmatpush1.msra.mxu0 0.0
    %2707 = vmatprep.subr.mxu0 0.0
    %2708 = vmatpush1.msra.mxu0 0.0
    %2709 = vmatprep.subr.mxu0 0.0
    %2710 = vmatpush1.msra.mxu0 0.0
    %2711 = vmatprep.subr.mxu0 0.0
    %2712 = vmatpush1.msra.mxu0 0.0
    %2713 = vmatprep.subr.mxu0 0.0
    %2714 = vmatpush1.msra.mxu0 0.0
    %2715 = vmatprep.subr.mxu0 0.0
    %2716 = vmatpush1.msra.mxu0 0.0
    %2717 = vmatprep.subr.mxu0 0.0
    %2718 = vmatpush1.msra.mxu0 0.0
    %2719 = vmatprep.subr.mxu0 0.0
    %2720 = vmatpush1.msra.mxu0 0.0
    %2721 = vmatprep.subr.mxu0 0.0
    %2722 = vmatpush1.msra.mxu0 0.0
    %2723 = vmatprep.subr.mxu0 0.0
    %2724 = vmatpush1.msra.mxu0 0.0
    %2725 = vmatprep.subr.mxu0 0.0
    %2726 = vmatpush1.msra.mxu0 0.0
    %2727 = vmatprep.subr.mxu0 0.0
    %2728 = vmatpush1.msra.mxu0 0.0
    %2729 = vmatprep.mubr.f32.mxu0 0.0
    %2730 = vmatmul.mubr.f32.gmra.mrb[0].mxu0 %v2660
    %v2731 = vpop.f32.mrb[0].mxu0
    %v2732 = vadd.f32 %v2653, %v2731
    %v2733 = vpop.f32.mrb[0].mxu0
    %2734 = vmatprep.mubr.f32.mxu0 0.0
    %2735 = vmatmul.mubr.f32.gmra.mrb[0].mxu0 %v2663
    %v2736 = vpop.f32.mrb[0].mxu0
    %v2737 = vadd.f32 %v2657, %v2736
    %v2738 = vpop.f32.mrb[0].mxu0
    %2739 = vdwg.mxu0
    %v2740 = vmax.f32 %v2732, 0.0
    %v2741 = vmax.f32 %v2737, 0.0
    %2742 = vset.pattern.permute.xlu0 7
    %2743 = vperm.xlu0 %2742, %v36
    %v2744 = vpop.permute.xlu0 %2743
    %v2747 = vsel %vm136, %v54, 0
    %2749 = vmatprep.subr.mxu0 0.0
    %2750 = vmatpush1.msra.mxu0 %v2740
    %2751 = vmatprep.subr.mxu0 0.0
    %2752 = vmatpush1.msra.mxu0 %v2741
    %2753 = vmatprep.subr.mxu0 0.0
    %2754 = vmatpush1.msra.mxu0 0.0
    %2755 = vmatprep.subr.mxu0 0.0
    %2756 = vmatpush1.msra.mxu0 0.0
    %2757 = vmatprep.subr.mxu0 0.0
    %2758 = vmatpush1.msra.mxu0 0.0
    %2759 = vmatprep.subr.mxu0 0.0
    %2760 = vmatpush1.msra.mxu0 0.0
    %2761 = vmatprep.subr.mxu0 0.0
    %2762 = vmatpush1.msra.mxu0 0.0
    %2763 = vmatprep.subr.mxu0 0.0
    %2764 = vmatpush1.msra.mxu0 0.0
    %2765 = vmatprep.subr.mxu0 0.0
    %2766 = vmatpush1.msra.mxu0 0.0
    %2767 = vmatprep.subr.mxu0 0.0
    %2768 = vmatpush1.msra.mxu0 0.0
    %2769 = vmatprep.subr.mxu0 0.0
    %2770 = vmatpush1.msra.mxu0 0.0
    %2771 = vmatprep.subr.mxu0 0.0
    %2772 = vmatpush1.msra.mxu0 0.0
    %2773 = vmatprep.subr.mxu0 0.0
    %2774 = vmatpush1.msra.mxu0 0.0
    %2775 = vmatprep.subr.mxu0 0.0
    %2776 = vmatpush1.msra.mxu0 0.0
    %2777 = vmatprep.subr.mxu0 0.0
    %2778 = vmatpush1.msra.mxu0 0.0
    %2779 = vmatprep.subr.mxu0 0.0
    %2780 = vmatpush1.msra.mxu0 0.0
    %2781 = vmatprep.subr.mxu0 0.0
    %2782 = vmatpush1.msra.mxu0 0.0
    %2783 = vmatprep.subr.mxu0 0.0
    %2784 = vmatpush1.msra.mxu0 0.0
    %2785 = vmatprep.subr.mxu0 0.0
    %2786 = vmatpush1.msra.mxu0 0.0
    %2787 = vmatprep.subr.mxu0 0.0
    %2788 = vmatpush1.msra.mxu0 0.0
    %2789 = vmatprep.subr.mxu0 0.0
    %2790 = vmatpush1.msra.mxu0 0.0
    %2791 = vmatprep.subr.mxu0 0.0
    %2792 = vmatpush1.msra.mxu0 0.0
    %2793 = vmatprep.subr.mxu0 0.0
    %2794 = vmatpush1.msra.mxu0 0.0
    %2795 = vmatprep.subr.mxu0 0.0
    %2796 = vmatpush1.msra.mxu0 0.0
    %2797 = vmatprep.subr.mxu0 0.0
    %2798 = vmatpush1.msra.mxu0 0.0
    %2799 = vmatprep.subr.mxu0 0.0
    %2800 = vmatpush1.msra.mxu0 0.0
    %2801 = vmatprep.subr.mxu0 0.0
    %2802 = vmatpush1.msra.mxu0 0.0
    %2803 = vmatprep.subr.mxu0 0.0
    %2804 = vmatpush1.msra.mxu0 0.0
    %2805 = vmatprep.subr.mxu0 0.0
    %2806 = vmatpush1.msra.mxu0 0.0
    %2807 = vmatprep.subr.mxu0 0.0
    %2808 = vmatpush1.msra.mxu0 0.0
    %2809 = vmatprep.subr.mxu0 0.0
    %2810 = vmatpush1.msra.mxu0 0.0
    %2811 = vmatprep.subr.mxu0 0.0
    %2812 = vmatpush1.msra.mxu0 0.0
    %2813 = vmatprep.mubr.f32.mxu0 0.0
    %2814 = vmatmul.mubr.f32.gmra.mrb[0].mxu0 %v2747
    %v2815 = vpop.f32.mrb[0].mxu0
    %v2816 = vadd.f32 %v2744, %v2815
    %v2817 = vpop.f32.mrb[0].mxu0
    %2818 = vdwg.mxu0
    %v2819 = vmax.f32 %v2816, 0.0
    %2820 = vset.pattern.permute.xlu0 8
    %2821 = vperm.xlu0 %2820, %v36
    %v2822 = vpop.permute.xlu0 %2821
    %v2824 = vmul.f32 %v2822, %v2819
    %v2825 = vrot.slane %v2824, 4
    %v2826 = vadd.f32 %v2824, %v2825
    %v2827 = vrot.slane %v2826, 2
    %v2828 = vadd.f32 %v2826, %v2827
    %v2829 = vrot.slane %v2828, 1
    %v2830 = vadd.f32 %v2828, %v2829
    %s2831 = sld [smem:[#allocation2 + $0x1]]
    %v2832 = vstv %s2831
    %v2833 = vadd.f32 %v2830, %v2832
    %v2834 = vld [vmem:[%s1] sm:$0xff]
    %v2835 = vld [vmem:[%s1 + $0x8] sm:$0xff]
    %v2836 = vld [vmem:[%s2] sm:$0xff]
    %v2837 = vld [vmem:[%s2 + $0x8] sm:$0xff]
    %v2838 = vld [vmem:[%s2 + $0x10] sm:$0xff]
    %v2839 = vld [vmem:[%s2 + $0x18] sm:$0xff]
    %v2840 = vld [vmem:[%s2 + $0x20] sm:$0xff]
    %v2841 = vld [vmem:[%s2 + $0x28] sm:$0xff]
    %v2842 = vld [vmem:[%s2 + $0x30] sm:$0xff]
    %v2843 = vld [vmem:[%s2 + $0x38] sm:$0xff]
    %v2844 = vld [vmem:[%s2 + $0x40] sm:$0xff]
    %v2845 = vld [vmem:[%s2 + $0x48] sm:$0xff]
    %v2846 = vld [vmem:[%s2 + $0x50] sm:$0xff]
    %v2847 = vld [vmem:[%s2 + $0x58] sm:$0xff]
    %v2848 = vld [vmem:[%s2 + $0x60] sm:$0xff]
    %v2849 = vld [vmem:[%s2 + $0x68] sm:$0xff]
    %v2850 = vld [vmem:[%s2 + $0x70] sm:$0xff]
    %v2851 = vld [vmem:[%s2 + $0x78] sm:$0xff]
    %s2852 = scalar_lea.vmem %s2, 128
    %v2853 = vld [vmem:[%s2852] sm:$0xff]
    %v2854 = vld [vmem:[%s2852 + $0x8] sm:$0xff]
    %v2855 = vld [vmem:[%s2852 + $0x10] sm:$0xff]
    %v2856 = vld [vmem:[%s2852 + $0x18] sm:$0xff]
    %v2857 = vld [vmem:[%s2852 + $0x20] sm:$0xff]
    %v2858 = vld [vmem:[%s2852 + $0x28] sm:$0xff]
    %v2859 = vld [vmem:[%s2852 + $0x30] sm:$0xff]
    %v2860 = vld [vmem:[%s2852 + $0x38] sm:$0xff]
    %v2861 = vld [vmem:[%s2852 + $0x40] sm:$0xff]
    %v2862 = vld [vmem:[%s2852 + $0x48] sm:$0xff]
    %v2863 = vld [vmem:[%s2852 + $0x50] sm:$0xff]
    %v2864 = vld [vmem:[%s2852 + $0x58] sm:$0xff]
    %v2865 = vld [vmem:[%s2852 + $0x60] sm:$0xff]
    %v2866 = vld [vmem:[%s2852 + $0x68] sm:$0xff]
    %v2867 = vld [vmem:[%s2852 + $0x70] sm:$0xff]
    %v2868 = vld [vmem:[%s2852 + $0x78] sm:$0xff]
    %2869 = vmatprep.subr.mxu0 0.0
    %2870 = vmatpush1.msra.mxu0 %v2836
    %2871 = vmatprep.subr.mxu0 0.0
    %2872 = vmatpush1.msra.mxu0 %v2837
    %2873 = vmatprep.subr.mxu0 0.0
    %2874 = vmatpush1.msra.mxu0 %v2838
    %2875 = vmatprep.subr.mxu0 0.0
    %2876 = vmatpush1.msra.mxu0 %v2839
    %2877 = vmatprep.subr.mxu0 0.0
    %2878 = vmatpush1.msra.mxu0 %v2840
    %2879 = vmatprep.subr.mxu0 0.0
    %2880 = vmatpush1.msra.mxu0 %v2841
    %2881 = vmatprep.subr.mxu0 0.0
    %2882 = vmatpush1.msra.mxu0 %v2842
    %2883 = vmatprep.subr.mxu0 0.0
    %2884 = vmatpush1.msra.mxu0 %v2843
    %2885 = vmatprep.subr.mxu0 0.0
    %2886 = vmatpush1.msra.mxu0 %v2844
    %2887 = vmatprep.subr.mxu0 0.0
    %2888 = vmatpush1.msra.mxu0 %v2845
    %2889 = vmatprep.subr.mxu0 0.0
    %2890 = vmatpush1.msra.mxu0 %v2846
    %2891 = vmatprep.subr.mxu0 0.0
    %2892 = vmatpush1.msra.mxu0 %v2847
    %2893 = vmatprep.subr.mxu0 0.0
    %2894 = vmatpush1.msra.mxu0 %v2848
    %2895 = vmatprep.subr.mxu0 0.0
    %2896 = vmatpush1.msra.mxu0 %v2849
    %2897 = vmatprep.subr.mxu0 0.0
    %2898 = vmatpush1.msra.mxu0 %v2850
    %2899 = vmatprep.subr.mxu0 0.0
    %2900 = vmatpush1.msra.mxu0 %v2851
    %2901 = vmatprep.subr.mxu0 0.0
    %2902 = vmatpush1.msra.mxu0 0.0
    %2903 = vmatprep.subr.mxu0 0.0
    %2904 = vmatpush1.msra.mxu0 0.0
    %2905 = vmatprep.subr.mxu0 0.0
    %2906 = vmatpush1.msra.mxu0 0.0
    %2907 = vmatprep.subr.mxu0 0.0
    %2908 = vmatpush1.msra.mxu0 0.0
    %2909 = vmatprep.subr.mxu0 0.0
    %2910 = vmatpush1.msra.mxu0 0.0
    %2911 = vmatprep.subr.mxu0 0.0
    %2912 = vmatpush1.msra.mxu0 0.0
    %2913 = vmatprep.subr.mxu0 0.0
    %2914 = vmatpush1.msra.mxu0 0.0
    %2915 = vmatprep.subr.mxu0 0.0
    %2916 = vmatpush1.msra.mxu0 0.0
    %2917 = vmatprep.subr.mxu0 0.0
    %2918 = vmatpush1.msra.mxu0 0.0
    %2919 = vmatprep.subr.mxu0 0.0
    %2920 = vmatpush1.msra.mxu0 0.0
    %2921 = vmatprep.subr.mxu0 0.0
    %2922 = vmatpush1.msra.mxu0 0.0
    %2923 = vmatprep.subr.mxu0 0.0
    %2924 = vmatpush1.msra.mxu0 0.0
    %2925 = vmatprep.subr.mxu0 0.0
    %2926 = vmatpush1.msra.mxu0 0.0
    %2927 = vmatprep.subr.mxu0 0.0
    %2928 = vmatpush1.msra.mxu0 0.0
    %2929 = vmatprep.subr.mxu0 0.0
    %2930 = vmatpush1.msra.mxu0 0.0
    %2931 = vmatprep.subr.mxu0 0.0
    %2932 = vmatpush1.msra.mxu0 0.0
    %2933 = vmatprep.mubr.f32.mxu0 0.0
    %2934 = vmatmul.mubr.f32.gmra.mrb[0].mxu0 %v2834
    %v2935 = vpop.f32.mrb[0].mxu0
    %v2936 = vadd.f32 0.0, %v2935
    %v2937 = vpop.f32.mrb[0].mxu0
    %2938 = vmatprep.mubr.f32.mxu0 0.0
    %2939 = vmatmul.mubr.f32.gmra.mrb[0].mxu0 %v2835
    %v2940 = vpop.f32.mrb[0].mxu0
    %v2941 = vadd.f32 0.0, %v2940
    %v2942 = vpop.f32.mrb[0].mxu0
    %2943 = vdwg.mxu0
    %2944 = vmatprep.subr.mxu0 0.0
    %2945 = vmatpush1.msra.mxu0 %v2836
    %2946 = vmatprep.subr.mxu0 0.0
    %2947 = vmatpush1.msra.mxu0 %v2837
    %2948 = vmatprep.subr.mxu0 0.0
    %2949 = vmatpush1.msra.mxu0 %v2838
    %2950 = vmatprep.subr.mxu0 0.0
    %2951 = vmatpush1.msra.mxu0 %v2839
    %2952 = vmatprep.subr.mxu0 0.0
    %2953 = vmatpush1.msra.mxu0 %v2840
    %2954 = vmatprep.subr.mxu0 0.0
    %2955 = vmatpush1.msra.mxu0 %v2841
    %2956 = vmatprep.subr.mxu0 0.0
    %2957 = vmatpush1.msra.mxu0 %v2842
    %2958 = vmatprep.subr.mxu0 0.0
    %2959 = vmatpush1.msra.mxu0 %v2843
    %2960 = vmatprep.subr.mxu0 0.0
    %2961 = vmatpush1.msra.mxu0 %v2844
    %2962 = vmatprep.subr.mxu0 0.0
    %2963 = vmatpush1.msra.mxu0 %v2845
    %2964 = vmatprep.subr.mxu0 0.0
    %2965 = vmatpush1.msra.mxu0 %v2846
    %2966 = vmatprep.subr.mxu0 0.0
    %2967 = vmatpush1.msra.mxu0 %v2847
    %2968 = vmatprep.subr.mxu0 0.0
    %2969 = vmatpush1.msra.mxu0 %v2848
    %2970 = vmatprep.subr.mxu0 0.0
    %2971 = vmatpush1.msra.mxu0 %v2849
    %2972 = vmatprep.subr.mxu0 0.0
    %2973 = vmatpush1.msra.mxu0 %v2850
    %2974 = vmatprep.subr.mxu0 0.0
    %2975 = vmatpush1.msra.mxu0 %v2851
    %2976 = vmatprep.subr.mxu0 0.0
    %2977 = vmatpush1.msra.mxu0 0.0
    %2978 = vmatprep.subr.mxu0 0.0
    %2979 = vmatpush1.msra.mxu0 0.0
    %2980 = vmatprep.subr.mxu0 0.0
    %2981 = vmatpush1.msra.mxu0 0.0
    %2982 = vmatprep.subr.mxu0 0.0
    %2983 = vmatpush1.msra.mxu0 0.0
    %2984 = vmatprep.subr.mxu0 0.0
    %2985 = vmatpush1.msra.mxu0 0.0
    %2986 = vmatprep.subr.mxu0 0.0
    %2987 = vmatpush1.msra.mxu0 0.0
    %2988 = vmatprep.subr.mxu0 0.0
    %2989 = vmatpush1.msra.mxu0 0.0
    %2990 = vmatprep.subr.mxu0 0.0
    %2991 = vmatpush1.msra.mxu0 0.0
    %2992 = vmatprep.subr.mxu0 0.0
    %2993 = vmatpush1.msra.mxu0 0.0
    %2994 = vmatprep.subr.mxu0 0.0
    %2995 = vmatpush1.msra.mxu0 0.0
    %2996 = vmatprep.subr.mxu0 0.0
    %2997 = vmatpush1.msra.mxu0 0.0
    %2998 = vmatprep.subr.mxu0 0.0
    %2999 = vmatpush1.msra.mxu0 0.0
    %3000 = vmatprep.subr.mxu0 0.0
    %3001 = vmatpush1.msra.mxu0 0.0
    %3002 = vmatprep.subr.mxu0 0.0
    %3003 = vmatpush1.msra.mxu0 0.0
    %3004 = vmatprep.subr.mxu0 0.0
    %3005 = vmatpush1.msra.mxu0 0.0
    %3006 = vmatprep.subr.mxu0 0.0
    %3007 = vmatpush1.msra.mxu0 0.0
    %3008 = vmatprep.mubr.f32.mxu0 0.0
    %3009 = vmatmul.mubr.f32.gmra.mrb[0].mxu0 %v2936
    %v3010 = vpop.f32.mrb[0].mxu0
    %v3011 = vadd.f32 0.0, %v3010
    %v3012 = vpop.f32.mrb[0].mxu0
    %3013 = vmatprep.mubr.f32.mxu0 0.0
    %3014 = vmatmul.mubr.f32.gmra.mrb[0].mxu0 %v2941
    %v3015 = vpop.f32.mrb[0].mxu0
    %v3016 = vadd.f32 0.0, %v3015
    %v3017 = vpop.f32.mrb[0].mxu0
    %3018 = vdwg.mxu0
    %3019 = vmatprep.subr.mxu0 0.0
    %3020 = vmatpush1.msra.mxu0 %v2853
    %3021 = vmatprep.subr.mxu0 0.0
    %3022 = vmatpush1.msra.mxu0 %v2854
    %3023 = vmatprep.subr.mxu0 0.0
    %3024 = vmatpush1.msra.mxu0 %v2855
    %3025 = vmatprep.subr.mxu0 0.0
    %3026 = vmatpush1.msra.mxu0 %v2856
    %3027 = vmatprep.subr.mxu0 0.0
    %3028 = vmatpush1.msra.mxu0 %v2857
    %3029 = vmatprep.subr.mxu0 0.0
    %3030 = vmatpush1.msra.mxu0 %v2858
    %3031 = vmatprep.subr.mxu0 0.0
    %3032 = vmatpush1.msra.mxu0 %v2859
    %3033 = vmatprep.subr.mxu0 0.0
    %3034 = vmatpush1.msra.mxu0 %v2860
    %3035 = vmatprep.subr.mxu0 0.0
    %3036 = vmatpush1.msra.mxu0 %v2861
    %3037 = vmatprep.subr.mxu0 0.0
    %3038 = vmatpush1.msra.mxu0 %v2862
    %3039 = vmatprep.subr.mxu0 0.0
    %3040 = vmatpush1.msra.mxu0 %v2863
    %3041 = vmatprep.subr.mxu0 0.0
    %3042 = vmatpush1.msra.mxu0 %v2864
    %3043 = vmatprep.subr.mxu0 0.0
    %3044 = vmatpush1.msra.mxu0 %v2865
    %3045 = vmatprep.subr.mxu0 0.0
    %3046 = vmatpush1.msra.mxu0 %v2866
    %3047 = vmatprep.subr.mxu0 0.0
    %3048 = vmatpush1.msra.mxu0 %v2867
    %3049 = vmatprep.subr.mxu0 0.0
    %3050 = vmatpush1.msra.mxu0 %v2868
    %3051 = vmatprep.subr.mxu0 0.0
    %3052 = vmatpush1.msra.mxu0 0.0
    %3053 = vmatprep.subr.mxu0 0.0
    %3054 = vmatpush1.msra.mxu0 0.0
    %3055 = vmatprep.subr.mxu0 0.0
    %3056 = vmatpush1.msra.mxu0 0.0
    %3057 = vmatprep.subr.mxu0 0.0
    %3058 = vmatpush1.msra.mxu0 0.0
    %3059 = vmatprep.subr.mxu0 0.0
    %3060 = vmatpush1.msra.mxu0 0.0
    %3061 = vmatprep.subr.mxu0 0.0
    %3062 = vmatpush1.msra.mxu0 0.0
    %3063 = vmatprep.subr.mxu0 0.0
    %3064 = vmatpush1.msra.mxu0 0.0
    %3065 = vmatprep.subr.mxu0 0.0
    %3066 = vmatpush1.msra.mxu0 0.0
    %3067 = vmatprep.subr.mxu0 0.0
    %3068 = vmatpush1.msra.mxu0 0.0
    %3069 = vmatprep.subr.mxu0 0.0
    %3070 = vmatpush1.msra.mxu0 0.0
    %3071 = vmatprep.subr.mxu0 0.0
    %3072 = vmatpush1.msra.mxu0 0.0
    %3073 = vmatprep.subr.mxu0 0.0
    %3074 = vmatpush1.msra.mxu0 0.0
    %3075 = vmatprep.subr.mxu0 0.0
    %3076 = vmatpush1.msra.mxu0 0.0
    %3077 = vmatprep.subr.mxu0 0.0
    %3078 = vmatpush1.msra.mxu0 0.0
    %3079 = vmatprep.subr.mxu0 0.0
    %3080 = vmatpush1.msra.mxu0 0.0
    %3081 = vmatprep.subr.mxu0 0.0
    %3082 = vmatpush1.msra.mxu0 0.0
    %3083 = vmatprep.mubr.f32.mxu0 0.0
    %3084 = vmatmul.mubr.f32.gmra.mrb[0].mxu0 %v2834
    %v3085 = vpop.f32.mrb[0].mxu0
    %v3086 = vadd.f32 0.0, %v3085
    %v3087 = vpop.f32.mrb[0].mxu0
    %3088 = vmatprep.mubr.f32.mxu0 0.0
    %3089 = vmatmul.mubr.f32.gmra.mrb[0].mxu0 %v2835
    %v3090 = vpop.f32.mrb[0].mxu0
    %v3091 = vadd.f32 0.0, %v3090
    %v3092 = vpop.f32.mrb[0].mxu0
    %3093 = vdwg.mxu0
    %3094 = vmatprep.subr.mxu0 0.0
    %3095 = vmatpush1.msra.mxu0 %v2853
    %3096 = vmatprep.subr.mxu0 0.0
    %3097 = vmatpush1.msra.mxu0 %v2854
    %3098 = vmatprep.subr.mxu0 0.0
    %3099 = vmatpush1.msra.mxu0 %v2855
    %3100 = vmatprep.subr.mxu0 0.0
    %3101 = vmatpush1.msra.mxu0 %v2856
    %3102 = vmatprep.subr.mxu0 0.0
    %3103 = vmatpush1.msra.mxu0 %v2857
    %3104 = vmatprep.subr.mxu0 0.0
    %3105 = vmatpush1.msra.mxu0 %v2858
    %3106 = vmatprep.subr.mxu0 0.0
    %3107 = vmatpush1.msra.mxu0 %v2859
    %3108 = vmatprep.subr.mxu0 0.0
    %3109 = vmatpush1.msra.mxu0 %v2860
    %3110 = vmatprep.subr.mxu0 0.0
    %3111 = vmatpush1.msra.mxu0 %v2861
    %3112 = vmatprep.subr.mxu0 0.0
    %3113 = vmatpush1.msra.mxu0 %v2862
    %3114 = vmatprep.subr.mxu0 0.0
    %3115 = vmatpush1.msra.mxu0 %v2863
    %3116 = vmatprep.subr.mxu0 0.0
    %3117 = vmatpush1.msra.mxu0 %v2864
    %3118 = vmatprep.subr.mxu0 0.0
    %3119 = vmatpush1.msra.mxu0 %v2865
    %3120 = vmatprep.subr.mxu0 0.0
    %3121 = vmatpush1.msra.mxu0 %v2866
    %3122 = vmatprep.subr.mxu0 0.0
    %3123 = vmatpush1.msra.mxu0 %v2867
    %3124 = vmatprep.subr.mxu0 0.0
    %3125 = vmatpush1.msra.mxu0 %v2868
    %3126 = vmatprep.subr.mxu0 0.0
    %3127 = vmatpush1.msra.mxu0 0.0
    %3128 = vmatprep.subr.mxu0 0.0
    %3129 = vmatpush1.msra.mxu0 0.0
    %3130 = vmatprep.subr.mxu0 0.0
    %3131 = vmatpush1.msra.mxu0 0.0
    %3132 = vmatprep.subr.mxu0 0.0
    %3133 = vmatpush1.msra.mxu0 0.0
    %3134 = vmatprep.subr.mxu0 0.0
    %3135 = vmatpush1.msra.mxu0 0.0
    %3136 = vmatprep.subr.mxu0 0.0
    %3137 = vmatpush1.msra.mxu0 0.0
    %3138 = vmatprep.subr.mxu0 0.0
    %3139 = vmatpush1.msra.mxu0 0.0
    %3140 = vmatprep.subr.mxu0 0.0
    %3141 = vmatpush1.msra.mxu0 0.0
    %3142 = vmatprep.subr.mxu0 0.0
    %3143 = vmatpush1.msra.mxu0 0.0
    %3144 = vmatprep.subr.mxu0 0.0
    %3145 = vmatpush1.msra.mxu0 0.0
    %3146 = vmatprep.subr.mxu0 0.0
    %3147 = vmatpush1.msra.mxu0 0.0
    %3148 = vmatprep.subr.mxu0 0.0
    %3149 = vmatpush1.msra.mxu0 0.0
    %3150 = vmatprep.subr.mxu0 0.0
    %3151 = vmatpush1.msra.mxu0 0.0
    %3152 = vmatprep.subr.mxu0 0.0
    %3153 = vmatpush1.msra.mxu0 0.0
    %3154 = vmatprep.subr.mxu0 0.0
    %3155 = vmatpush1.msra.mxu0 0.0
    %3156 = vmatprep.subr.mxu0 0.0
    %3157 = vmatpush1.msra.mxu0 0.0
    %3158 = vmatprep.mubr.f32.mxu0 0.0
    %3159 = vmatmul.mubr.f32.gmra.mrb[0].mxu0 %v3086
    %v3160 = vpop.f32.mrb[0].mxu0
    %v3161 = vadd.f32 0.0, %v3160
    %v3162 = vpop.f32.mrb[0].mxu0
    %3163 = vmatprep.mubr.f32.mxu0 0.0
    %3164 = vmatmul.mubr.f32.gmra.mrb[0].mxu0 %v3091
    %v3165 = vpop.f32.mrb[0].mxu0
    %v3166 = vadd.f32 0.0, %v3165
    %v3167 = vpop.f32.mrb[0].mxu0
    %3168 = vdwg.mxu0
    %s3169 = sld [smem:[#allocation2 + $0x2]]
    %v3170 = vstv %s3169
    %v3171 = vadd.f32 %v3170, 0.0
    %3172 = vset.pattern.permute.xlu0 9
    %3173 = vperm.xlu0 %3172, %v36
    %v3174 = vpop.permute.xlu0 %3173
    %3176 = vset.pattern.permute.xlu0 9
    %3177 = vperm.xlu0 %3176, %v37
    %v3178 = vpop.permute.xlu0 %3177
    %v3180 = vmul.f32 %v3174, %v2834
    %v3181 = vmul.f32 %v3178, %v2835
    %v3182 = vadd.f32 %v3180, %v3181
    %v3183 = vrot.slane %v3182, 4
    %v3184 = vadd.f32 %v3182, %v3183
    %v3185 = vrot.slane %v3184, 2
    %v3186 = vadd.f32 %v3184, %v3185
    %v3187 = vrot.slane %v3186, 1
    %v3188 = vadd.f32 %v3186, %v3187
    %v3189 = vadd.f32 %v3171, %v3188
    %3190 = vset.pattern.permute.xlu0 10
    %3191 = vperm.xlu0 %3190, %v36
    %v3192 = vpop.permute.xlu0 %3191
    %3194 = vset.pattern.permute.xlu0 10
    %3195 = vperm.xlu0 %3194, %v37
    %v3196 = vpop.permute.xlu0 %3195
    %v3198 = vmul.f32 %v3192, %v2936
    %v3199 = vmul.f32 %v3196, %v2941
    %v3200 = vadd.f32 %v3198, %v3199
    %v3201 = vrot.slane %v3200, 4
    %v3202 = vadd.f32 %v3200, %v3201
    %v3203 = vrot.slane %v3202, 2
    %v3204 = vadd.f32 %v3202, %v3203
    %v3205 = vrot.slane %v3204, 1
    %v3206 = vadd.f32 %v3204, %v3205
    %v3207 = vadd.f32 %v3189, %v3206
    %3208 = vset.pattern.permute.xlu0 11
    %3209 = vperm.xlu0 %3208, %v36
    %v3210 = vpop.permute.xlu0 %3209
    %3212 = vset.pattern.permute.xlu0 11
    %3213 = vperm.xlu0 %3212, %v37
    %v3214 = vpop.permute.xlu0 %3213
    %v3216 = vmul.f32 %v3210, %v3011
    %v3217 = vmul.f32 %v3214, %v3016
    %v3218 = vadd.f32 %v3216, %v3217
    %v3219 = vrot.slane %v3218, 4
    %v3220 = vadd.f32 %v3218, %v3219
    %v3221 = vrot.slane %v3220, 2
    %v3222 = vadd.f32 %v3220, %v3221
    %v3223 = vrot.slane %v3222, 1
    %v3224 = vadd.f32 %v3222, %v3223
    %v3225 = vadd.f32 %v3207, %v3224
    %3226 = vset.pattern.permute.xlu0 12
    %3227 = vperm.xlu0 %3226, %v36
    %v3228 = vpop.permute.xlu0 %3227
    %3230 = vset.pattern.permute.xlu0 12
    %3231 = vperm.xlu0 %3230, %v37
    %v3232 = vpop.permute.xlu0 %3231
    %v3234 = vmul.f32 %v3228, %v3086
    %v3235 = vmul.f32 %v3232, %v3091
    %v3236 = vadd.f32 %v3234, %v3235
    %v3237 = vrot.slane %v3236, 4
    %v3238 = vadd.f32 %v3236, %v3237
    %v3239 = vrot.slane %v3238, 2
    %v3240 = vadd.f32 %v3238, %v3239
    %v3241 = vrot.slane %v3240, 1
    %v3242 = vadd.f32 %v3240, %v3241
    %v3243 = vadd.f32 %v3225, %v3242
    %3244 = vset.pattern.permute.xlu0 13
    %3245 = vperm.xlu0 %3244, %v36
    %v3246 = vpop.permute.xlu0 %3245
    %3248 = vset.pattern.permute.xlu0 13
    %3249 = vperm.xlu0 %3248, %v37
    %v3250 = vpop.permute.xlu0 %3249
    %v3252 = vmul.f32 %v3246, %v3161
    %v3253 = vmul.f32 %v3250, %v3166
    %v3254 = vadd.f32 %v3252, %v3253
    %v3255 = vrot.slane %v3254, 4
    %v3256 = vadd.f32 %v3254, %v3255
    %v3257 = vrot.slane %v3256, 2
    %v3258 = vadd.f32 %v3256, %v3257
    %v3259 = vrot.slane %v3258, 1
    %v3260 = vadd.f32 %v3258, %v3259
    %v3261 = vadd.f32 %v3243, %v3260
    %v3262 = vmax.f32 %v3261, 0.0
    %s3263 = sld [smem:[#allocation2 + $0x3]]
    %v3264 = vstv %s3263
    %v3265 = vmul.f32 %v3264, %v2648
    %s3266 = sld [smem:[#allocation2 + $0x4]]
    %v3267 = vstv %s3266
    %v3268 = vmul.f32 %v3267, %v3262
    %v3269 = vadd.f32 %v3265, %v3268
    %s3270 = sld [smem:[#allocation2 + $0x5]]
    %v3271 = vstv %s3270
    %v3272 = vmul.f32 %v3271, %v2833
    %v3273 = vadd.f32 %v3269, %v3272
    %s3274 = sld [smem:[#allocation2 + $0x6]]
    %v3275 = vstv %s3274
    %v3276 = vadd.f32 %v3273, %v3275
    %v3277 = vmax.f32 %v3276, 0.0
    %3278 = vst [vmem:[%s6] sm:$0xff] %v3277
    // Predicated region
    $region30: #{hgst_pallas.1} parent=1 // pred_check
      _
    $region31: #{hgst_pallas.1} parent=1 // pred_check_branch
      %3280 = sbr.rel (0) target = $region33
    $region32: #{hgst_pallas.1} parent=1 // pred_region
      _
    $region33: #{hgst_pallas.1} parent=1 // pred_fallthru
      _
    // Predicated region
    $region34: #{hgst_pallas.1} parent=1 // pred_check
      _
    $region35: #{hgst_pallas.1} parent=1 // pred_check_branch
      %3282 = sbr.rel (0) target = $region37
    $region36: #{hgst_pallas.1} parent=1 // pred_region
      _
    $region37: #{hgst_pallas.1} parent=1 // pred_fallthru
      _
    %3283 = vsyncpa [#allocation3], 1

</llo_original>
